<compile_context>
chip_gen: v7x
topology: tpu7x:2x2x1
jax: 0.10.0
libtpu: 0.0.40
codegen_flags: <defaults>
</compile_context>

<pallas_src>
import functools

import jax
import jax.numpy as jnp
from jax.experimental import pallas as pl
from jax.experimental.pallas import tpu as pltpu

KH = KW = 3  # kernel_size=3


def _conv3x3_relu_kernel(x_ref, w_ref, b_ref, m_ref, o_ref, *,
                         wdt, cin, cout, s, bsz, use_mxu):
    """One block of `bsz` images per grid step.

    x_ref: (bsz, cin, (H+2)*W + 2)  flattened H-padded images, +1 guard elem each end
    w_ref: (cout, KH*KW*cin)        column j = (kh*KW + kw)*cin + ci
    b_ref: (cout, 1)
    m_ref: (2, H*W)                 row 0: mask for kw=0 taps, row 1: for kw=2 taps
    o_ref: (bsz, cout, H*W)         lane-dense output (lane axis = flattened spatial)
    """
    mask_l = m_ref[0:1, :]                          # (1, S)
    mask_r = m_ref[1:2, :]                          # (1, S)
    bias = b_ref[...]                               # (Cout, 1)

    for b in range(bsz):  # unrolled: amortizes per-grid-step overhead over bsz images
        if use_mxu:
            # MXU path (v6e/v7x): 9 small (Cout,Cin)x(Cin,S) GEMMs; channel
            # contraction runs on the MXU, VPU only does the 6 mask multiplies.
            # Independent per-kh accumulators let the GEMMs pipeline.
            accs = [jnp.zeros((cout, s), dtype=jnp.float32) for _ in range(KH)]
            for kh in range(KH):
                for kw in range(KW):
                    off = kh * wdt + kw                     # static lane offset
                    v = x_ref[b, :, off:off + s]            # (Cin, S) shifted tap
                    if kw == 0:                             # kill wrapped left edge
                        v = v * mask_l
                    elif kw == 2:                           # kill wrapped right edge
                        v = v * mask_r
                    t = kh * KW + kw
                    w_tap = w_ref[:, t * cin:(t + 1) * cin]  # (Cout, Cin)
                    accs[kh] = accs[kh] + jnp.dot(
                        w_tap, v,
                        preferred_element_type=jnp.float32,
                        precision=jax.lax.Precision.HIGHEST)
            acc = (accs[0] + accs[1]) + accs[2]
        else:
            # Pure-VPU path (v5e): broadcast-FMA with one independent accumulator
            # per input channel -> 4 parallel chains instead of 1 serial chain.
            accs = [jnp.zeros((cout, s), dtype=jnp.float32) for _ in range(cin)]
            for kh in range(KH):
                for kw in range(KW):
                    off = kh * wdt + kw
                    v = x_ref[b, :, off:off + s]            # (Cin, S) shifted tap
                    if kw == 0:
                        v = v * mask_l
                    elif kw == 2:
                        v = v * mask_r
                    for ci in range(cin):
                        j = (kh * KW + kw) * cin + ci
                        wcol = w_ref[:, j:j + 1]            # (Cout, 1)
                        accs[ci] = accs[ci] + wcol * v[ci:ci + 1, :]
            while len(accs) > 1:                            # tree reduce
                accs = [accs[i] + accs[i + 1] if i + 1 < len(accs) else accs[i]
                        for i in range(0, len(accs), 2)]
            acc = accs[0]

        o_ref[b] = jnp.maximum(acc + bias, 0.0).astype(o_ref.dtype)


def conv2d_re(x_nchw, weight, bias, *, use_mxu=True):
    """Conv2d(3x3, stride=1, padding=1, groups=1, bias=True) + ReLU. NCHW in/out.

    use_mxu=True  -> channel contraction on the MXU (recommended on v6e / v7x)
    use_mxu=False -> pure-VPU broadcast-FMA path (recommended on v5e)
    """
    n, cin, h, w = x_nchw.shape
    cout = weight.shape[0]
    s = h * w
    sp2 = (h + 2) * w + 2   # flattened length after H-padding + 1 guard element per end

    # Pad Cin up to a full sublane tile for aligned MXU operands (zero channels
    # with zero weight columns contribute nothing).
    cin_k = 8 if (use_mxu and cin < 8) else cin

    # Single cheap pad pass; flatten/reshapes are free (row-major contiguous).
    # Padding (w+1, w+1) on the flat axis == one zero row above/below + 1 guard elem.
    x_flat = x_nchw.reshape(n, cin, s)
    x_pad = jnp.pad(x_flat, ((0, 0), (0, cin_k - cin), (w + 1, w + 1)))  # (n, cin_k, sp2)

    # Batching: min(n, 2) "parallel" grid steps, bsz images per step (unroll capped
    # so trace/compile time stays bounded for large N).
    n_steps = 2 if n >= 2 else 1
    bsz = min(-(-n // n_steps), 16)
    n_steps = -(-n // bsz)
    n_pad = n_steps * bsz
    if n_pad != n:
        x_pad = jnp.pad(x_pad, ((0, n_pad - n), (0, 0), (0, 0)))

    # weight (Cout, Cin, KH, KW) -> (Cout, KH*KW*Cin_k), column = (kh*KW + kw)*cin_k + ci
    w_r = jnp.transpose(weight, (0, 2, 3, 1))               # (cout, KH, KW, cin)
    if cin_k != cin:
        w_r = jnp.pad(w_r, ((0, 0), (0, 0), (0, 0), (0, cin_k - cin)))
    w_gemm = w_r.reshape(cout, KH * KW * cin_k)
    b_col = bias.reshape(cout, 1)

    # Lane masks for the left/right column taps (kill wrapped neighbours at W edges).
    col = jnp.arange(s, dtype=jnp.int32) % w
    masks = jnp.stack([(col != 0), (col != w - 1)]).astype(x_nchw.dtype)  # (2, s)

    kernel = functools.partial(_conv3x3_relu_kernel, wdt=w, cin=cin_k, cout=cout,
                               s=s, bsz=bsz, use_mxu=use_mxu)

    itemsize = x_nchw.dtype.itemsize
    flops = 2 * n_pad * s * cout * cin_k * KH * KW
    bytes_accessed = (n_pad * cin_k * sp2 + cout * KH * KW * cin_k + cout
                      + 2 * s + n_pad * cout * s) * itemsize

    # Per-step VMEM: bsz*(cin_k*sp2 + cout*s)*4B double-buffered -> ~tens of KiB here;
    # re-derive against v7x's 32 MiB scoped default before growing bsz or H*W.
    out = pl.pallas_call(
        kernel,
        out_shape=jax.ShapeDtypeStruct((n_pad, cout, s), x_nchw.dtype),
        grid_spec=pltpu.PrefetchScalarGridSpec(
            num_scalar_prefetch=0,
            grid=(n_steps,),
            in_specs=[
                pl.BlockSpec((bsz, cin_k, sp2), lambda i: (i, 0, 0)),
                pl.BlockSpec((cout, KH * KW * cin_k), lambda i: (0, 0)),
                pl.BlockSpec((cout, 1), lambda i: (0, 0)),
                pl.BlockSpec((2, s), lambda i: (0, 0)),
            ],
            out_specs=pl.BlockSpec((bsz, cout, s), lambda i: (i, 0, 0)),
        ),
        compiler_params=pltpu.CompilerParams(
            dimension_semantics=("parallel",)),
        cost_estimate=pl.CostEstimate(
            flops=flops, transcendentals=0, bytes_accessed=bytes_accessed),
    )(x_pad, w_gemm, b_col, masks)

    if n_pad != n:
        out = out[:n]
    # (n, cout, h*w) is already NCHW element order -> pure reshape, no transpose.
    return out.reshape(n, cout, h, w)


if __name__ == "__main__":
    key = jax.random.PRNGKey(0)
    kx, kw_, kb = jax.random.split(key, 3)

    # small shapes consistent with the module: in_planes=4, out_planes=8
    N, CIN, COUT, H, W = 2, 4, 8, 16, 16
    x = jax.random.normal(kx, (N, CIN, H, W), dtype=jnp.float32)
    weight = jax.random.normal(kw_, (COUT, CIN, KH, KW), dtype=jnp.float32) * 0.1
    bias = jax.random.normal(kb, (COUT,), dtype=jnp.float32) * 0.1

    # reference: XLA conv (same semantics as torch Conv2d + ReLU), f32 precision
    ref = jax.lax.conv_general_dilated(
        x, weight, window_strides=(1, 1), padding=((1, 1), (1, 1)),
        dimension_numbers=("NCHW", "OIHW", "NCHW"),
        precision=jax.lax.Precision.HIGHEST)
    ref = jnp.maximum(ref + bias.reshape(1, COUT, 1, 1), 0.0)

    fn = jax.jit(conv2d_re, static_argnames=("use_mxu",))
    for use_mxu in (True, False):   # MXU path (v6e/v7x default) and VPU path (v5e)
        out = jax.block_until_ready(fn(x, weight, bias, use_mxu=use_mxu))
        assert out.shape == (N, COUT, H, W)
        err = float(jnp.max(jnp.abs(out - ref)))
        assert jnp.allclose(out, ref, atol=1e-4, rtol=1e-4), (use_mxu, err)

    print("KERNEL_OK")
</pallas_src>

<mosaic_0001>
module attributes {stable_mosaic.version = 11 : i64} {
  func.func @_conv3x3_relu_kernel(%arg0: i32, %arg1: memref<1x8x290xf32, #tpu.memory_space<vmem>>, %arg2: memref<8x72xf32, #tpu.memory_space<vmem>>, %arg3: memref<8x1xf32, #tpu.memory_space<vmem>>, %arg4: memref<2x256xf32, #tpu.memory_space<vmem>>, %arg5: memref<1x8x256xf32, #tpu.memory_space<vmem>>) attributes {dimension_semantics = [#tpu.dimension_semantics<parallel>], iteration_bounds = array<i64: 2>, scalar_prefetch = 0 : i64, scratch_operands = 0 : i64, tpu.core_type = #tpu.core_type<tc>, window_params = [{transform_indices = @transform_0, window_bounds = array<i64: 1, 8, 290>}, {pipeline_mode = #tpu.pipeline_mode<synchronous>, transform_indices = @transform_1, window_bounds = array<i64: 8, 72>}, {pipeline_mode = #tpu.pipeline_mode<synchronous>, transform_indices = @transform_2, window_bounds = array<i64: 8, 1>}, {pipeline_mode = #tpu.pipeline_mode<synchronous>, transform_indices = @transform_3, window_bounds = array<i64: 2, 256>}, {transform_indices = @transform_4, window_bounds = array<i64: 1, 8, 256>}]} {
    %c0 = arith.constant 0 : index
    %c0_0 = arith.constant 0 : index
    %0 = vector.load %arg4[%c0, %c0_0] : memref<2x256xf32, #tpu.memory_space<vmem>>, vector<1x256xf32>
    %c1 = arith.constant 1 : index
    %c0_1 = arith.constant 0 : index
    %1 = vector.load %arg4[%c1, %c0_1] : memref<2x256xf32, #tpu.memory_space<vmem>>, vector<1x256xf32>
    %c0_2 = arith.constant 0 : index
    %c0_3 = arith.constant 0 : index
    %2 = vector.load %arg3[%c0_2, %c0_3] : memref<8x1xf32, #tpu.memory_space<vmem>>, vector<8x1xf32>
    %cst = arith.constant 0.000000e+00 : f32
    %3 = vector.broadcast %cst : f32 to vector<8x256xf32>
    %cst_4 = arith.constant 0.000000e+00 : f32
    %4 = vector.broadcast %cst_4 : f32 to vector<8x256xf32>
    %cst_5 = arith.constant 0.000000e+00 : f32
    %5 = vector.broadcast %cst_5 : f32 to vector<8x256xf32>
    %c0_6 = arith.constant 0 : index
    %c0_7 = arith.constant 0 : index
    %c0_8 = arith.constant 0 : index
    %6 = vector.load %arg1[%c0_6, %c0_7, %c0_8] : memref<1x8x290xf32, #tpu.memory_space<vmem>>, vector<1x8x256xf32>
    %7 = vector.shape_cast %6 : vector<1x8x256xf32> to vector<8x256xf32>
    %8 = vector.broadcast %0 : vector<1x256xf32> to vector<8x256xf32>
    %9 = arith.mulf %7, %8 : vector<8x256xf32>
    %c0_9 = arith.constant 0 : index
    %c0_10 = arith.constant 0 : index
    %10 = vector.load %arg2[%c0_9, %c0_10] : memref<8x72xf32, #tpu.memory_space<vmem>>, vector<8x8xf32>
    %cst_11 = arith.constant dense<0.000000e+00> : vector<8x256xf32>
    %11 = tpu.matmul %10, %9, %cst_11 {dimension_numbers = #tpu.dot_dimension_numbers<[1], [0], [0], [1], [0, 0, 1, 1], [], []>, precision = #tpu.contract_precision<fp32>} : vector<8x8xf32>, vector<8x256xf32>, vector<8x256xf32> -> vector<8x256xf32>
    %12 = arith.addf %3, %11 : vector<8x256xf32>
    %c0_12 = arith.constant 0 : index
    %c0_13 = arith.constant 0 : index
    %c1_14 = arith.constant 1 : index
    %13 = vector.load %arg1[%c0_12, %c0_13, %c1_14] : memref<1x8x290xf32, #tpu.memory_space<vmem>>, vector<1x8x256xf32>
    %14 = vector.shape_cast %13 : vector<1x8x256xf32> to vector<8x256xf32>
    %c0_15 = arith.constant 0 : index
    %c8 = arith.constant 8 : index
    %15 = vector.load %arg2[%c0_15, %c8] : memref<8x72xf32, #tpu.memory_space<vmem>>, vector<8x8xf32>
    %cst_16 = arith.constant dense<0.000000e+00> : vector<8x256xf32>
    %16 = tpu.matmul %15, %14, %cst_16 {dimension_numbers = #tpu.dot_dimension_numbers<[1], [0], [0], [1], [0, 0, 1, 1], [], []>, precision = #tpu.contract_precision<fp32>} : vector<8x8xf32>, vector<8x256xf32>, vector<8x256xf32> -> vector<8x256xf32>
    %17 = arith.addf %12, %16 : vector<8x256xf32>
    %c0_17 = arith.constant 0 : index
    %c0_18 = arith.constant 0 : index
    %c2 = arith.constant 2 : index
    %18 = vector.load %arg1[%c0_17, %c0_18, %c2] : memref<1x8x290xf32, #tpu.memory_space<vmem>>, vector<1x8x256xf32>
    %19 = vector.shape_cast %18 : vector<1x8x256xf32> to vector<8x256xf32>
    %20 = vector.broadcast %1 : vector<1x256xf32> to vector<8x256xf32>
    %21 = arith.mulf %19, %20 : vector<8x256xf32>
    %c0_19 = arith.constant 0 : index
    %c16 = arith.constant 16 : index
    %22 = vector.load %arg2[%c0_19, %c16] : memref<8x72xf32, #tpu.memory_space<vmem>>, vector<8x8xf32>
    %cst_20 = arith.constant dense<0.000000e+00> : vector<8x256xf32>
    %23 = tpu.matmul %22, %21, %cst_20 {dimension_numbers = #tpu.dot_dimension_numbers<[1], [0], [0], [1], [0, 0, 1, 1], [], []>, precision = #tpu.contract_precision<fp32>} : vector<8x8xf32>, vector<8x256xf32>, vector<8x256xf32> -> vector<8x256xf32>
    %24 = arith.addf %17, %23 : vector<8x256xf32>
    %c0_21 = arith.constant 0 : index
    %c0_22 = arith.constant 0 : index
    %c16_23 = arith.constant 16 : index
    %25 = vector.load %arg1[%c0_21, %c0_22, %c16_23] : memref<1x8x290xf32, #tpu.memory_space<vmem>>, vector<1x8x256xf32>
    %26 = vector.shape_cast %25 : vector<1x8x256xf32> to vector<8x256xf32>
    %27 = vector.broadcast %0 : vector<1x256xf32> to vector<8x256xf32>
    %28 = arith.mulf %26, %27 : vector<8x256xf32>
    %c0_24 = arith.constant 0 : index
    %c24 = arith.constant 24 : index
    %29 = vector.load %arg2[%c0_24, %c24] : memref<8x72xf32, #tpu.memory_space<vmem>>, vector<8x8xf32>
    %cst_25 = arith.constant dense<0.000000e+00> : vector<8x256xf32>
    %30 = tpu.matmul %29, %28, %cst_25 {dimension_numbers = #tpu.dot_dimension_numbers<[1], [0], [0], [1], [0, 0, 1, 1], [], []>, precision = #tpu.contract_precision<fp32>} : vector<8x8xf32>, vector<8x256xf32>, vector<8x256xf32> -> vector<8x256xf32>
    %31 = arith.addf %4, %30 : vector<8x256xf32>
    %c0_26 = arith.constant 0 : index
    %c0_27 = arith.constant 0 : index
    %c17 = arith.constant 17 : index
    %32 = vector.load %arg1[%c0_26, %c0_27, %c17] : memref<1x8x290xf32, #tpu.memory_space<vmem>>, vector<1x8x256xf32>
    %33 = vector.shape_cast %32 : vector<1x8x256xf32> to vector<8x256xf32>
    %c0_28 = arith.constant 0 : index
    %c32 = arith.constant 32 : index
    %34 = vector.load %arg2[%c0_28, %c32] : memref<8x72xf32, #tpu.memory_space<vmem>>, vector<8x8xf32>
    %cst_29 = arith.constant dense<0.000000e+00> : vector<8x256xf32>
    %35 = tpu.matmul %34, %33, %cst_29 {dimension_numbers = #tpu.dot_dimension_numbers<[1], [0], [0], [1], [0, 0, 1, 1], [], []>, precision = #tpu.contract_precision<fp32>} : vector<8x8xf32>, vector<8x256xf32>, vector<8x256xf32> -> vector<8x256xf32>
    %36 = arith.addf %31, %35 : vector<8x256xf32>
    %c0_30 = arith.constant 0 : index
    %c0_31 = arith.constant 0 : index
    %c18 = arith.constant 18 : index
    %37 = vector.load %arg1[%c0_30, %c0_31, %c18] : memref<1x8x290xf32, #tpu.memory_space<vmem>>, vector<1x8x256xf32>
    %38 = vector.shape_cast %37 : vector<1x8x256xf32> to vector<8x256xf32>
    %39 = vector.broadcast %1 : vector<1x256xf32> to vector<8x256xf32>
    %40 = arith.mulf %38, %39 : vector<8x256xf32>
    %c0_32 = arith.constant 0 : index
    %c40 = arith.constant 40 : index
    %41 = vector.load %arg2[%c0_32, %c40] : memref<8x72xf32, #tpu.memory_space<vmem>>, vector<8x8xf32>
    %cst_33 = arith.constant dense<0.000000e+00> : vector<8x256xf32>
    %42 = tpu.matmul %41, %40, %cst_33 {dimension_numbers = #tpu.dot_dimension_numbers<[1], [0], [0], [1], [0, 0, 1, 1], [], []>, precision = #tpu.contract_precision<fp32>} : vector<8x8xf32>, vector<8x256xf32>, vector<8x256xf32> -> vector<8x256xf32>
    %43 = arith.addf %36, %42 : vector<8x256xf32>
    %c0_34 = arith.constant 0 : index
    %c0_35 = arith.constant 0 : index
    %c32_36 = arith.constant 32 : index
    %44 = vector.load %arg1[%c0_34, %c0_35, %c32_36] : memref<1x8x290xf32, #tpu.memory_space<vmem>>, vector<1x8x256xf32>
    %45 = vector.shape_cast %44 : vector<1x8x256xf32> to vector<8x256xf32>
    %46 = vector.broadcast %0 : vector<1x256xf32> to vector<8x256xf32>
    %47 = arith.mulf %45, %46 : vector<8x256xf32>
    %c0_37 = arith.constant 0 : index
    %c48 = arith.constant 48 : index
    %48 = vector.load %arg2[%c0_37, %c48] : memref<8x72xf32, #tpu.memory_space<vmem>>, vector<8x8xf32>
    %cst_38 = arith.constant dense<0.000000e+00> : vector<8x256xf32>
    %49 = tpu.matmul %48, %47, %cst_38 {dimension_numbers = #tpu.dot_dimension_numbers<[1], [0], [0], [1], [0, 0, 1, 1], [], []>, precision = #tpu.contract_precision<fp32>} : vector<8x8xf32>, vector<8x256xf32>, vector<8x256xf32> -> vector<8x256xf32>
    %50 = arith.addf %5, %49 : vector<8x256xf32>
    %c0_39 = arith.constant 0 : index
    %c0_40 = arith.constant 0 : index
    %c33 = arith.constant 33 : index
    %51 = vector.load %arg1[%c0_39, %c0_40, %c33] : memref<1x8x290xf32, #tpu.memory_space<vmem>>, vector<1x8x256xf32>
    %52 = vector.shape_cast %51 : vector<1x8x256xf32> to vector<8x256xf32>
    %c0_41 = arith.constant 0 : index
    %c56 = arith.constant 56 : index
    %53 = vector.load %arg2[%c0_41, %c56] : memref<8x72xf32, #tpu.memory_space<vmem>>, vector<8x8xf32>
    %cst_42 = arith.constant dense<0.000000e+00> : vector<8x256xf32>
    %54 = tpu.matmul %53, %52, %cst_42 {dimension_numbers = #tpu.dot_dimension_numbers<[1], [0], [0], [1], [0, 0, 1, 1], [], []>, precision = #tpu.contract_precision<fp32>} : vector<8x8xf32>, vector<8x256xf32>, vector<8x256xf32> -> vector<8x256xf32>
    %55 = arith.addf %50, %54 : vector<8x256xf32>
    %c0_43 = arith.constant 0 : index
    %c0_44 = arith.constant 0 : index
    %c34 = arith.constant 34 : index
    %56 = vector.load %arg1[%c0_43, %c0_44, %c34] : memref<1x8x290xf32, #tpu.memory_space<vmem>>, vector<1x8x256xf32>
    %57 = vector.shape_cast %56 : vector<1x8x256xf32> to vector<8x256xf32>
    %58 = vector.broadcast %1 : vector<1x256xf32> to vector<8x256xf32>
    %59 = arith.mulf %57, %58 : vector<8x256xf32>
    %c0_45 = arith.constant 0 : index
    %c64 = arith.constant 64 : index
    %60 = vector.load %arg2[%c0_45, %c64] : memref<8x72xf32, #tpu.memory_space<vmem>>, vector<8x8xf32>
    %cst_46 = arith.constant dense<0.000000e+00> : vector<8x256xf32>
    %61 = tpu.matmul %60, %59, %cst_46 {dimension_numbers = #tpu.dot_dimension_numbers<[1], [0], [0], [1], [0, 0, 1, 1], [], []>, precision = #tpu.contract_precision<fp32>} : vector<8x8xf32>, vector<8x256xf32>, vector<8x256xf32> -> vector<8x256xf32>
    %62 = arith.addf %55, %61 : vector<8x256xf32>
    %63 = arith.addf %24, %43 : vector<8x256xf32>
    %64 = arith.addf %63, %62 : vector<8x256xf32>
    %65 = vector.broadcast %2 : vector<8x1xf32> to vector<8x256xf32>
    %66 = arith.addf %64, %65 : vector<8x256xf32>
    %cst_47 = arith.constant 0.000000e+00 : f32
    %67 = vector.broadcast %cst_47 : f32 to vector<8x256xf32>
    %68 = arith.maximumf %66, %67 : vector<8x256xf32>
    %c0_48 = arith.constant 0 : index
    %c0_49 = arith.constant 0 : index
    %c0_50 = arith.constant 0 : index
    %69 = vector.load %arg5[%c0_48, %c0_49, %c0_50] : memref<1x8x256xf32, #tpu.memory_space<vmem>>, vector<1x8x256xf32>
    %70 = vector.shape_cast %69 : vector<1x8x256xf32> to vector<8x256xf32>
    %71 = vector.shape_cast %68 : vector<8x256xf32> to vector<1x8x256xf32>
    tpu.vector_store %arg5[%c0_48, %c0_49, %c0_50], %71 {strides = array<i32>} : memref<1x8x256xf32, #tpu.memory_space<vmem>>, vector<1x8x256xf32>,
    return
  }
  func.func @transform_0(%arg0: i32) -> (i32, i32, i32) {
    %c0_i32 = arith.constant 0 : i32
    %c0_i32_0 = arith.constant 0 : i32
    %c0_i32_1 = arith.constant 0 : i32
    return %arg0, %c0_i32, %c0_i32_0 : i32, i32, i32
  }
  func.func @transform_1(%arg0: i32) -> (i32, i32) {
    %c0_i32 = arith.constant 0 : i32
    %c0_i32_0 = arith.constant 0 : i32
    %c0_i32_1 = arith.constant 0 : i32
    return %c0_i32, %c0_i32_0 : i32, i32
  }
  func.func @transform_2(%arg0: i32) -> (i32, i32) {
    %c0_i32 = arith.constant 0 : i32
    %c0_i32_0 = arith.constant 0 : i32
    %c0_i32_1 = arith.constant 0 : i32
    return %c0_i32, %c0_i32_0 : i32, i32
  }
  func.func @transform_3(%arg0: i32) -> (i32, i32) {
    %c0_i32 = arith.constant 0 : i32
    %c0_i32_0 = arith.constant 0 : i32
    %c0_i32_1 = arith.constant 0 : i32
    return %c0_i32, %c0_i32_0 : i32, i32
  }
  func.func @transform_4(%arg0: i32) -> (i32, i32, i32) {
    %c0_i32 = arith.constant 0 : i32
    %c0_i32_0 = arith.constant 0 : i32
    %c0_i32_1 = arith.constant 0 : i32
    return %arg0, %c0_i32, %c0_i32_0 : i32, i32, i32
  }
}

</mosaic_0001>

<llo_original>
// kernel: conv2d_re.1
$region0: #{conv2d_re.1}
  #allocation0 [shape = 'u32[]', space=smem, size = 0x4, offset = 0x4, fixed_abs, tag = 'smem constant byte address 0x4 - core index']
  #allocation1 [shape = 'u32[144,128]{1,0:T(1,128)}', space=vmem, size = 0x12000, scoped, tag = 'internal scratch']
  %s0 = inlined_call_operand.vmem [shape: f32[2,8,290], index: 0, kind: input, shape index: {}]
  %s1 = inlined_call_operand.vmem [shape: f32[8,72], index: 1, kind: input, shape index: {}]
  %s2 = inlined_call_operand.vmem [shape: f32[8,1], index: 2, kind: input, shape index: {}]
  %s3 = inlined_call_operand.vmem [shape: f32[2,256], index: 3, kind: input, shape index: {}]
  %s4 = inlined_call_operand.vmem [shape: f32[2,8,256], index: 4, kind: output, shape index: {}]
  %s5 = sld [smem:[#allocation0]]
  $region49: #{conv2d_re.1} parent=0
    _
  %s7 = ssub.s32 1, %s5
  %s8 = scalar_select 0, %s7, %s5
  loop: start=0, step=1, limit=4
  $region2: #{conv2d_re.1} parent=0 // loop_pre_header
    _
  $region3: #{conv2d_re.1} parent=0 // loop_header
    %s10 = sphi 0, %s14
    %p11 = scmp.ge.s32.totalorder %s10, 4
    %s20 = sphi 0, %s22
    %s23 = sphi 0, %s20
    %s24 = sphi 0, %s23
    %s40 = sphi 0, %s24
    %s44 = sphi 0, %s44
    %s46 = sphi 0, %s44
    %s47 = sphi 0, %s46
    %s61 = sphi 0, %s47
    %s65 = sphi 0, %s65
    %s67 = sphi 0, %s65
    %s68 = sphi 0, %s67
    %s82 = sphi 0, %s68
    %s86 = sphi 0, %s86
    %s88 = sphi 0, %s86
    %s89 = sphi 0, %s88
    %s103 = sphi 0, %s89
    %s109 = sphi 0, %s111
    %s112 = sphi 0, %s109
    %s113 = sphi 0, %s112
    %s129 = sphi 0, %s113
  $region4: #{conv2d_re.1} parent=0 // loop_header_branch
    %13 = sbr.rel (%p11) target = $region8
  $region5: #{conv2d_re.1} parent=0 // loop_body
    %s15 = ssub.s32 %s10, 1
    %s16 = ssub.s32 %s10, 2
    %s17 = sadd.s32 %s10, 1
    %s18 = ssub.s32 %s10, %s17
    %p19 = scmp.eq.s32.totalorder %s18, 0
    %s21 = sadd.s32 %s20, 1
    %s22 = scalar_select %p19, %s20, %s21
    %p25 = pneg %p19
    %p26 = scmp.eq.s32.totalorder %s10, 1
    %p27 = por %p25, %p26
    %p28 = scmp.ne.s32.totalorder %s20, %s23
    %p29 = scmp.eq.s32.totalorder %s10, 0
    %p30 = por %p28, %p29
    %p31 = scmp.ne.s32.totalorder %s20, %s23
    %p32 = scmp.eq.s32.totalorder %s15, 1
    %p33 = por %p31, %p32
    %p34 = scmp.ne.s32.totalorder %s23, %s24
    %p35 = scmp.eq.s32.totalorder %s15, 0
    %p36 = por %p34, %p35
    %p37 = scmp.ne.s32.totalorder %s23, %s24
    %p38 = scmp.eq.s32.totalorder %s16, 1
    %p39 = por %p37, %p38
    %p41 = scmp.ne.s32.totalorder %s24, %s40
    %p42 = scmp.eq.s32.totalorder %s16, 0
    %p43 = por %p41, %p42
    %s45 = sadd.s32 %s44, 1
    %p48 = scmp.eq.s32.totalorder %s10, 1
    %p49 = scmp.ne.s32.totalorder %s44, %s46
    %p50 = scmp.eq.s32.totalorder %s10, 0
    %p51 = por %p49, %p50
    %p52 = scmp.ne.s32.totalorder %s44, %s46
    %p53 = scmp.eq.s32.totalorder %s15, 1
    %p54 = por %p52, %p53
    %p55 = scmp.ne.s32.totalorder %s46, %s47
    %p56 = scmp.eq.s32.totalorder %s15, 0
    %p57 = por %p55, %p56
    %p58 = scmp.ne.s32.totalorder %s46, %s47
    %p59 = scmp.eq.s32.totalorder %s16, 1
    %p60 = por %p58, %p59
    %p62 = scmp.ne.s32.totalorder %s47, %s61
    %p63 = scmp.eq.s32.totalorder %s16, 0
    %p64 = por %p62, %p63
    %s66 = sadd.s32 %s65, 1
    %p69 = scmp.eq.s32.totalorder %s10, 1
    %p70 = scmp.ne.s32.totalorder %s65, %s67
    %p71 = scmp.eq.s32.totalorder %s10, 0
    %p72 = por %p70, %p71
    %p73 = scmp.ne.s32.totalorder %s65, %s67
    %p74 = scmp.eq.s32.totalorder %s15, 1
    %p75 = por %p73, %p74
    %p76 = scmp.ne.s32.totalorder %s67, %s68
    %p77 = scmp.eq.s32.totalorder %s15, 0
    %p78 = por %p76, %p77
    %p79 = scmp.ne.s32.totalorder %s67, %s68
    %p80 = scmp.eq.s32.totalorder %s16, 1
    %p81 = por %p79, %p80
    %p83 = scmp.ne.s32.totalorder %s68, %s82
    %p84 = scmp.eq.s32.totalorder %s16, 0
    %p85 = por %p83, %p84
    %s87 = sadd.s32 %s86, 1
    %p90 = scmp.eq.s32.totalorder %s10, 1
    %p91 = scmp.ne.s32.totalorder %s86, %s88
    %p92 = scmp.eq.s32.totalorder %s10, 0
    %p93 = por %p91, %p92
    %p94 = scmp.ne.s32.totalorder %s86, %s88
    %p95 = scmp.eq.s32.totalorder %s15, 1
    %p96 = por %p94, %p95
    %p97 = scmp.ne.s32.totalorder %s88, %s89
    %p98 = scmp.eq.s32.totalorder %s15, 0
    %p99 = por %p97, %p98
    %p100 = scmp.ne.s32.totalorder %s88, %s89
    %p101 = scmp.eq.s32.totalorder %s16, 1
    %p102 = por %p100, %p101
    %p104 = scmp.ne.s32.totalorder %s89, %s103
    %p105 = scmp.eq.s32.totalorder %s16, 0
    %p106 = por %p104, %p105
    %s107 = ssub.s32 %s10, %s17
    %p108 = scmp.eq.s32.totalorder %s107, 0
    %s110 = sadd.s32 %s109, 1
    %s111 = scalar_select %p108, %s109, %s110
    %p114 = pneg %p108
    %p115 = scmp.eq.s32.totalorder %s10, 1
    %p116 = por %p114, %p115
    %p117 = scmp.ne.s32.totalorder %s109, %s112
    %p118 = scmp.eq.s32.totalorder %s10, 0
    %p119 = por %p117, %p118
    %p120 = scmp.ne.s32.totalorder %s109, %s112
    %p121 = scmp.eq.s32.totalorder %s15, 1
    %p122 = por %p120, %p121
    %p123 = scmp.ne.s32.totalorder %s112, %s113
    %p124 = scmp.eq.s32.totalorder %s15, 0
    %p125 = por %p123, %p124
    %p126 = scmp.ne.s32.totalorder %s112, %s113
    %p127 = scmp.eq.s32.totalorder %s16, 1
    %p128 = por %p126, %p127
    %p130 = scmp.ne.s32.totalorder %s113, %s129
    %p131 = scmp.eq.s32.totalorder %s16, 0
    %p132 = por %p130, %p131
    %p133 = scmp.le.s32.totalorder 1, %s10
    %p134 = scmp.lt.s32.totalorder %s10, 3
    %p135 = pnand %p133, %p134
    %p136 = pneg %p135
    // Predicated region
    $region9: #{conv2d_re.1} parent=5 // pred_check
      _
    $region10: #{conv2d_re.1} parent=5 // pred_check_branch
      %138 = sbr.rel (%p135) target = $region12
    $region11: #{conv2d_re.1} parent=5 // pred_region
      %s139 = ssub.s32 %s10, 1
      // Predicated region
      $region13: #{conv2d_re.1} parent=11 // pred_check
        %p140 = pneg %p57
      $region14: #{conv2d_re.1} parent=11 // pred_check_branch
        %142 = sbr.rel (%p140) target = $region16
      $region15: #{conv2d_re.1} parent=11 // pred_region
        _
      $region16: #{conv2d_re.1} parent=11 // pred_fallthru
        _
      // Predicated region
      $region17: #{conv2d_re.1} parent=11 // pred_check
        %p143 = pneg %p78
      $region18: #{conv2d_re.1} parent=11 // pred_check_branch
        %145 = sbr.rel (%p143) target = $region20
      $region19: #{conv2d_re.1} parent=11 // pred_region
        _
      $region20: #{conv2d_re.1} parent=11 // pred_fallthru
        _
      // Predicated region
      $region21: #{conv2d_re.1} parent=11 // pred_check
        %p146 = pneg %p99
      $region22: #{conv2d_re.1} parent=11 // pred_check_branch
        %148 = sbr.rel (%p146) target = $region24
      $region23: #{conv2d_re.1} parent=11 // pred_region
        _
      $region24: #{conv2d_re.1} parent=11 // pred_fallthru
        _
    $region12: #{conv2d_re.1} parent=5 // pred_fallthru
      _
    %p149 = scmp.lt.s32.totalorder %s10, 2
    // Predicated region
    $region25: #{conv2d_re.1} parent=5 // pred_check
      %p150 = pneg %p149
    $region26: #{conv2d_re.1} parent=5 // pred_check_branch
      %152 = sbr.rel (%p150) target = $region28
    $region27: #{conv2d_re.1} parent=5 // pred_region
      // Predicated region
      $region29: #{conv2d_re.1} parent=27 // pred_check
        %p153 = pneg %p30
      $region30: #{conv2d_re.1} parent=27 // pred_check_branch
        %155 = sbr.rel (%p153) target = $region32
      $region31: #{conv2d_re.1} parent=27 // pred_region
        %p156 = scmp.lt.s32.totalorder %s10, 1
        %s157 = scalar_select %p156, %s10, 1
        %s158 = smul.addr %s157, 3
        %s159 = smul.addr %s158, 8
        %s160 = scalar_lea.vmem %s0, %s159
      $region32: #{conv2d_re.1} parent=27 // pred_fallthru
        _
    $region28: #{conv2d_re.1} parent=5 // pred_fallthru
      _
    %p161 = scmp.le.s32.totalorder 1, %s10
    %p162 = scmp.lt.s32.totalorder %s10, 3
    %p163 = pnand %p161, %p162
    %p164 = pneg %p163
    // Predicated region
    $region33: #{conv2d_re.1} parent=5 // pred_check
      _
    $region34: #{conv2d_re.1} parent=5 // pred_check_branch
      %166 = sbr.rel (%p163) target = $region36
    $region35: #{conv2d_re.1} parent=5 // pred_region
      %s167 = ssub.s32 %s10, 1
      %p168 = scmp.lt.s32.totalorder %s15, 1
      %s169 = scalar_select %p168, %s15, 1
      %s170 = smul.addr %s169, 3
      %s171 = smul.addr %s170, 8
      %s172 = scalar_lea.vmem %s0, %s171
      %p173 = pneg %p36
      %p174 = pneg %p33
      %p175 = pneg %p57
      %p176 = pneg %p54
      %p177 = pneg %p78
      %p178 = pneg %p75
      %p179 = pneg %p99
      %p180 = pneg %p96
      %p181 = pneg %p125
      %p182 = pneg %p122
      %p183 = scmp.lt.s32.totalorder %s15, 1
      %s184 = scalar_select %p183, %s15, 1
      %s185 = smul.addr %s184, 2
      %s186 = smul.addr %s185, 8
      %s187 = scalar_lea.vmem %s4, %s186
      %p188 = scmp.lt.s32.totalorder %s15, 1
      %s189 = scalar_select %p188, %s15, 1
      %s190 = smul.addr %s189, 3
      %s191 = smul.addr %s190, 8
      %s192 = scalar_lea.vmem %s0, %s191
      %p193 = scmp.lt.s32.totalorder %s15, 1
      %s194 = scalar_select %p193, %s15, 1
      %s195 = smul.addr %s194, 2
      %s196 = smul.addr %s195, 8
      %s197 = scalar_lea.vmem %s4, %s196
      %v198 = vld [vmem:[%s3] ss:$2 sm:$0x3]
      %s199 = scalar_lea.vmem %s3, 1
      %v200 = vld [vmem:[%s199] ss:$2 sm:$0x3]
      %v201 = vld [vmem:[%s2] sm:$0xff]
      %v202 = vld [vmem:[%s192] sm:$0xff]
      %v203 = vld [vmem:[%s192 + $0x8] sm:$0xff]
      %v205 = vlaneseq
      %v206 = vshrl.u32 %v205, 7
      %v207 = vsub.s32 0, %v206
      %v208 = vrot.slane %v198, %v207
      %v209 = vlaneseq
      %v210 = vshrl.u32 %v209, 7
      %v211 = vsub.s32 1, %v210
      %v212 = vrot.slane %v198, %v211
      %v215 = vmul.f32 %v202, %v208
      %v216 = vmul.f32 %v203, %v212
      %v217 = vld [vmem:[%s1] sm:$0xff]
      %v218 = vld [vmem:[%s192 + $0x10] sm:$0xff]
      %220 = vrot.lane.b32.xlu0 %v217, 120
      %v221 = vpop.permute.xlu0 %220
      %225 = vrot.lane.b32.xlu0 %v202, 127
      %v226 = vpop.permute.xlu0 %225
      %227 = vrot.lane.b32.xlu0 %v203, 127
      %v228 = vpop.permute.xlu0 %227
      %229 = vrot.lane.b32.xlu0 %v218, 127
      %v230 = vpop.permute.xlu0 %229
      %vm231 = vcmask 1039360
      %v232 = vsel %vm231, %v226, %v228
      %v233 = vsel %vm231, %v228, %v230
      %vm236 = vcmask 64512
      %v237 = vsel %vm236, %v221, 0
      %v239 = vand.u32 %v233, 4294901760
      %240 = vmatprep.subr.mxu0 %v239
      %v241 = vand.u32 %v232, 4294901760
      %242 = vmatpush1.msra.mxu0 %v241
      %243 = vmatprep.subr.mxu0 0.0
      %244 = vmatpush1.msra.mxu0 0.0
      %245 = vmatprep.subr.mxu0 0.0
      %246 = vmatpush1.msra.mxu0 0.0
      %247 = vmatprep.subr.mxu0 0.0
      %248 = vmatpush1.msra.mxu0 0.0
      %249 = vmatprep.subr.mxu0 0.0
      %250 = vmatpush1.msra.mxu0 0.0
      %251 = vmatprep.subr.mxu0 0.0
      %252 = vmatpush1.msra.mxu0 0.0
      %253 = vmatprep.subr.mxu0 0.0
      %254 = vmatpush1.msra.mxu0 0.0
      %255 = vmatprep.subr.mxu0 0.0
      %256 = vmatpush1.msra.mxu0 0.0
      %257 = vmatprep.subr.mxu0 0.0
      %258 = vmatpush1.msra.mxu0 0.0
      %259 = vmatprep.subr.mxu0 0.0
      %260 = vmatpush1.msra.mxu0 0.0
      %261 = vmatprep.subr.mxu0 0.0
      %262 = vmatpush1.msra.mxu0 0.0
      %263 = vmatprep.subr.mxu0 0.0
      %264 = vmatpush1.msra.mxu0 0.0
      %265 = vmatprep.subr.mxu0 0.0
      %266 = vmatpush1.msra.mxu0 0.0
      %267 = vmatprep.subr.mxu0 0.0
      %268 = vmatpush1.msra.mxu0 0.0
      %269 = vmatprep.subr.mxu0 0.0
      %270 = vmatpush1.msra.mxu0 0.0
      %271 = vmatprep.subr.mxu0 0.0
      %272 = vmatpush1.msra.mxu0 0.0
      %273 = vmatprep.subr.mxu0 0.0
      %274 = vmatpush1.msra.mxu0 0.0
      %275 = vmatprep.subr.mxu0 0.0
      %276 = vmatpush1.msra.mxu0 0.0
      %277 = vmatprep.subr.mxu0 0.0
      %278 = vmatpush1.msra.mxu0 0.0
      %279 = vmatprep.subr.mxu0 0.0
      %280 = vmatpush1.msra.mxu0 0.0
      %281 = vmatprep.subr.mxu0 0.0
      %282 = vmatpush1.msra.mxu0 0.0
      %283 = vmatprep.subr.mxu0 0.0
      %284 = vmatpush1.msra.mxu0 0.0
      %285 = vmatprep.subr.mxu0 0.0
      %286 = vmatpush1.msra.mxu0 0.0
      %287 = vmatprep.subr.mxu0 0.0
      %288 = vmatpush1.msra.mxu0 0.0
      %289 = vmatprep.subr.mxu0 0.0
      %290 = vmatpush1.msra.mxu0 0.0
      %291 = vmatprep.subr.mxu0 0.0
      %292 = vmatpush1.msra.mxu0 0.0
      %293 = vmatprep.subr.mxu0 0.0
      %294 = vmatpush1.msra.mxu0 0.0
      %295 = vmatprep.subr.mxu0 0.0
      %296 = vmatpush1.msra.mxu0 0.0
      %297 = vmatprep.subr.mxu0 0.0
      %298 = vmatpush1.msra.mxu0 0.0
      %299 = vmatprep.subr.mxu0 0.0
      %300 = vmatpush1.msra.mxu0 0.0
      %301 = vmatprep.subr.mxu0 0.0
      %302 = vmatpush1.msra.mxu0 0.0
      %303 = vmatprep.subr.mxu0 0.0
      %304 = vmatpush1.msra.mxu0 0.0
      %305 = vmatprep.mubr.f32.mxu0 0.0
      %v306 = vand.u32 %v237, 4294901760
      %v307 = vsub.f32 %v237, %v306
      %v308 = vand.u32 %v307, 4294901760
      %v309 = vsub.f32 %v307, %v308
      %v310 = vand.u32 %v309, 4294901760
      %311 = vmatmul.mubr.f32.gmra.mrb[0].mxu0 %v310
      %v312 = vpop.f32.mrb[0].mxu0
      %v313 = vadd.f32 0.0, %v312
      %v314 = vpop.f32.mrb[0].mxu0
      %v315 = vadd.f32 0.0, %v314
      %316 = vdwg.mxu0
      %v317 = vand.u32 %v233, 4294901760
      %v318 = vsub.f32 %v233, %v317
      %v319 = vand.u32 %v318, 4294901760
      %v320 = vsub.f32 %v318, %v319
      %v321 = vand.u32 %v320, 4294901760
      %322 = vmatprep.subr.mxu0 %v321
      %v323 = vand.u32 %v232, 4294901760
      %v324 = vsub.f32 %v232, %v323
      %v325 = vand.u32 %v324, 4294901760
      %v326 = vsub.f32 %v324, %v325
      %v327 = vand.u32 %v326, 4294901760
      %328 = vmatpush1.msra.mxu0 %v327
      %329 = vmatprep.subr.mxu0 0.0
      %330 = vmatpush1.msra.mxu0 0.0
      %331 = vmatprep.subr.mxu0 0.0
      %332 = vmatpush1.msra.mxu0 0.0
      %333 = vmatprep.subr.mxu0 0.0
      %334 = vmatpush1.msra.mxu0 0.0
      %335 = vmatprep.subr.mxu0 0.0
      %336 = vmatpush1.msra.mxu0 0.0
      %337 = vmatprep.subr.mxu0 0.0
      %338 = vmatpush1.msra.mxu0 0.0
      %339 = vmatprep.subr.mxu0 0.0
      %340 = vmatpush1.msra.mxu0 0.0
      %341 = vmatprep.subr.mxu0 0.0
      %342 = vmatpush1.msra.mxu0 0.0
      %343 = vmatprep.subr.mxu0 0.0
      %344 = vmatpush1.msra.mxu0 0.0
      %345 = vmatprep.subr.mxu0 0.0
      %346 = vmatpush1.msra.mxu0 0.0
      %347 = vmatprep.subr.mxu0 0.0
      %348 = vmatpush1.msra.mxu0 0.0
      %349 = vmatprep.subr.mxu0 0.0
      %350 = vmatpush1.msra.mxu0 0.0
      %351 = vmatprep.subr.mxu0 0.0
      %352 = vmatpush1.msra.mxu0 0.0
      %353 = vmatprep.subr.mxu0 0.0
      %354 = vmatpush1.msra.mxu0 0.0
      %355 = vmatprep.subr.mxu0 0.0
      %356 = vmatpush1.msra.mxu0 0.0
      %357 = vmatprep.subr.mxu0 0.0
      %358 = vmatpush1.msra.mxu0 0.0
      %359 = vmatprep.subr.mxu0 0.0
      %360 = vmatpush1.msra.mxu0 0.0
      %361 = vmatprep.subr.mxu0 0.0
      %362 = vmatpush1.msra.mxu0 0.0
      %363 = vmatprep.subr.mxu0 0.0
      %364 = vmatpush1.msra.mxu0 0.0
      %365 = vmatprep.subr.mxu0 0.0
      %366 = vmatpush1.msra.mxu0 0.0
      %367 = vmatprep.subr.mxu0 0.0
      %368 = vmatpush1.msra.mxu0 0.0
      %369 = vmatprep.subr.mxu0 0.0
      %370 = vmatpush1.msra.mxu0 0.0
      %371 = vmatprep.subr.mxu0 0.0
      %372 = vmatpush1.msra.mxu0 0.0
      %373 = vmatprep.subr.mxu0 0.0
      %374 = vmatpush1.msra.mxu0 0.0
      %375 = vmatprep.subr.mxu0 0.0
      %376 = vmatpush1.msra.mxu0 0.0
      %377 = vmatprep.subr.mxu0 0.0
      %378 = vmatpush1.msra.mxu0 0.0
      %379 = vmatprep.subr.mxu0 0.0
      %380 = vmatpush1.msra.mxu0 0.0
      %381 = vmatprep.subr.mxu0 0.0
      %382 = vmatpush1.msra.mxu0 0.0
      %383 = vmatprep.subr.mxu0 0.0
      %384 = vmatpush1.msra.mxu0 0.0
      %385 = vmatprep.subr.mxu0 0.0
      %386 = vmatpush1.msra.mxu0 0.0
      %387 = vmatprep.subr.mxu0 0.0
      %388 = vmatpush1.msra.mxu0 0.0
      %389 = vmatprep.subr.mxu0 0.0
      %390 = vmatpush1.msra.mxu0 0.0
      %391 = vmatprep.mubr.f32.mxu0 0.0
      %v392 = vand.u32 %v237, 4294901760
      %393 = vmatmul.mubr.f32.gmra.mrb[0].mxu0 %v392
      %v394 = vpop.f32.mrb[0].mxu0
      %v395 = vadd.f32 %v313, %v394
      %v396 = vpop.f32.mrb[0].mxu0
      %v397 = vadd.f32 %v315, %v396
      %398 = vdwg.mxu0
      %v399 = vand.u32 %v233, 4294901760
      %v400 = vsub.f32 %v233, %v399
      %401 = vmatprep.subr.mxu0 %v400
      %v402 = vand.u32 %v232, 4294901760
      %v403 = vsub.f32 %v232, %v402
      %404 = vmatpush1.msra.mxu0 %v403
      %405 = vmatprep.subr.mxu0 0.0
      %406 = vmatpush1.msra.mxu0 0.0
      %407 = vmatprep.subr.mxu0 0.0
      %408 = vmatpush1.msra.mxu0 0.0
      %409 = vmatprep.subr.mxu0 0.0
      %410 = vmatpush1.msra.mxu0 0.0
      %411 = vmatprep.subr.mxu0 0.0
      %412 = vmatpush1.msra.mxu0 0.0
      %413 = vmatprep.subr.mxu0 0.0
      %414 = vmatpush1.msra.mxu0 0.0
      %415 = vmatprep.subr.mxu0 0.0
      %416 = vmatpush1.msra.mxu0 0.0
      %417 = vmatprep.subr.mxu0 0.0
      %418 = vmatpush1.msra.mxu0 0.0
      %419 = vmatprep.subr.mxu0 0.0
      %420 = vmatpush1.msra.mxu0 0.0
      %421 = vmatprep.subr.mxu0 0.0
      %422 = vmatpush1.msra.mxu0 0.0
      %423 = vmatprep.subr.mxu0 0.0
      %424 = vmatpush1.msra.mxu0 0.0
      %425 = vmatprep.subr.mxu0 0.0
      %426 = vmatpush1.msra.mxu0 0.0
      %427 = vmatprep.subr.mxu0 0.0
      %428 = vmatpush1.msra.mxu0 0.0
      %429 = vmatprep.subr.mxu0 0.0
      %430 = vmatpush1.msra.mxu0 0.0
      %431 = vmatprep.subr.mxu0 0.0
      %432 = vmatpush1.msra.mxu0 0.0
      %433 = vmatprep.subr.mxu0 0.0
      %434 = vmatpush1.msra.mxu0 0.0
      %435 = vmatprep.subr.mxu0 0.0
      %436 = vmatpush1.msra.mxu0 0.0
      %437 = vmatprep.subr.mxu0 0.0
      %438 = vmatpush1.msra.mxu0 0.0
      %439 = vmatprep.subr.mxu0 0.0
      %440 = vmatpush1.msra.mxu0 0.0
      %441 = vmatprep.subr.mxu0 0.0
      %442 = vmatpush1.msra.mxu0 0.0
      %443 = vmatprep.subr.mxu0 0.0
      %444 = vmatpush1.msra.mxu0 0.0
      %445 = vmatprep.subr.mxu0 0.0
      %446 = vmatpush1.msra.mxu0 0.0
      %447 = vmatprep.subr.mxu0 0.0
      %448 = vmatpush1.msra.mxu0 0.0
      %449 = vmatprep.subr.mxu0 0.0
      %450 = vmatpush1.msra.mxu0 0.0
      %451 = vmatprep.subr.mxu0 0.0
      %452 = vmatpush1.msra.mxu0 0.0
      %453 = vmatprep.subr.mxu0 0.0
      %454 = vmatpush1.msra.mxu0 0.0
      %455 = vmatprep.subr.mxu0 0.0
      %456 = vmatpush1.msra.mxu0 0.0
      %457 = vmatprep.subr.mxu0 0.0
      %458 = vmatpush1.msra.mxu0 0.0
      %459 = vmatprep.subr.mxu0 0.0
      %460 = vmatpush1.msra.mxu0 0.0
      %461 = vmatprep.subr.mxu0 0.0
      %462 = vmatpush1.msra.mxu0 0.0
      %463 = vmatprep.subr.mxu0 0.0
      %464 = vmatpush1.msra.mxu0 0.0
      %465 = vmatprep.subr.mxu0 0.0
      %466 = vmatpush1.msra.mxu0 0.0
      %467 = vmatprep.mubr.f32.mxu0 0.0
      %v468 = vand.u32 %v237, 4294901760
      %v469 = vsub.f32 %v237, %v468
      %470 = vmatmul.mubr.f32.gmra.mrb[0].mxu0 %v469
      %v471 = vpop.f32.mrb[0].mxu0
      %v472 = vadd.f32 %v395, %v471
      %v473 = vpop.f32.mrb[0].mxu0
      %v474 = vadd.f32 %v397, %v473
      %475 = vdwg.mxu0
      %v476 = vand.u32 %v233, 4294901760
      %477 = vmatprep.subr.mxu0 %v476
      %v478 = vand.u32 %v232, 4294901760
      %479 = vmatpush1.msra.mxu0 %v478
      %480 = vmatprep.subr.mxu0 0.0
      %481 = vmatpush1.msra.mxu0 0.0
      %482 = vmatprep.subr.mxu0 0.0
      %483 = vmatpush1.msra.mxu0 0.0
      %484 = vmatprep.subr.mxu0 0.0
      %485 = vmatpush1.msra.mxu0 0.0
      %486 = vmatprep.subr.mxu0 0.0
      %487 = vmatpush1.msra.mxu0 0.0
      %488 = vmatprep.subr.mxu0 0.0
      %489 = vmatpush1.msra.mxu0 0.0
      %490 = vmatprep.subr.mxu0 0.0
      %491 = vmatpush1.msra.mxu0 0.0
      %492 = vmatprep.subr.mxu0 0.0
      %493 = vmatpush1.msra.mxu0 0.0
      %494 = vmatprep.subr.mxu0 0.0
      %495 = vmatpush1.msra.mxu0 0.0
      %496 = vmatprep.subr.mxu0 0.0
      %497 = vmatpush1.msra.mxu0 0.0
      %498 = vmatprep.subr.mxu0 0.0
      %499 = vmatpush1.msra.mxu0 0.0
      %500 = vmatprep.subr.mxu0 0.0
      %501 = vmatpush1.msra.mxu0 0.0
      %502 = vmatprep.subr.mxu0 0.0
      %503 = vmatpush1.msra.mxu0 0.0
      %504 = vmatprep.subr.mxu0 0.0
      %505 = vmatpush1.msra.mxu0 0.0
      %506 = vmatprep.subr.mxu0 0.0
      %507 = vmatpush1.msra.mxu0 0.0
      %508 = vmatprep.subr.mxu0 0.0
      %509 = vmatpush1.msra.mxu0 0.0
      %510 = vmatprep.subr.mxu0 0.0
      %511 = vmatpush1.msra.mxu0 0.0
      %512 = vmatprep.subr.mxu0 0.0
      %513 = vmatpush1.msra.mxu0 0.0
      %514 = vmatprep.subr.mxu0 0.0
      %515 = vmatpush1.msra.mxu0 0.0
      %516 = vmatprep.subr.mxu0 0.0
      %517 = vmatpush1.msra.mxu0 0.0
      %518 = vmatprep.subr.mxu0 0.0
      %519 = vmatpush1.msra.mxu0 0.0
      %520 = vmatprep.subr.mxu0 0.0
      %521 = vmatpush1.msra.mxu0 0.0
      %522 = vmatprep.subr.mxu0 0.0
      %523 = vmatpush1.msra.mxu0 0.0
      %524 = vmatprep.subr.mxu0 0.0
      %525 = vmatpush1.msra.mxu0 0.0
      %526 = vmatprep.subr.mxu0 0.0
      %527 = vmatpush1.msra.mxu0 0.0
      %528 = vmatprep.subr.mxu0 0.0
      %529 = vmatpush1.msra.mxu0 0.0
      %530 = vmatprep.subr.mxu0 0.0
      %531 = vmatpush1.msra.mxu0 0.0
      %532 = vmatprep.subr.mxu0 0.0
      %533 = vmatpush1.msra.mxu0 0.0
      %534 = vmatprep.subr.mxu0 0.0
      %535 = vmatpush1.msra.mxu0 0.0
      %536 = vmatprep.subr.mxu0 0.0
      %537 = vmatpush1.msra.mxu0 0.0
      %538 = vmatprep.subr.mxu0 0.0
      %539 = vmatpush1.msra.mxu0 0.0
      %540 = vmatprep.subr.mxu0 0.0
      %541 = vmatpush1.msra.mxu0 0.0
      %542 = vmatprep.mubr.f32.mxu0 0.0
      %v543 = vand.u32 %v237, 4294901760
      %v544 = vsub.f32 %v237, %v543
      %v545 = vand.u32 %v544, 4294901760
      %546 = vmatmul.mubr.f32.gmra.mrb[0].mxu0 %v545
      %v547 = vpop.f32.mrb[0].mxu0
      %v548 = vadd.f32 %v472, %v547
      %v549 = vpop.f32.mrb[0].mxu0
      %v550 = vadd.f32 %v474, %v549
      %551 = vdwg.mxu0
      %v552 = vand.u32 %v233, 4294901760
      %v553 = vsub.f32 %v233, %v552
      %v554 = vand.u32 %v553, 4294901760
      %555 = vmatprep.subr.mxu0 %v554
      %v556 = vand.u32 %v232, 4294901760
      %v557 = vsub.f32 %v232, %v556
      %v558 = vand.u32 %v557, 4294901760
      %559 = vmatpush1.msra.mxu0 %v558
      %560 = vmatprep.subr.mxu0 0.0
      %561 = vmatpush1.msra.mxu0 0.0
      %562 = vmatprep.subr.mxu0 0.0
      %563 = vmatpush1.msra.mxu0 0.0
      %564 = vmatprep.subr.mxu0 0.0
      %565 = vmatpush1.msra.mxu0 0.0
      %566 = vmatprep.subr.mxu0 0.0
      %567 = vmatpush1.msra.mxu0 0.0
      %568 = vmatprep.subr.mxu0 0.0
      %569 = vmatpush1.msra.mxu0 0.0
      %570 = vmatprep.subr.mxu0 0.0
      %571 = vmatpush1.msra.mxu0 0.0
      %572 = vmatprep.subr.mxu0 0.0
      %573 = vmatpush1.msra.mxu0 0.0
      %574 = vmatprep.subr.mxu0 0.0
      %575 = vmatpush1.msra.mxu0 0.0
      %576 = vmatprep.subr.mxu0 0.0
      %577 = vmatpush1.msra.mxu0 0.0
      %578 = vmatprep.subr.mxu0 0.0
      %579 = vmatpush1.msra.mxu0 0.0
      %580 = vmatprep.subr.mxu0 0.0
      %581 = vmatpush1.msra.mxu0 0.0
      %582 = vmatprep.subr.mxu0 0.0
      %583 = vmatpush1.msra.mxu0 0.0
      %584 = vmatprep.subr.mxu0 0.0
      %585 = vmatpush1.msra.mxu0 0.0
      %586 = vmatprep.subr.mxu0 0.0
      %587 = vmatpush1.msra.mxu0 0.0
      %588 = vmatprep.subr.mxu0 0.0
      %589 = vmatpush1.msra.mxu0 0.0
      %590 = vmatprep.subr.mxu0 0.0
      %591 = vmatpush1.msra.mxu0 0.0
      %592 = vmatprep.subr.mxu0 0.0
      %593 = vmatpush1.msra.mxu0 0.0
      %594 = vmatprep.subr.mxu0 0.0
      %595 = vmatpush1.msra.mxu0 0.0
      %596 = vmatprep.subr.mxu0 0.0
      %597 = vmatpush1.msra.mxu0 0.0
      %598 = vmatprep.subr.mxu0 0.0
      %599 = vmatpush1.msra.mxu0 0.0
      %600 = vmatprep.subr.mxu0 0.0
      %601 = vmatpush1.msra.mxu0 0.0
      %602 = vmatprep.subr.mxu0 0.0
      %603 = vmatpush1.msra.mxu0 0.0
      %604 = vmatprep.subr.mxu0 0.0
      %605 = vmatpush1.msra.mxu0 0.0
      %606 = vmatprep.subr.mxu0 0.0
      %607 = vmatpush1.msra.mxu0 0.0
      %608 = vmatprep.subr.mxu0 0.0
      %609 = vmatpush1.msra.mxu0 0.0
      %610 = vmatprep.subr.mxu0 0.0
      %611 = vmatpush1.msra.mxu0 0.0
      %612 = vmatprep.subr.mxu0 0.0
      %613 = vmatpush1.msra.mxu0 0.0
      %614 = vmatprep.subr.mxu0 0.0
      %615 = vmatpush1.msra.mxu0 0.0
      %616 = vmatprep.subr.mxu0 0.0
      %617 = vmatpush1.msra.mxu0 0.0
      %618 = vmatprep.subr.mxu0 0.0
      %619 = vmatpush1.msra.mxu0 0.0
      %620 = vmatprep.subr.mxu0 0.0
      %621 = vmatpush1.msra.mxu0 0.0
      %622 = vmatprep.mubr.f32.mxu0 0.0
      %v623 = vand.u32 %v237, 4294901760
      %624 = vmatmul.mubr.f32.gmra.mrb[0].mxu0 %v623
      %v625 = vpop.f32.mrb[0].mxu0
      %v626 = vadd.f32 %v548, %v625
      %v627 = vpop.f32.mrb[0].mxu0
      %v628 = vadd.f32 %v550, %v627
      %629 = vdwg.mxu0
      %v630 = vand.u32 %v233, 4294901760
      %631 = vmatprep.subr.mxu0 %v630
      %v632 = vand.u32 %v232, 4294901760
      %633 = vmatpush1.msra.mxu0 %v632
      %634 = vmatprep.subr.mxu0 0.0
      %635 = vmatpush1.msra.mxu0 0.0
      %636 = vmatprep.subr.mxu0 0.0
      %637 = vmatpush1.msra.mxu0 0.0
      %638 = vmatprep.subr.mxu0 0.0
      %639 = vmatpush1.msra.mxu0 0.0
      %640 = vmatprep.subr.mxu0 0.0
      %641 = vmatpush1.msra.mxu0 0.0
      %642 = vmatprep.subr.mxu0 0.0
      %643 = vmatpush1.msra.mxu0 0.0
      %644 = vmatprep.subr.mxu0 0.0
      %645 = vmatpush1.msra.mxu0 0.0
      %646 = vmatprep.subr.mxu0 0.0
      %647 = vmatpush1.msra.mxu0 0.0
      %648 = vmatprep.subr.mxu0 0.0
      %649 = vmatpush1.msra.mxu0 0.0
      %650 = vmatprep.subr.mxu0 0.0
      %651 = vmatpush1.msra.mxu0 0.0
      %652 = vmatprep.subr.mxu0 0.0
      %653 = vmatpush1.msra.mxu0 0.0
      %654 = vmatprep.subr.mxu0 0.0
      %655 = vmatpush1.msra.mxu0 0.0
      %656 = vmatprep.subr.mxu0 0.0
      %657 = vmatpush1.msra.mxu0 0.0
      %658 = vmatprep.subr.mxu0 0.0
      %659 = vmatpush1.msra.mxu0 0.0
      %660 = vmatprep.subr.mxu0 0.0
      %661 = vmatpush1.msra.mxu0 0.0
      %662 = vmatprep.subr.mxu0 0.0
      %663 = vmatpush1.msra.mxu0 0.0
      %664 = vmatprep.subr.mxu0 0.0
      %665 = vmatpush1.msra.mxu0 0.0
      %666 = vmatprep.subr.mxu0 0.0
      %667 = vmatpush1.msra.mxu0 0.0
      %668 = vmatprep.subr.mxu0 0.0
      %669 = vmatpush1.msra.mxu0 0.0
      %670 = vmatprep.subr.mxu0 0.0
      %671 = vmatpush1.msra.mxu0 0.0
      %672 = vmatprep.subr.mxu0 0.0
      %673 = vmatpush1.msra.mxu0 0.0
      %674 = vmatprep.subr.mxu0 0.0
      %675 = vmatpush1.msra.mxu0 0.0
      %676 = vmatprep.subr.mxu0 0.0
      %677 = vmatpush1.msra.mxu0 0.0
      %678 = vmatprep.subr.mxu0 0.0
      %679 = vmatpush1.msra.mxu0 0.0
      %680 = vmatprep.subr.mxu0 0.0
      %681 = vmatpush1.msra.mxu0 0.0
      %682 = vmatprep.subr.mxu0 0.0
      %683 = vmatpush1.msra.mxu0 0.0
      %684 = vmatprep.subr.mxu0 0.0
      %685 = vmatpush1.msra.mxu0 0.0
      %686 = vmatprep.subr.mxu0 0.0
      %687 = vmatpush1.msra.mxu0 0.0
      %688 = vmatprep.subr.mxu0 0.0
      %689 = vmatpush1.msra.mxu0 0.0
      %690 = vmatprep.subr.mxu0 0.0
      %691 = vmatpush1.msra.mxu0 0.0
      %692 = vmatprep.subr.mxu0 0.0
      %693 = vmatpush1.msra.mxu0 0.0
      %694 = vmatprep.subr.mxu0 0.0
      %695 = vmatpush1.msra.mxu0 0.0
      %696 = vmatprep.mubr.f32.mxu0 0.0
      %v697 = vand.u32 %v237, 4294901760
      %698 = vmatmul.mubr.f32.gmra.mrb[0].mxu0 %v697
      %v699 = vpop.f32.mrb[0].mxu0
      %v700 = vadd.f32 %v626, %v699
      %v701 = vpop.f32.mrb[0].mxu0
      %v702 = vadd.f32 %v628, %v701
      %703 = vdwg.mxu0
      %v704 = vsel %vm236, %v217, 0
      %v706 = vand.u32 %v216, 4294901760
      %707 = vmatprep.subr.mxu0 %v706
      %v708 = vand.u32 %v215, 4294901760
      %709 = vmatpush1.msra.mxu0 %v708
      %710 = vmatprep.subr.mxu0 0.0
      %711 = vmatpush1.msra.mxu0 0.0
      %712 = vmatprep.subr.mxu0 0.0
      %713 = vmatpush1.msra.mxu0 0.0
      %714 = vmatprep.subr.mxu0 0.0
      %715 = vmatpush1.msra.mxu0 0.0
      %716 = vmatprep.subr.mxu0 0.0
      %717 = vmatpush1.msra.mxu0 0.0
      %718 = vmatprep.subr.mxu0 0.0
      %719 = vmatpush1.msra.mxu0 0.0
      %720 = vmatprep.subr.mxu0 0.0
      %721 = vmatpush1.msra.mxu0 0.0
      %722 = vmatprep.subr.mxu0 0.0
      %723 = vmatpush1.msra.mxu0 0.0
      %724 = vmatprep.subr.mxu0 0.0
      %725 = vmatpush1.msra.mxu0 0.0
      %726 = vmatprep.subr.mxu0 0.0
      %727 = vmatpush1.msra.mxu0 0.0
      %728 = vmatprep.subr.mxu0 0.0
      %729 = vmatpush1.msra.mxu0 0.0
      %730 = vmatprep.subr.mxu0 0.0
      %731 = vmatpush1.msra.mxu0 0.0
      %732 = vmatprep.subr.mxu0 0.0
      %733 = vmatpush1.msra.mxu0 0.0
      %734 = vmatprep.subr.mxu0 0.0
      %735 = vmatpush1.msra.mxu0 0.0
      %736 = vmatprep.subr.mxu0 0.0
      %737 = vmatpush1.msra.mxu0 0.0
      %738 = vmatprep.subr.mxu0 0.0
      %739 = vmatpush1.msra.mxu0 0.0
      %740 = vmatprep.subr.mxu0 0.0
      %741 = vmatpush1.msra.mxu0 0.0
      %742 = vmatprep.subr.mxu0 0.0
      %743 = vmatpush1.msra.mxu0 0.0
      %744 = vmatprep.subr.mxu0 0.0
      %745 = vmatpush1.msra.mxu0 0.0
      %746 = vmatprep.subr.mxu0 0.0
      %747 = vmatpush1.msra.mxu0 0.0
      %748 = vmatprep.subr.mxu0 0.0
      %749 = vmatpush1.msra.mxu0 0.0
      %750 = vmatprep.subr.mxu0 0.0
      %751 = vmatpush1.msra.mxu0 0.0
      %752 = vmatprep.subr.mxu0 0.0
      %753 = vmatpush1.msra.mxu0 0.0
      %754 = vmatprep.subr.mxu0 0.0
      %755 = vmatpush1.msra.mxu0 0.0
      %756 = vmatprep.subr.mxu0 0.0
      %757 = vmatpush1.msra.mxu0 0.0
      %758 = vmatprep.subr.mxu0 0.0
      %759 = vmatpush1.msra.mxu0 0.0
      %760 = vmatprep.subr.mxu0 0.0
      %761 = vmatpush1.msra.mxu0 0.0
      %762 = vmatprep.subr.mxu0 0.0
      %763 = vmatpush1.msra.mxu0 0.0
      %764 = vmatprep.subr.mxu0 0.0
      %765 = vmatpush1.msra.mxu0 0.0
      %766 = vmatprep.subr.mxu0 0.0
      %767 = vmatpush1.msra.mxu0 0.0
      %768 = vmatprep.subr.mxu0 0.0
      %769 = vmatpush1.msra.mxu0 0.0
      %770 = vmatprep.subr.mxu0 0.0
      %771 = vmatpush1.msra.mxu0 0.0
      %772 = vmatprep.mubr.f32.mxu0 0.0
      %v773 = vand.u32 %v704, 4294901760
      %v774 = vsub.f32 %v704, %v773
      %v775 = vand.u32 %v774, 4294901760
      %v776 = vsub.f32 %v774, %v775
      %v777 = vand.u32 %v776, 4294901760
      %778 = vmatmul.mubr.f32.gmra.mrb[0].mxu0 %v777
      %v779 = vpop.f32.mrb[0].mxu0
      %v780 = vadd.f32 %v700, %v779
      %v781 = vpop.f32.mrb[0].mxu0
      %v782 = vadd.f32 %v702, %v781
      %783 = vdwg.mxu0
      %v784 = vand.u32 %v216, 4294901760
      %v785 = vsub.f32 %v216, %v784
      %v786 = vand.u32 %v785, 4294901760
      %v787 = vsub.f32 %v785, %v786
      %v788 = vand.u32 %v787, 4294901760
      %789 = vmatprep.subr.mxu0 %v788
      %v790 = vand.u32 %v215, 4294901760
      %v791 = vsub.f32 %v215, %v790
      %v792 = vand.u32 %v791, 4294901760
      %v793 = vsub.f32 %v791, %v792
      %v794 = vand.u32 %v793, 4294901760
      %795 = vmatpush1.msra.mxu0 %v794
      %796 = vmatprep.subr.mxu0 0.0
      %797 = vmatpush1.msra.mxu0 0.0
      %798 = vmatprep.subr.mxu0 0.0
      %799 = vmatpush1.msra.mxu0 0.0
      %800 = vmatprep.subr.mxu0 0.0
      %801 = vmatpush1.msra.mxu0 0.0
      %802 = vmatprep.subr.mxu0 0.0
      %803 = vmatpush1.msra.mxu0 0.0
      %804 = vmatprep.subr.mxu0 0.0
      %805 = vmatpush1.msra.mxu0 0.0
      %806 = vmatprep.subr.mxu0 0.0
      %807 = vmatpush1.msra.mxu0 0.0
      %808 = vmatprep.subr.mxu0 0.0
      %809 = vmatpush1.msra.mxu0 0.0
      %810 = vmatprep.subr.mxu0 0.0
      %811 = vmatpush1.msra.mxu0 0.0
      %812 = vmatprep.subr.mxu0 0.0
      %813 = vmatpush1.msra.mxu0 0.0
      %814 = vmatprep.subr.mxu0 0.0
      %815 = vmatpush1.msra.mxu0 0.0
      %816 = vmatprep.subr.mxu0 0.0
      %817 = vmatpush1.msra.mxu0 0.0
      %818 = vmatprep.subr.mxu0 0.0
      %819 = vmatpush1.msra.mxu0 0.0
      %820 = vmatprep.subr.mxu0 0.0
      %821 = vmatpush1.msra.mxu0 0.0
      %822 = vmatprep.subr.mxu0 0.0
      %823 = vmatpush1.msra.mxu0 0.0
      %824 = vmatprep.subr.mxu0 0.0
      %825 = vmatpush1.msra.mxu0 0.0
      %826 = vmatprep.subr.mxu0 0.0
      %827 = vmatpush1.msra.mxu0 0.0
      %828 = vmatprep.subr.mxu0 0.0
      %829 = vmatpush1.msra.mxu0 0.0
      %830 = vmatprep.subr.mxu0 0.0
      %831 = vmatpush1.msra.mxu0 0.0
      %832 = vmatprep.subr.mxu0 0.0
      %833 = vmatpush1.msra.mxu0 0.0
      %834 = vmatprep.subr.mxu0 0.0
      %835 = vmatpush1.msra.mxu0 0.0
      %836 = vmatprep.subr.mxu0 0.0
      %837 = vmatpush1.msra.mxu0 0.0
      %838 = vmatprep.subr.mxu0 0.0
      %839 = vmatpush1.msra.mxu0 0.0
      %840 = vmatprep.subr.mxu0 0.0
      %841 = vmatpush1.msra.mxu0 0.0
      %842 = vmatprep.subr.mxu0 0.0
      %843 = vmatpush1.msra.mxu0 0.0
      %844 = vmatprep.subr.mxu0 0.0
      %845 = vmatpush1.msra.mxu0 0.0
      %846 = vmatprep.subr.mxu0 0.0
      %847 = vmatpush1.msra.mxu0 0.0
      %848 = vmatprep.subr.mxu0 0.0
      %849 = vmatpush1.msra.mxu0 0.0
      %850 = vmatprep.subr.mxu0 0.0
      %851 = vmatpush1.msra.mxu0 0.0
      %852 = vmatprep.subr.mxu0 0.0
      %853 = vmatpush1.msra.mxu0 0.0
      %854 = vmatprep.subr.mxu0 0.0
      %855 = vmatpush1.msra.mxu0 0.0
      %856 = vmatprep.subr.mxu0 0.0
      %857 = vmatpush1.msra.mxu0 0.0
      %858 = vmatprep.mubr.f32.mxu0 0.0
      %v859 = vand.u32 %v704, 4294901760
      %860 = vmatmul.mubr.f32.gmra.mrb[0].mxu0 %v859
      %v861 = vpop.f32.mrb[0].mxu0
      %v862 = vadd.f32 %v780, %v861
      %v863 = vpop.f32.mrb[0].mxu0
      %v864 = vadd.f32 %v782, %v863
      %865 = vdwg.mxu0
      %v866 = vand.u32 %v216, 4294901760
      %v867 = vsub.f32 %v216, %v866
      %868 = vmatprep.subr.mxu0 %v867
      %v869 = vand.u32 %v215, 4294901760
      %v870 = vsub.f32 %v215, %v869
      %871 = vmatpush1.msra.mxu0 %v870
      %872 = vmatprep.subr.mxu0 0.0
      %873 = vmatpush1.msra.mxu0 0.0
      %874 = vmatprep.subr.mxu0 0.0
      %875 = vmatpush1.msra.mxu0 0.0
      %876 = vmatprep.subr.mxu0 0.0
      %877 = vmatpush1.msra.mxu0 0.0
      %878 = vmatprep.subr.mxu0 0.0
      %879 = vmatpush1.msra.mxu0 0.0
      %880 = vmatprep.subr.mxu0 0.0
      %881 = vmatpush1.msra.mxu0 0.0
      %882 = vmatprep.subr.mxu0 0.0
      %883 = vmatpush1.msra.mxu0 0.0
      %884 = vmatprep.subr.mxu0 0.0
      %885 = vmatpush1.msra.mxu0 0.0
      %886 = vmatprep.subr.mxu0 0.0
      %887 = vmatpush1.msra.mxu0 0.0
      %888 = vmatprep.subr.mxu0 0.0
      %889 = vmatpush1.msra.mxu0 0.0
      %890 = vmatprep.subr.mxu0 0.0
      %891 = vmatpush1.msra.mxu0 0.0
      %892 = vmatprep.subr.mxu0 0.0
      %893 = vmatpush1.msra.mxu0 0.0
      %894 = vmatprep.subr.mxu0 0.0
      %895 = vmatpush1.msra.mxu0 0.0
      %896 = vmatprep.subr.mxu0 0.0
      %897 = vmatpush1.msra.mxu0 0.0
      %898 = vmatprep.subr.mxu0 0.0
      %899 = vmatpush1.msra.mxu0 0.0
      %900 = vmatprep.subr.mxu0 0.0
      %901 = vmatpush1.msra.mxu0 0.0
      %902 = vmatprep.subr.mxu0 0.0
      %903 = vmatpush1.msra.mxu0 0.0
      %904 = vmatprep.subr.mxu0 0.0
      %905 = vmatpush1.msra.mxu0 0.0
      %906 = vmatprep.subr.mxu0 0.0
      %907 = vmatpush1.msra.mxu0 0.0
      %908 = vmatprep.subr.mxu0 0.0
      %909 = vmatpush1.msra.mxu0 0.0
      %910 = vmatprep.subr.mxu0 0.0
      %911 = vmatpush1.msra.mxu0 0.0
      %912 = vmatprep.subr.mxu0 0.0
      %913 = vmatpush1.msra.mxu0 0.0
      %914 = vmatprep.subr.mxu0 0.0
      %915 = vmatpush1.msra.mxu0 0.0
      %916 = vmatprep.subr.mxu0 0.0
      %917 = vmatpush1.msra.mxu0 0.0
      %918 = vmatprep.subr.mxu0 0.0
      %919 = vmatpush1.msra.mxu0 0.0
      %920 = vmatprep.subr.mxu0 0.0
      %921 = vmatpush1.msra.mxu0 0.0
      %922 = vmatprep.subr.mxu0 0.0
      %923 = vmatpush1.msra.mxu0 0.0
      %924 = vmatprep.subr.mxu0 0.0
      %925 = vmatpush1.msra.mxu0 0.0
      %926 = vmatprep.subr.mxu0 0.0
      %927 = vmatpush1.msra.mxu0 0.0
      %928 = vmatprep.subr.mxu0 0.0
      %929 = vmatpush1.msra.mxu0 0.0
      %930 = vmatprep.subr.mxu0 0.0
      %931 = vmatpush1.msra.mxu0 0.0
      %932 = vmatprep.subr.mxu0 0.0
      %933 = vmatpush1.msra.mxu0 0.0
      %934 = vmatprep.mubr.f32.mxu0 0.0
      %v935 = vand.u32 %v704, 4294901760
      %v936 = vsub.f32 %v704, %v935
      %937 = vmatmul.mubr.f32.gmra.mrb[0].mxu0 %v936
      %v938 = vpop.f32.mrb[0].mxu0
      %v939 = vadd.f32 %v862, %v938
      %v940 = vpop.f32.mrb[0].mxu0
      %v941 = vadd.f32 %v864, %v940
      %942 = vdwg.mxu0
      %v943 = vand.u32 %v216, 4294901760
      %944 = vmatprep.subr.mxu0 %v943
      %v945 = vand.u32 %v215, 4294901760
      %946 = vmatpush1.msra.mxu0 %v945
      %947 = vmatprep.subr.mxu0 0.0
      %948 = vmatpush1.msra.mxu0 0.0
      %949 = vmatprep.subr.mxu0 0.0
      %950 = vmatpush1.msra.mxu0 0.0
      %951 = vmatprep.subr.mxu0 0.0
      %952 = vmatpush1.msra.mxu0 0.0
      %953 = vmatprep.subr.mxu0 0.0
      %954 = vmatpush1.msra.mxu0 0.0
      %955 = vmatprep.subr.mxu0 0.0
      %956 = vmatpush1.msra.mxu0 0.0
      %957 = vmatprep.subr.mxu0 0.0
      %958 = vmatpush1.msra.mxu0 0.0
      %959 = vmatprep.subr.mxu0 0.0
      %960 = vmatpush1.msra.mxu0 0.0
      %961 = vmatprep.subr.mxu0 0.0
      %962 = vmatpush1.msra.mxu0 0.0
      %963 = vmatprep.subr.mxu0 0.0
      %964 = vmatpush1.msra.mxu0 0.0
      %965 = vmatprep.subr.mxu0 0.0
      %966 = vmatpush1.msra.mxu0 0.0
      %967 = vmatprep.subr.mxu0 0.0
      %968 = vmatpush1.msra.mxu0 0.0
      %969 = vmatprep.subr.mxu0 0.0
      %970 = vmatpush1.msra.mxu0 0.0
      %971 = vmatprep.subr.mxu0 0.0
      %972 = vmatpush1.msra.mxu0 0.0
      %973 = vmatprep.subr.mxu0 0.0
      %974 = vmatpush1.msra.mxu0 0.0
      %975 = vmatprep.subr.mxu0 0.0
      %976 = vmatpush1.msra.mxu0 0.0
      %977 = vmatprep.subr.mxu0 0.0
      %978 = vmatpush1.msra.mxu0 0.0
      %979 = vmatprep.subr.mxu0 0.0
      %980 = vmatpush1.msra.mxu0 0.0
      %981 = vmatprep.subr.mxu0 0.0
      %982 = vmatpush1.msra.mxu0 0.0
      %983 = vmatprep.subr.mxu0 0.0
      %984 = vmatpush1.msra.mxu0 0.0
      %985 = vmatprep.subr.mxu0 0.0
      %986 = vmatpush1.msra.mxu0 0.0
      %987 = vmatprep.subr.mxu0 0.0
      %988 = vmatpush1.msra.mxu0 0.0
      %989 = vmatprep.subr.mxu0 0.0
      %990 = vmatpush1.msra.mxu0 0.0
      %991 = vmatprep.subr.mxu0 0.0
      %992 = vmatpush1.msra.mxu0 0.0
      %993 = vmatprep.subr.mxu0 0.0
      %994 = vmatpush1.msra.mxu0 0.0
      %995 = vmatprep.subr.mxu0 0.0
      %996 = vmatpush1.msra.mxu0 0.0
      %997 = vmatprep.subr.mxu0 0.0
      %998 = vmatpush1.msra.mxu0 0.0
      %999 = vmatprep.subr.mxu0 0.0
      %1000 = vmatpush1.msra.mxu0 0.0
      %1001 = vmatprep.subr.mxu0 0.0
      %1002 = vmatpush1.msra.mxu0 0.0
      %1003 = vmatprep.subr.mxu0 0.0
      %1004 = vmatpush1.msra.mxu0 0.0
      %1005 = vmatprep.subr.mxu0 0.0
      %1006 = vmatpush1.msra.mxu0 0.0
      %1007 = vmatprep.subr.mxu0 0.0
      %1008 = vmatpush1.msra.mxu0 0.0
      %1009 = vmatprep.mubr.f32.mxu0 0.0
      %v1010 = vand.u32 %v704, 4294901760
      %v1011 = vsub.f32 %v704, %v1010
      %v1012 = vand.u32 %v1011, 4294901760
      %1013 = vmatmul.mubr.f32.gmra.mrb[0].mxu0 %v1012
      %v1014 = vpop.f32.mrb[0].mxu0
      %v1015 = vadd.f32 %v939, %v1014
      %v1016 = vpop.f32.mrb[0].mxu0
      %v1017 = vadd.f32 %v941, %v1016
      %1018 = vdwg.mxu0
      %v1019 = vand.u32 %v216, 4294901760
      %v1020 = vsub.f32 %v216, %v1019
      %v1021 = vand.u32 %v1020, 4294901760
      %1022 = vmatprep.subr.mxu0 %v1021
      %v1023 = vand.u32 %v215, 4294901760
      %v1024 = vsub.f32 %v215, %v1023
      %v1025 = vand.u32 %v1024, 4294901760
      %1026 = vmatpush1.msra.mxu0 %v1025
      %1027 = vmatprep.subr.mxu0 0.0
      %1028 = vmatpush1.msra.mxu0 0.0
      %1029 = vmatprep.subr.mxu0 0.0
      %1030 = vmatpush1.msra.mxu0 0.0
      %1031 = vmatprep.subr.mxu0 0.0
      %1032 = vmatpush1.msra.mxu0 0.0
      %1033 = vmatprep.subr.mxu0 0.0
      %1034 = vmatpush1.msra.mxu0 0.0
      %1035 = vmatprep.subr.mxu0 0.0
      %1036 = vmatpush1.msra.mxu0 0.0
      %1037 = vmatprep.subr.mxu0 0.0
      %1038 = vmatpush1.msra.mxu0 0.0
      %1039 = vmatprep.subr.mxu0 0.0
      %1040 = vmatpush1.msra.mxu0 0.0
      %1041 = vmatprep.subr.mxu0 0.0
      %1042 = vmatpush1.msra.mxu0 0.0
      %1043 = vmatprep.subr.mxu0 0.0
      %1044 = vmatpush1.msra.mxu0 0.0
      %1045 = vmatprep.subr.mxu0 0.0
      %1046 = vmatpush1.msra.mxu0 0.0
      %1047 = vmatprep.subr.mxu0 0.0
      %1048 = vmatpush1.msra.mxu0 0.0
      %1049 = vmatprep.subr.mxu0 0.0
      %1050 = vmatpush1.msra.mxu0 0.0
      %1051 = vmatprep.subr.mxu0 0.0
      %1052 = vmatpush1.msra.mxu0 0.0
      %1053 = vmatprep.subr.mxu0 0.0
      %1054 = vmatpush1.msra.mxu0 0.0
      %1055 = vmatprep.subr.mxu0 0.0
      %1056 = vmatpush1.msra.mxu0 0.0
      %1057 = vmatprep.subr.mxu0 0.0
      %1058 = vmatpush1.msra.mxu0 0.0
      %1059 = vmatprep.subr.mxu0 0.0
      %1060 = vmatpush1.msra.mxu0 0.0
      %1061 = vmatprep.subr.mxu0 0.0
      %1062 = vmatpush1.msra.mxu0 0.0
      %1063 = vmatprep.subr.mxu0 0.0
      %1064 = vmatpush1.msra.mxu0 0.0
      %1065 = vmatprep.subr.mxu0 0.0
      %1066 = vmatpush1.msra.mxu0 0.0
      %1067 = vmatprep.subr.mxu0 0.0
      %1068 = vmatpush1.msra.mxu0 0.0
      %1069 = vmatprep.subr.mxu0 0.0
      %1070 = vmatpush1.msra.mxu0 0.0
      %1071 = vmatprep.subr.mxu0 0.0
      %1072 = vmatpush1.msra.mxu0 0.0
      %1073 = vmatprep.subr.mxu0 0.0
      %1074 = vmatpush1.msra.mxu0 0.0
      %1075 = vmatprep.subr.mxu0 0.0
      %1076 = vmatpush1.msra.mxu0 0.0
      %1077 = vmatprep.subr.mxu0 0.0
      %1078 = vmatpush1.msra.mxu0 0.0
      %1079 = vmatprep.subr.mxu0 0.0
      %1080 = vmatpush1.msra.mxu0 0.0
      %1081 = vmatprep.subr.mxu0 0.0
      %1082 = vmatpush1.msra.mxu0 0.0
      %1083 = vmatprep.subr.mxu0 0.0
      %1084 = vmatpush1.msra.mxu0 0.0
      %1085 = vmatprep.subr.mxu0 0.0
      %1086 = vmatpush1.msra.mxu0 0.0
      %1087 = vmatprep.subr.mxu0 0.0
      %1088 = vmatpush1.msra.mxu0 0.0
      %1089 = vmatprep.mubr.f32.mxu0 0.0
      %v1090 = vand.u32 %v704, 4294901760
      %1091 = vmatmul.mubr.f32.gmra.mrb[0].mxu0 %v1090
      %v1092 = vpop.f32.mrb[0].mxu0
      %v1093 = vadd.f32 %v1015, %v1092
      %v1094 = vpop.f32.mrb[0].mxu0
      %v1095 = vadd.f32 %v1017, %v1094
      %1096 = vdwg.mxu0
      %v1097 = vand.u32 %v216, 4294901760
      %1098 = vmatprep.subr.mxu0 %v1097
      %v1099 = vand.u32 %v215, 4294901760
      %1100 = vmatpush1.msra.mxu0 %v1099
      %1101 = vmatprep.subr.mxu0 0.0
      %1102 = vmatpush1.msra.mxu0 0.0
      %1103 = vmatprep.subr.mxu0 0.0
      %1104 = vmatpush1.msra.mxu0 0.0
      %1105 = vmatprep.subr.mxu0 0.0
      %1106 = vmatpush1.msra.mxu0 0.0
      %1107 = vmatprep.subr.mxu0 0.0
      %1108 = vmatpush1.msra.mxu0 0.0
      %1109 = vmatprep.subr.mxu0 0.0
      %1110 = vmatpush1.msra.mxu0 0.0
      %1111 = vmatprep.subr.mxu0 0.0
      %1112 = vmatpush1.msra.mxu0 0.0
      %1113 = vmatprep.subr.mxu0 0.0
      %1114 = vmatpush1.msra.mxu0 0.0
      %1115 = vmatprep.subr.mxu0 0.0
      %1116 = vmatpush1.msra.mxu0 0.0
      %1117 = vmatprep.subr.mxu0 0.0
      %1118 = vmatpush1.msra.mxu0 0.0
      %1119 = vmatprep.subr.mxu0 0.0
      %1120 = vmatpush1.msra.mxu0 0.0
      %1121 = vmatprep.subr.mxu0 0.0
      %1122 = vmatpush1.msra.mxu0 0.0
      %1123 = vmatprep.subr.mxu0 0.0
      %1124 = vmatpush1.msra.mxu0 0.0
      %1125 = vmatprep.subr.mxu0 0.0
      %1126 = vmatpush1.msra.mxu0 0.0
      %1127 = vmatprep.subr.mxu0 0.0
      %1128 = vmatpush1.msra.mxu0 0.0
      %1129 = vmatprep.subr.mxu0 0.0
      %1130 = vmatpush1.msra.mxu0 0.0
      %1131 = vmatprep.subr.mxu0 0.0
      %1132 = vmatpush1.msra.mxu0 0.0
      %1133 = vmatprep.subr.mxu0 0.0
      %1134 = vmatpush1.msra.mxu0 0.0
      %1135 = vmatprep.subr.mxu0 0.0
      %1136 = vmatpush1.msra.mxu0 0.0
      %1137 = vmatprep.subr.mxu0 0.0
      %1138 = vmatpush1.msra.mxu0 0.0
      %1139 = vmatprep.subr.mxu0 0.0
      %1140 = vmatpush1.msra.mxu0 0.0
      %1141 = vmatprep.subr.mxu0 0.0
      %1142 = vmatpush1.msra.mxu0 0.0
      %1143 = vmatprep.subr.mxu0 0.0
      %1144 = vmatpush1.msra.mxu0 0.0
      %1145 = vmatprep.subr.mxu0 0.0
      %1146 = vmatpush1.msra.mxu0 0.0
      %1147 = vmatprep.subr.mxu0 0.0
      %1148 = vmatpush1.msra.mxu0 0.0
      %1149 = vmatprep.subr.mxu0 0.0
      %1150 = vmatpush1.msra.mxu0 0.0
      %1151 = vmatprep.subr.mxu0 0.0
      %1152 = vmatpush1.msra.mxu0 0.0
      %1153 = vmatprep.subr.mxu0 0.0
      %1154 = vmatpush1.msra.mxu0 0.0
      %1155 = vmatprep.subr.mxu0 0.0
      %1156 = vmatpush1.msra.mxu0 0.0
      %1157 = vmatprep.subr.mxu0 0.0
      %1158 = vmatpush1.msra.mxu0 0.0
      %1159 = vmatprep.subr.mxu0 0.0
      %1160 = vmatpush1.msra.mxu0 0.0
      %1161 = vmatprep.subr.mxu0 0.0
      %1162 = vmatpush1.msra.mxu0 0.0
      %1163 = vmatprep.mubr.f32.mxu0 0.0
      %v1164 = vand.u32 %v704, 4294901760
      %1165 = vmatmul.mubr.f32.gmra.mrb[0].mxu0 %v1164
      %v1166 = vpop.f32.mrb[0].mxu0
      %v1167 = vadd.f32 %v1093, %v1166
      %v1168 = vpop.f32.mrb[0].mxu0
      %v1169 = vadd.f32 %v1095, %v1168
      %1170 = vdwg.mxu0
      %v1172 = vlaneseq
      %v1173 = vshrl.u32 %v1172, 7
      %v1174 = vsub.s32 0, %v1173
      %v1175 = vrot.slane %v200, %v1174
      %v1176 = vlaneseq
      %v1177 = vshrl.u32 %v1176, 7
      %v1178 = vsub.s32 1, %v1177
      %v1179 = vrot.slane %v200, %v1178
      %1180 = vrot.lane.b32.xlu0 %v1175, 2
      %v1181 = vpop.permute.xlu0 %1180
      %1182 = vrot.lane.b32.xlu0 %v1179, 2
      %v1183 = vpop.permute.xlu0 %1182
      %vm1184 = vcmask 15360
      %v1185 = vsel %vm1184, %v1181, %v1183
      %v1189 = vmul.f32 %v202, %v1181
      %v1190 = vmul.f32 %v203, %v1185
      %v1191 = vmul.f32 %v218, %v1183
      %1192 = vrot.lane.b32.xlu0 %v217, 112
      %v1193 = vpop.permute.xlu0 %1192
      %1197 = vrot.lane.b32.xlu0 %v1189, 126
      %v1198 = vpop.permute.xlu0 %1197
      %1199 = vrot.lane.b32.xlu0 %v1190, 126
      %v1200 = vpop.permute.xlu0 %1199
      %1201 = vrot.lane.b32.xlu0 %v1191, 126
      %v1202 = vpop.permute.xlu0 %1201
      %vm1203 = vcmask 1031168
      %v1204 = vsel %vm1203, %v1198, %v1200
      %v1205 = vsel %vm1203, %v1200, %v1202
      %v1208 = vsel %vm236, %v1193, 0
      %v1210 = vand.u32 %v1205, 4294901760
      %1211 = vmatprep.subr.mxu0 %v1210
      %v1212 = vand.u32 %v1204, 4294901760
      %1213 = vmatpush1.msra.mxu0 %v1212
      %1214 = vmatprep.subr.mxu0 0.0
      %1215 = vmatpush1.msra.mxu0 0.0
      %1216 = vmatprep.subr.mxu0 0.0
      %1217 = vmatpush1.msra.mxu0 0.0
      %1218 = vmatprep.subr.mxu0 0.0
      %1219 = vmatpush1.msra.mxu0 0.0
      %1220 = vmatprep.subr.mxu0 0.0
      %1221 = vmatpush1.msra.mxu0 0.0
      %1222 = vmatprep.subr.mxu0 0.0
      %1223 = vmatpush1.msra.mxu0 0.0
      %1224 = vmatprep.subr.mxu0 0.0
      %1225 = vmatpush1.msra.mxu0 0.0
      %1226 = vmatprep.subr.mxu0 0.0
      %1227 = vmatpush1.msra.mxu0 0.0
      %1228 = vmatprep.subr.mxu0 0.0
      %1229 = vmatpush1.msra.mxu0 0.0
      %1230 = vmatprep.subr.mxu0 0.0
      %1231 = vmatpush1.msra.mxu0 0.0
      %1232 = vmatprep.subr.mxu0 0.0
      %1233 = vmatpush1.msra.mxu0 0.0
      %1234 = vmatprep.subr.mxu0 0.0
      %1235 = vmatpush1.msra.mxu0 0.0
      %1236 = vmatprep.subr.mxu0 0.0
      %1237 = vmatpush1.msra.mxu0 0.0
      %1238 = vmatprep.subr.mxu0 0.0
      %1239 = vmatpush1.msra.mxu0 0.0
      %1240 = vmatprep.subr.mxu0 0.0
      %1241 = vmatpush1.msra.mxu0 0.0
      %1242 = vmatprep.subr.mxu0 0.0
      %1243 = vmatpush1.msra.mxu0 0.0
      %1244 = vmatprep.subr.mxu0 0.0
      %1245 = vmatpush1.msra.mxu0 0.0
      %1246 = vmatprep.subr.mxu0 0.0
      %1247 = vmatpush1.msra.mxu0 0.0
      %1248 = vmatprep.subr.mxu0 0.0
      %1249 = vmatpush1.msra.mxu0 0.0
      %1250 = vmatprep.subr.mxu0 0.0
      %1251 = vmatpush1.msra.mxu0 0.0
      %1252 = vmatprep.subr.mxu0 0.0
      %1253 = vmatpush1.msra.mxu0 0.0
      %1254 = vmatprep.subr.mxu0 0.0
      %1255 = vmatpush1.msra.mxu0 0.0
      %1256 = vmatprep.subr.mxu0 0.0
      %1257 = vmatpush1.msra.mxu0 0.0
      %1258 = vmatprep.subr.mxu0 0.0
      %1259 = vmatpush1.msra.mxu0 0.0
      %1260 = vmatprep.subr.mxu0 0.0
      %1261 = vmatpush1.msra.mxu0 0.0
      %1262 = vmatprep.subr.mxu0 0.0
      %1263 = vmatpush1.msra.mxu0 0.0
      %1264 = vmatprep.subr.mxu0 0.0
      %1265 = vmatpush1.msra.mxu0 0.0
      %1266 = vmatprep.subr.mxu0 0.0
      %1267 = vmatpush1.msra.mxu0 0.0
      %1268 = vmatprep.subr.mxu0 0.0
      %1269 = vmatpush1.msra.mxu0 0.0
      %1270 = vmatprep.subr.mxu0 0.0
      %1271 = vmatpush1.msra.mxu0 0.0
      %1272 = vmatprep.subr.mxu0 0.0
      %1273 = vmatpush1.msra.mxu0 0.0
      %1274 = vmatprep.subr.mxu0 0.0
      %1275 = vmatpush1.msra.mxu0 0.0
      %1276 = vmatprep.mubr.f32.mxu0 0.0
      %v1277 = vand.u32 %v1208, 4294901760
      %v1278 = vsub.f32 %v1208, %v1277
      %v1279 = vand.u32 %v1278, 4294901760
      %v1280 = vsub.f32 %v1278, %v1279
      %v1281 = vand.u32 %v1280, 4294901760
      %1282 = vmatmul.mubr.f32.gmra.mrb[0].mxu0 %v1281
      %v1283 = vpop.f32.mrb[0].mxu0
      %v1284 = vadd.f32 0.0, %v1283
      %v1285 = vpop.f32.mrb[0].mxu0
      %v1286 = vadd.f32 0.0, %v1285
      %1287 = vdwg.mxu0
      %v1288 = vand.u32 %v1205, 4294901760
      %v1289 = vsub.f32 %v1205, %v1288
      %v1290 = vand.u32 %v1289, 4294901760
      %v1291 = vsub.f32 %v1289, %v1290
      %v1292 = vand.u32 %v1291, 4294901760
      %1293 = vmatprep.subr.mxu0 %v1292
      %v1294 = vand.u32 %v1204, 4294901760
      %v1295 = vsub.f32 %v1204, %v1294
      %v1296 = vand.u32 %v1295, 4294901760
      %v1297 = vsub.f32 %v1295, %v1296
      %v1298 = vand.u32 %v1297, 4294901760
      %1299 = vmatpush1.msra.mxu0 %v1298
      %1300 = vmatprep.subr.mxu0 0.0
      %1301 = vmatpush1.msra.mxu0 0.0
      %1302 = vmatprep.subr.mxu0 0.0
      %1303 = vmatpush1.msra.mxu0 0.0
      %1304 = vmatprep.subr.mxu0 0.0
      %1305 = vmatpush1.msra.mxu0 0.0
      %1306 = vmatprep.subr.mxu0 0.0
      %1307 = vmatpush1.msra.mxu0 0.0
      %1308 = vmatprep.subr.mxu0 0.0
      %1309 = vmatpush1.msra.mxu0 0.0
      %1310 = vmatprep.subr.mxu0 0.0
      %1311 = vmatpush1.msra.mxu0 0.0
      %1312 = vmatprep.subr.mxu0 0.0
      %1313 = vmatpush1.msra.mxu0 0.0
      %1314 = vmatprep.subr.mxu0 0.0
      %1315 = vmatpush1.msra.mxu0 0.0
      %1316 = vmatprep.subr.mxu0 0.0
      %1317 = vmatpush1.msra.mxu0 0.0
      %1318 = vmatprep.subr.mxu0 0.0
      %1319 = vmatpush1.msra.mxu0 0.0
      %1320 = vmatprep.subr.mxu0 0.0
      %1321 = vmatpush1.msra.mxu0 0.0
      %1322 = vmatprep.subr.mxu0 0.0
      %1323 = vmatpush1.msra.mxu0 0.0
      %1324 = vmatprep.subr.mxu0 0.0
      %1325 = vmatpush1.msra.mxu0 0.0
      %1326 = vmatprep.subr.mxu0 0.0
      %1327 = vmatpush1.msra.mxu0 0.0
      %1328 = vmatprep.subr.mxu0 0.0
      %1329 = vmatpush1.msra.mxu0 0.0
      %1330 = vmatprep.subr.mxu0 0.0
      %1331 = vmatpush1.msra.mxu0 0.0
      %1332 = vmatprep.subr.mxu0 0.0
      %1333 = vmatpush1.msra.mxu0 0.0
      %1334 = vmatprep.subr.mxu0 0.0
      %1335 = vmatpush1.msra.mxu0 0.0
      %1336 = vmatprep.subr.mxu0 0.0
      %1337 = vmatpush1.msra.mxu0 0.0
      %1338 = vmatprep.subr.mxu0 0.0
      %1339 = vmatpush1.msra.mxu0 0.0
      %1340 = vmatprep.subr.mxu0 0.0
      %1341 = vmatpush1.msra.mxu0 0.0
      %1342 = vmatprep.subr.mxu0 0.0
      %1343 = vmatpush1.msra.mxu0 0.0
      %1344 = vmatprep.subr.mxu0 0.0
      %1345 = vmatpush1.msra.mxu0 0.0
      %1346 = vmatprep.subr.mxu0 0.0
      %1347 = vmatpush1.msra.mxu0 0.0
      %1348 = vmatprep.subr.mxu0 0.0
      %1349 = vmatpush1.msra.mxu0 0.0
      %1350 = vmatprep.subr.mxu0 0.0
      %1351 = vmatpush1.msra.mxu0 0.0
      %1352 = vmatprep.subr.mxu0 0.0
      %1353 = vmatpush1.msra.mxu0 0.0
      %1354 = vmatprep.subr.mxu0 0.0
      %1355 = vmatpush1.msra.mxu0 0.0
      %1356 = vmatprep.subr.mxu0 0.0
      %1357 = vmatpush1.msra.mxu0 0.0
      %1358 = vmatprep.subr.mxu0 0.0
      %1359 = vmatpush1.msra.mxu0 0.0
      %1360 = vmatprep.subr.mxu0 0.0
      %1361 = vmatpush1.msra.mxu0 0.0
      %1362 = vmatprep.mubr.f32.mxu0 0.0
      %v1363 = vand.u32 %v1208, 4294901760
      %1364 = vmatmul.mubr.f32.gmra.mrb[0].mxu0 %v1363
      %v1365 = vpop.f32.mrb[0].mxu0
      %v1366 = vadd.f32 %v1284, %v1365
      %v1367 = vpop.f32.mrb[0].mxu0
      %v1368 = vadd.f32 %v1286, %v1367
      %1369 = vdwg.mxu0
      %v1370 = vand.u32 %v1205, 4294901760
      %v1371 = vsub.f32 %v1205, %v1370
      %1372 = vmatprep.subr.mxu0 %v1371
      %v1373 = vand.u32 %v1204, 4294901760
      %v1374 = vsub.f32 %v1204, %v1373
      %1375 = vmatpush1.msra.mxu0 %v1374
      %1376 = vmatprep.subr.mxu0 0.0
      %1377 = vmatpush1.msra.mxu0 0.0
      %1378 = vmatprep.subr.mxu0 0.0
      %1379 = vmatpush1.msra.mxu0 0.0
      %1380 = vmatprep.subr.mxu0 0.0
      %1381 = vmatpush1.msra.mxu0 0.0
      %1382 = vmatprep.subr.mxu0 0.0
      %1383 = vmatpush1.msra.mxu0 0.0
      %1384 = vmatprep.subr.mxu0 0.0
      %1385 = vmatpush1.msra.mxu0 0.0
      %1386 = vmatprep.subr.mxu0 0.0
      %1387 = vmatpush1.msra.mxu0 0.0
      %1388 = vmatprep.subr.mxu0 0.0
      %1389 = vmatpush1.msra.mxu0 0.0
      %1390 = vmatprep.subr.mxu0 0.0
      %1391 = vmatpush1.msra.mxu0 0.0
      %1392 = vmatprep.subr.mxu0 0.0
      %1393 = vmatpush1.msra.mxu0 0.0
      %1394 = vmatprep.subr.mxu0 0.0
      %1395 = vmatpush1.msra.mxu0 0.0
      %1396 = vmatprep.subr.mxu0 0.0
      %1397 = vmatpush1.msra.mxu0 0.0
      %1398 = vmatprep.subr.mxu0 0.0
      %1399 = vmatpush1.msra.mxu0 0.0
      %1400 = vmatprep.subr.mxu0 0.0
      %1401 = vmatpush1.msra.mxu0 0.0
      %1402 = vmatprep.subr.mxu0 0.0
      %1403 = vmatpush1.msra.mxu0 0.0
      %1404 = vmatprep.subr.mxu0 0.0
      %1405 = vmatpush1.msra.mxu0 0.0
      %1406 = vmatprep.subr.mxu0 0.0
      %1407 = vmatpush1.msra.mxu0 0.0
      %1408 = vmatprep.subr.mxu0 0.0
      %1409 = vmatpush1.msra.mxu0 0.0
      %1410 = vmatprep.subr.mxu0 0.0
      %1411 = vmatpush1.msra.mxu0 0.0
      %1412 = vmatprep.subr.mxu0 0.0
      %1413 = vmatpush1.msra.mxu0 0.0
      %1414 = vmatprep.subr.mxu0 0.0
      %1415 = vmatpush1.msra.mxu0 0.0
      %1416 = vmatprep.subr.mxu0 0.0
      %1417 = vmatpush1.msra.mxu0 0.0
      %1418 = vmatprep.subr.mxu0 0.0
      %1419 = vmatpush1.msra.mxu0 0.0
      %1420 = vmatprep.subr.mxu0 0.0
      %1421 = vmatpush1.msra.mxu0 0.0
      %1422 = vmatprep.subr.mxu0 0.0
      %1423 = vmatpush1.msra.mxu0 0.0
      %1424 = vmatprep.subr.mxu0 0.0
      %1425 = vmatpush1.msra.mxu0 0.0
      %1426 = vmatprep.subr.mxu0 0.0
      %1427 = vmatpush1.msra.mxu0 0.0
      %1428 = vmatprep.subr.mxu0 0.0
      %1429 = vmatpush1.msra.mxu0 0.0
      %1430 = vmatprep.subr.mxu0 0.0
      %1431 = vmatpush1.msra.mxu0 0.0
      %1432 = vmatprep.subr.mxu0 0.0
      %1433 = vmatpush1.msra.mxu0 0.0
      %1434 = vmatprep.subr.mxu0 0.0
      %1435 = vmatpush1.msra.mxu0 0.0
      %1436 = vmatprep.subr.mxu0 0.0
      %1437 = vmatpush1.msra.mxu0 0.0
      %1438 = vmatprep.mubr.f32.mxu0 0.0
      %v1439 = vand.u32 %v1208, 4294901760
      %v1440 = vsub.f32 %v1208, %v1439
      %1441 = vmatmul.mubr.f32.gmra.mrb[0].mxu0 %v1440
      %v1442 = vpop.f32.mrb[0].mxu0
      %v1443 = vadd.f32 %v1366, %v1442
      %v1444 = vpop.f32.mrb[0].mxu0
      %v1445 = vadd.f32 %v1368, %v1444
      %1446 = vdwg.mxu0
      %v1447 = vand.u32 %v1205, 4294901760
      %1448 = vmatprep.subr.mxu0 %v1447
      %v1449 = vand.u32 %v1204, 4294901760
      %1450 = vmatpush1.msra.mxu0 %v1449
      %1451 = vmatprep.subr.mxu0 0.0
      %1452 = vmatpush1.msra.mxu0 0.0
      %1453 = vmatprep.subr.mxu0 0.0
      %1454 = vmatpush1.msra.mxu0 0.0
      %1455 = vmatprep.subr.mxu0 0.0
      %1456 = vmatpush1.msra.mxu0 0.0
      %1457 = vmatprep.subr.mxu0 0.0
      %1458 = vmatpush1.msra.mxu0 0.0
      %1459 = vmatprep.subr.mxu0 0.0
      %1460 = vmatpush1.msra.mxu0 0.0
      %1461 = vmatprep.subr.mxu0 0.0
      %1462 = vmatpush1.msra.mxu0 0.0
      %1463 = vmatprep.subr.mxu0 0.0
      %1464 = vmatpush1.msra.mxu0 0.0
      %1465 = vmatprep.subr.mxu0 0.0
      %1466 = vmatpush1.msra.mxu0 0.0
      %1467 = vmatprep.subr.mxu0 0.0
      %1468 = vmatpush1.msra.mxu0 0.0
      %1469 = vmatprep.subr.mxu0 0.0
      %1470 = vmatpush1.msra.mxu0 0.0
      %1471 = vmatprep.subr.mxu0 0.0
      %1472 = vmatpush1.msra.mxu0 0.0
      %1473 = vmatprep.subr.mxu0 0.0
      %1474 = vmatpush1.msra.mxu0 0.0
      %1475 = vmatprep.subr.mxu0 0.0
      %1476 = vmatpush1.msra.mxu0 0.0
      %1477 = vmatprep.subr.mxu0 0.0
      %1478 = vmatpush1.msra.mxu0 0.0
      %1479 = vmatprep.subr.mxu0 0.0
      %1480 = vmatpush1.msra.mxu0 0.0
      %1481 = vmatprep.subr.mxu0 0.0
      %1482 = vmatpush1.msra.mxu0 0.0
      %1483 = vmatprep.subr.mxu0 0.0
      %1484 = vmatpush1.msra.mxu0 0.0
      %1485 = vmatprep.subr.mxu0 0.0
      %1486 = vmatpush1.msra.mxu0 0.0
      %1487 = vmatprep.subr.mxu0 0.0
      %1488 = vmatpush1.msra.mxu0 0.0
      %1489 = vmatprep.subr.mxu0 0.0
      %1490 = vmatpush1.msra.mxu0 0.0
      %1491 = vmatprep.subr.mxu0 0.0
      %1492 = vmatpush1.msra.mxu0 0.0
      %1493 = vmatprep.subr.mxu0 0.0
      %1494 = vmatpush1.msra.mxu0 0.0
      %1495 = vmatprep.subr.mxu0 0.0
      %1496 = vmatpush1.msra.mxu0 0.0
      %1497 = vmatprep.subr.mxu0 0.0
      %1498 = vmatpush1.msra.mxu0 0.0
      %1499 = vmatprep.subr.mxu0 0.0
      %1500 = vmatpush1.msra.mxu0 0.0
      %1501 = vmatprep.subr.mxu0 0.0
      %1502 = vmatpush1.msra.mxu0 0.0
      %1503 = vmatprep.subr.mxu0 0.0
      %1504 = vmatpush1.msra.mxu0 0.0
      %1505 = vmatprep.subr.mxu0 0.0
      %1506 = vmatpush1.msra.mxu0 0.0
      %1507 = vmatprep.subr.mxu0 0.0
      %1508 = vmatpush1.msra.mxu0 0.0
      %1509 = vmatprep.subr.mxu0 0.0
      %1510 = vmatpush1.msra.mxu0 0.0
      %1511 = vmatprep.subr.mxu0 0.0
      %1512 = vmatpush1.msra.mxu0 0.0
      %1513 = vmatprep.mubr.f32.mxu0 0.0
      %v1514 = vand.u32 %v1208, 4294901760
      %v1515 = vsub.f32 %v1208, %v1514
      %v1516 = vand.u32 %v1515, 4294901760
      %1517 = vmatmul.mubr.f32.gmra.mrb[0].mxu0 %v1516
      %v1518 = vpop.f32.mrb[0].mxu0
      %v1519 = vadd.f32 %v1443, %v1518
      %v1520 = vpop.f32.mrb[0].mxu0
      %v1521 = vadd.f32 %v1445, %v1520
      %1522 = vdwg.mxu0
      %v1523 = vand.u32 %v1205, 4294901760
      %v1524 = vsub.f32 %v1205, %v1523
      %v1525 = vand.u32 %v1524, 4294901760
      %1526 = vmatprep.subr.mxu0 %v1525
      %v1527 = vand.u32 %v1204, 4294901760
      %v1528 = vsub.f32 %v1204, %v1527
      %v1529 = vand.u32 %v1528, 4294901760
      %1530 = vmatpush1.msra.mxu0 %v1529
      %1531 = vmatprep.subr.mxu0 0.0
      %1532 = vmatpush1.msra.mxu0 0.0
      %1533 = vmatprep.subr.mxu0 0.0
      %1534 = vmatpush1.msra.mxu0 0.0
      %1535 = vmatprep.subr.mxu0 0.0
      %1536 = vmatpush1.msra.mxu0 0.0
      %1537 = vmatprep.subr.mxu0 0.0
      %1538 = vmatpush1.msra.mxu0 0.0
      %1539 = vmatprep.subr.mxu0 0.0
      %1540 = vmatpush1.msra.mxu0 0.0
      %1541 = vmatprep.subr.mxu0 0.0
      %1542 = vmatpush1.msra.mxu0 0.0
      %1543 = vmatprep.subr.mxu0 0.0
      %1544 = vmatpush1.msra.mxu0 0.0
      %1545 = vmatprep.subr.mxu0 0.0
      %1546 = vmatpush1.msra.mxu0 0.0
      %1547 = vmatprep.subr.mxu0 0.0
      %1548 = vmatpush1.msra.mxu0 0.0
      %1549 = vmatprep.subr.mxu0 0.0
      %1550 = vmatpush1.msra.mxu0 0.0
      %1551 = vmatprep.subr.mxu0 0.0
      %1552 = vmatpush1.msra.mxu0 0.0
      %1553 = vmatprep.subr.mxu0 0.0
      %1554 = vmatpush1.msra.mxu0 0.0
      %1555 = vmatprep.subr.mxu0 0.0
      %1556 = vmatpush1.msra.mxu0 0.0
      %1557 = vmatprep.subr.mxu0 0.0
      %1558 = vmatpush1.msra.mxu0 0.0
      %1559 = vmatprep.subr.mxu0 0.0
      %1560 = vmatpush1.msra.mxu0 0.0
      %1561 = vmatprep.subr.mxu0 0.0
      %1562 = vmatpush1.msra.mxu0 0.0
      %1563 = vmatprep.subr.mxu0 0.0
      %1564 = vmatpush1.msra.mxu0 0.0
      %1565 = vmatprep.subr.mxu0 0.0
      %1566 = vmatpush1.msra.mxu0 0.0
      %1567 = vmatprep.subr.mxu0 0.0
      %1568 = vmatpush1.msra.mxu0 0.0
      %1569 = vmatprep.subr.mxu0 0.0
      %1570 = vmatpush1.msra.mxu0 0.0
      %1571 = vmatprep.subr.mxu0 0.0
      %1572 = vmatpush1.msra.mxu0 0.0
      %1573 = vmatprep.subr.mxu0 0.0
      %1574 = vmatpush1.msra.mxu0 0.0
      %1575 = vmatprep.subr.mxu0 0.0
      %1576 = vmatpush1.msra.mxu0 0.0
      %1577 = vmatprep.subr.mxu0 0.0
      %1578 = vmatpush1.msra.mxu0 0.0
      %1579 = vmatprep.subr.mxu0 0.0
      %1580 = vmatpush1.msra.mxu0 0.0
      %1581 = vmatprep.subr.mxu0 0.0
      %1582 = vmatpush1.msra.mxu0 0.0
      %1583 = vmatprep.subr.mxu0 0.0
      %1584 = vmatpush1.msra.mxu0 0.0
      %1585 = vmatprep.subr.mxu0 0.0
      %1586 = vmatpush1.msra.mxu0 0.0
      %1587 = vmatprep.subr.mxu0 0.0
      %1588 = vmatpush1.msra.mxu0 0.0
      %1589 = vmatprep.subr.mxu0 0.0
      %1590 = vmatpush1.msra.mxu0 0.0
      %1591 = vmatprep.subr.mxu0 0.0
      %1592 = vmatpush1.msra.mxu0 0.0
      %1593 = vmatprep.mubr.f32.mxu0 0.0
      %v1594 = vand.u32 %v1208, 4294901760
      %1595 = vmatmul.mubr.f32.gmra.mrb[0].mxu0 %v1594
      %v1596 = vpop.f32.mrb[0].mxu0
      %v1597 = vadd.f32 %v1519, %v1596
      %v1598 = vpop.f32.mrb[0].mxu0
      %v1599 = vadd.f32 %v1521, %v1598
      %1600 = vdwg.mxu0
      %v1601 = vand.u32 %v1205, 4294901760
      %1602 = vmatprep.subr.mxu0 %v1601
      %v1603 = vand.u32 %v1204, 4294901760
      %1604 = vmatpush1.msra.mxu0 %v1603
      %1605 = vmatprep.subr.mxu0 0.0
      %1606 = vmatpush1.msra.mxu0 0.0
      %1607 = vmatprep.subr.mxu0 0.0
      %1608 = vmatpush1.msra.mxu0 0.0
      %1609 = vmatprep.subr.mxu0 0.0
      %1610 = vmatpush1.msra.mxu0 0.0
      %1611 = vmatprep.subr.mxu0 0.0
      %1612 = vmatpush1.msra.mxu0 0.0
      %1613 = vmatprep.subr.mxu0 0.0
      %1614 = vmatpush1.msra.mxu0 0.0
      %1615 = vmatprep.subr.mxu0 0.0
      %1616 = vmatpush1.msra.mxu0 0.0
      %1617 = vmatprep.subr.mxu0 0.0
      %1618 = vmatpush1.msra.mxu0 0.0
      %1619 = vmatprep.subr.mxu0 0.0
      %1620 = vmatpush1.msra.mxu0 0.0
      %1621 = vmatprep.subr.mxu0 0.0
      %1622 = vmatpush1.msra.mxu0 0.0
      %1623 = vmatprep.subr.mxu0 0.0
      %1624 = vmatpush1.msra.mxu0 0.0
      %1625 = vmatprep.subr.mxu0 0.0
      %1626 = vmatpush1.msra.mxu0 0.0
      %1627 = vmatprep.subr.mxu0 0.0
      %1628 = vmatpush1.msra.mxu0 0.0
      %1629 = vmatprep.subr.mxu0 0.0
      %1630 = vmatpush1.msra.mxu0 0.0
      %1631 = vmatprep.subr.mxu0 0.0
      %1632 = vmatpush1.msra.mxu0 0.0
      %1633 = vmatprep.subr.mxu0 0.0
      %1634 = vmatpush1.msra.mxu0 0.0
      %1635 = vmatprep.subr.mxu0 0.0
      %1636 = vmatpush1.msra.mxu0 0.0
      %1637 = vmatprep.subr.mxu0 0.0
      %1638 = vmatpush1.msra.mxu0 0.0
      %1639 = vmatprep.subr.mxu0 0.0
      %1640 = vmatpush1.msra.mxu0 0.0
      %1641 = vmatprep.subr.mxu0 0.0
      %1642 = vmatpush1.msra.mxu0 0.0
      %1643 = vmatprep.subr.mxu0 0.0
      %1644 = vmatpush1.msra.mxu0 0.0
      %1645 = vmatprep.subr.mxu0 0.0
      %1646 = vmatpush1.msra.mxu0 0.0
      %1647 = vmatprep.subr.mxu0 0.0
      %1648 = vmatpush1.msra.mxu0 0.0
      %1649 = vmatprep.subr.mxu0 0.0
      %1650 = vmatpush1.msra.mxu0 0.0
      %1651 = vmatprep.subr.mxu0 0.0
      %1652 = vmatpush1.msra.mxu0 0.0
      %1653 = vmatprep.subr.mxu0 0.0
      %1654 = vmatpush1.msra.mxu0 0.0
      %1655 = vmatprep.subr.mxu0 0.0
      %1656 = vmatpush1.msra.mxu0 0.0
      %1657 = vmatprep.subr.mxu0 0.0
      %1658 = vmatpush1.msra.mxu0 0.0
      %1659 = vmatprep.subr.mxu0 0.0
      %1660 = vmatpush1.msra.mxu0 0.0
      %1661 = vmatprep.subr.mxu0 0.0
      %1662 = vmatpush1.msra.mxu0 0.0
      %1663 = vmatprep.subr.mxu0 0.0
      %1664 = vmatpush1.msra.mxu0 0.0
      %1665 = vmatprep.subr.mxu0 0.0
      %1666 = vmatpush1.msra.mxu0 0.0
      %1667 = vmatprep.mubr.f32.mxu0 0.0
      %v1668 = vand.u32 %v1208, 4294901760
      %1669 = vmatmul.mubr.f32.gmra.mrb[0].mxu0 %v1668
      %v1670 = vpop.f32.mrb[0].mxu0
      %v1671 = vadd.f32 %v1597, %v1670
      %v1672 = vpop.f32.mrb[0].mxu0
      %v1673 = vadd.f32 %v1599, %v1672
      %1674 = vdwg.mxu0
      %v1675 = vadd.f32 %v1167, %v1671
      %v1676 = vadd.f32 %v1169, %v1673
      %1677 = vrot.lane.b32.xlu0 %v208, 16
      %v1678 = vpop.permute.xlu0 %1677
      %1679 = vrot.lane.b32.xlu0 %v212, 16
      %v1680 = vpop.permute.xlu0 %1679
      %vm1681 = vcmask 130048
      %v1682 = vsel %vm1681, %v1678, %v1680
      %v1686 = vmul.f32 %v202, %v1678
      %v1687 = vmul.f32 %v203, %v1682
      %v1688 = vmul.f32 %v218, %v1680
      %1689 = vrot.lane.b32.xlu0 %v217, 96
      %v1690 = vpop.permute.xlu0 %1689
      %1691 = vrot.lane.b32.xlu0 %v202, 111
      %v1692 = vpop.permute.xlu0 %1691
      %1693 = vrot.lane.b32.xlu0 %v203, 111
      %v1694 = vpop.permute.xlu0 %1693
      %1695 = vrot.lane.b32.xlu0 %v218, 111
      %v1696 = vpop.permute.xlu0 %1695
      %vm1697 = vcmask 908288
      %v1698 = vsel %vm1697, %v1692, %v1694
      %v1699 = vsel %vm1697, %v1694, %v1696
      %v1702 = vsel %vm236, %v1690, 0
      %v1704 = vand.u32 %v1699, 4294901760
      %1705 = vmatprep.subr.mxu0 %v1704
      %v1706 = vand.u32 %v1698, 4294901760
      %1707 = vmatpush1.msra.mxu0 %v1706
      %1708 = vmatprep.subr.mxu0 0.0
      %1709 = vmatpush1.msra.mxu0 0.0
      %1710 = vmatprep.subr.mxu0 0.0
      %1711 = vmatpush1.msra.mxu0 0.0
      %1712 = vmatprep.subr.mxu0 0.0
      %1713 = vmatpush1.msra.mxu0 0.0
      %1714 = vmatprep.subr.mxu0 0.0
      %1715 = vmatpush1.msra.mxu0 0.0
      %1716 = vmatprep.subr.mxu0 0.0
      %1717 = vmatpush1.msra.mxu0 0.0
      %1718 = vmatprep.subr.mxu0 0.0
      %1719 = vmatpush1.msra.mxu0 0.0
      %1720 = vmatprep.subr.mxu0 0.0
      %1721 = vmatpush1.msra.mxu0 0.0
      %1722 = vmatprep.subr.mxu0 0.0
      %1723 = vmatpush1.msra.mxu0 0.0
      %1724 = vmatprep.subr.mxu0 0.0
      %1725 = vmatpush1.msra.mxu0 0.0
      %1726 = vmatprep.subr.mxu0 0.0
      %1727 = vmatpush1.msra.mxu0 0.0
      %1728 = vmatprep.subr.mxu0 0.0
      %1729 = vmatpush1.msra.mxu0 0.0
      %1730 = vmatprep.subr.mxu0 0.0
      %1731 = vmatpush1.msra.mxu0 0.0
      %1732 = vmatprep.subr.mxu0 0.0
      %1733 = vmatpush1.msra.mxu0 0.0
      %1734 = vmatprep.subr.mxu0 0.0
      %1735 = vmatpush1.msra.mxu0 0.0
      %1736 = vmatprep.subr.mxu0 0.0
      %1737 = vmatpush1.msra.mxu0 0.0
      %1738 = vmatprep.subr.mxu0 0.0
      %1739 = vmatpush1.msra.mxu0 0.0
      %1740 = vmatprep.subr.mxu0 0.0
      %1741 = vmatpush1.msra.mxu0 0.0
      %1742 = vmatprep.subr.mxu0 0.0
      %1743 = vmatpush1.msra.mxu0 0.0
      %1744 = vmatprep.subr.mxu0 0.0
      %1745 = vmatpush1.msra.mxu0 0.0
      %1746 = vmatprep.subr.mxu0 0.0
      %1747 = vmatpush1.msra.mxu0 0.0
      %1748 = vmatprep.subr.mxu0 0.0
      %1749 = vmatpush1.msra.mxu0 0.0
      %1750 = vmatprep.subr.mxu0 0.0
      %1751 = vmatpush1.msra.mxu0 0.0
      %1752 = vmatprep.subr.mxu0 0.0
      %1753 = vmatpush1.msra.mxu0 0.0
      %1754 = vmatprep.subr.mxu0 0.0
      %1755 = vmatpush1.msra.mxu0 0.0
      %1756 = vmatprep.subr.mxu0 0.0
      %1757 = vmatpush1.msra.mxu0 0.0
      %1758 = vmatprep.subr.mxu0 0.0
      %1759 = vmatpush1.msra.mxu0 0.0
      %1760 = vmatprep.subr.mxu0 0.0
      %1761 = vmatpush1.msra.mxu0 0.0
      %1762 = vmatprep.subr.mxu0 0.0
      %1763 = vmatpush1.msra.mxu0 0.0
      %1764 = vmatprep.subr.mxu0 0.0
      %1765 = vmatpush1.msra.mxu0 0.0
      %1766 = vmatprep.subr.mxu0 0.0
      %1767 = vmatpush1.msra.mxu0 0.0
      %1768 = vmatprep.subr.mxu0 0.0
      %1769 = vmatpush1.msra.mxu0 0.0
      %1770 = vmatprep.mubr.f32.mxu0 0.0
      %v1771 = vand.u32 %v1702, 4294901760
      %v1772 = vsub.f32 %v1702, %v1771
      %v1773 = vand.u32 %v1772, 4294901760
      %v1774 = vsub.f32 %v1772, %v1773
      %v1775 = vand.u32 %v1774, 4294901760
      %1776 = vmatmul.mubr.f32.gmra.mrb[0].mxu0 %v1775
      %v1777 = vpop.f32.mrb[0].mxu0
      %v1778 = vadd.f32 0.0, %v1777
      %v1779 = vpop.f32.mrb[0].mxu0
      %v1780 = vadd.f32 0.0, %v1779
      %1781 = vdwg.mxu0
      %v1782 = vand.u32 %v1699, 4294901760
      %v1783 = vsub.f32 %v1699, %v1782
      %v1784 = vand.u32 %v1783, 4294901760
      %v1785 = vsub.f32 %v1783, %v1784
      %v1786 = vand.u32 %v1785, 4294901760
      %1787 = vmatprep.subr.mxu0 %v1786
      %v1788 = vand.u32 %v1698, 4294901760
      %v1789 = vsub.f32 %v1698, %v1788
      %v1790 = vand.u32 %v1789, 4294901760
      %v1791 = vsub.f32 %v1789, %v1790
      %v1792 = vand.u32 %v1791, 4294901760
      %1793 = vmatpush1.msra.mxu0 %v1792
      %1794 = vmatprep.subr.mxu0 0.0
      %1795 = vmatpush1.msra.mxu0 0.0
      %1796 = vmatprep.subr.mxu0 0.0
      %1797 = vmatpush1.msra.mxu0 0.0
      %1798 = vmatprep.subr.mxu0 0.0
      %1799 = vmatpush1.msra.mxu0 0.0
      %1800 = vmatprep.subr.mxu0 0.0
      %1801 = vmatpush1.msra.mxu0 0.0
      %1802 = vmatprep.subr.mxu0 0.0
      %1803 = vmatpush1.msra.mxu0 0.0
      %1804 = vmatprep.subr.mxu0 0.0
      %1805 = vmatpush1.msra.mxu0 0.0
      %1806 = vmatprep.subr.mxu0 0.0
      %1807 = vmatpush1.msra.mxu0 0.0
      %1808 = vmatprep.subr.mxu0 0.0
      %1809 = vmatpush1.msra.mxu0 0.0
      %1810 = vmatprep.subr.mxu0 0.0
      %1811 = vmatpush1.msra.mxu0 0.0
      %1812 = vmatprep.subr.mxu0 0.0
      %1813 = vmatpush1.msra.mxu0 0.0
      %1814 = vmatprep.subr.mxu0 0.0
      %1815 = vmatpush1.msra.mxu0 0.0
      %1816 = vmatprep.subr.mxu0 0.0
      %1817 = vmatpush1.msra.mxu0 0.0
      %1818 = vmatprep.subr.mxu0 0.0
      %1819 = vmatpush1.msra.mxu0 0.0
      %1820 = vmatprep.subr.mxu0 0.0
      %1821 = vmatpush1.msra.mxu0 0.0
      %1822 = vmatprep.subr.mxu0 0.0
      %1823 = vmatpush1.msra.mxu0 0.0
      %1824 = vmatprep.subr.mxu0 0.0
      %1825 = vmatpush1.msra.mxu0 0.0
      %1826 = vmatprep.subr.mxu0 0.0
      %1827 = vmatpush1.msra.mxu0 0.0
      %1828 = vmatprep.subr.mxu0 0.0
      %1829 = vmatpush1.msra.mxu0 0.0
      %1830 = vmatprep.subr.mxu0 0.0
      %1831 = vmatpush1.msra.mxu0 0.0
      %1832 = vmatprep.subr.mxu0 0.0
      %1833 = vmatpush1.msra.mxu0 0.0
      %1834 = vmatprep.subr.mxu0 0.0
      %1835 = vmatpush1.msra.mxu0 0.0
      %1836 = vmatprep.subr.mxu0 0.0
      %1837 = vmatpush1.msra.mxu0 0.0
      %1838 = vmatprep.subr.mxu0 0.0
      %1839 = vmatpush1.msra.mxu0 0.0
      %1840 = vmatprep.subr.mxu0 0.0
      %1841 = vmatpush1.msra.mxu0 0.0
      %1842 = vmatprep.subr.mxu0 0.0
      %1843 = vmatpush1.msra.mxu0 0.0
      %1844 = vmatprep.subr.mxu0 0.0
      %1845 = vmatpush1.msra.mxu0 0.0
      %1846 = vmatprep.subr.mxu0 0.0
      %1847 = vmatpush1.msra.mxu0 0.0
      %1848 = vmatprep.subr.mxu0 0.0
      %1849 = vmatpush1.msra.mxu0 0.0
      %1850 = vmatprep.subr.mxu0 0.0
      %1851 = vmatpush1.msra.mxu0 0.0
      %1852 = vmatprep.subr.mxu0 0.0
      %1853 = vmatpush1.msra.mxu0 0.0
      %1854 = vmatprep.subr.mxu0 0.0
      %1855 = vmatpush1.msra.mxu0 0.0
      %1856 = vmatprep.mubr.f32.mxu0 0.0
      %v1857 = vand.u32 %v1702, 4294901760
      %1858 = vmatmul.mubr.f32.gmra.mrb[0].mxu0 %v1857
      %v1859 = vpop.f32.mrb[0].mxu0
      %v1860 = vadd.f32 %v1778, %v1859
      %v1861 = vpop.f32.mrb[0].mxu0
      %v1862 = vadd.f32 %v1780, %v1861
      %1863 = vdwg.mxu0
      %v1864 = vand.u32 %v1699, 4294901760
      %v1865 = vsub.f32 %v1699, %v1864
      %1866 = vmatprep.subr.mxu0 %v1865
      %v1867 = vand.u32 %v1698, 4294901760
      %v1868 = vsub.f32 %v1698, %v1867
      %1869 = vmatpush1.msra.mxu0 %v1868
      %1870 = vmatprep.subr.mxu0 0.0
      %1871 = vmatpush1.msra.mxu0 0.0
      %1872 = vmatprep.subr.mxu0 0.0
      %1873 = vmatpush1.msra.mxu0 0.0
      %1874 = vmatprep.subr.mxu0 0.0
      %1875 = vmatpush1.msra.mxu0 0.0
      %1876 = vmatprep.subr.mxu0 0.0
      %1877 = vmatpush1.msra.mxu0 0.0
      %1878 = vmatprep.subr.mxu0 0.0
      %1879 = vmatpush1.msra.mxu0 0.0
      %1880 = vmatprep.subr.mxu0 0.0
      %1881 = vmatpush1.msra.mxu0 0.0
      %1882 = vmatprep.subr.mxu0 0.0
      %1883 = vmatpush1.msra.mxu0 0.0
      %1884 = vmatprep.subr.mxu0 0.0
      %1885 = vmatpush1.msra.mxu0 0.0
      %1886 = vmatprep.subr.mxu0 0.0
      %1887 = vmatpush1.msra.mxu0 0.0
      %1888 = vmatprep.subr.mxu0 0.0
      %1889 = vmatpush1.msra.mxu0 0.0
      %1890 = vmatprep.subr.mxu0 0.0
      %1891 = vmatpush1.msra.mxu0 0.0
      %1892 = vmatprep.subr.mxu0 0.0
      %1893 = vmatpush1.msra.mxu0 0.0
      %1894 = vmatprep.subr.mxu0 0.0
      %1895 = vmatpush1.msra.mxu0 0.0
      %1896 = vmatprep.subr.mxu0 0.0
      %1897 = vmatpush1.msra.mxu0 0.0
      %1898 = vmatprep.subr.mxu0 0.0
      %1899 = vmatpush1.msra.mxu0 0.0
      %1900 = vmatprep.subr.mxu0 0.0
      %1901 = vmatpush1.msra.mxu0 0.0
      %1902 = vmatprep.subr.mxu0 0.0
      %1903 = vmatpush1.msra.mxu0 0.0
      %1904 = vmatprep.subr.mxu0 0.0
      %1905 = vmatpush1.msra.mxu0 0.0
      %1906 = vmatprep.subr.mxu0 0.0
      %1907 = vmatpush1.msra.mxu0 0.0
      %1908 = vmatprep.subr.mxu0 0.0
      %1909 = vmatpush1.msra.mxu0 0.0
      %1910 = vmatprep.subr.mxu0 0.0
      %1911 = vmatpush1.msra.mxu0 0.0
      %1912 = vmatprep.subr.mxu0 0.0
      %1913 = vmatpush1.msra.mxu0 0.0
      %1914 = vmatprep.subr.mxu0 0.0
      %1915 = vmatpush1.msra.mxu0 0.0
      %1916 = vmatprep.subr.mxu0 0.0
      %1917 = vmatpush1.msra.mxu0 0.0
      %1918 = vmatprep.subr.mxu0 0.0
      %1919 = vmatpush1.msra.mxu0 0.0
      %1920 = vmatprep.subr.mxu0 0.0
      %1921 = vmatpush1.msra.mxu0 0.0
      %1922 = vmatprep.subr.mxu0 0.0
      %1923 = vmatpush1.msra.mxu0 0.0
      %1924 = vmatprep.subr.mxu0 0.0
      %1925 = vmatpush1.msra.mxu0 0.0
      %1926 = vmatprep.subr.mxu0 0.0
      %1927 = vmatpush1.msra.mxu0 0.0
      %1928 = vmatprep.subr.mxu0 0.0
      %1929 = vmatpush1.msra.mxu0 0.0
      %1930 = vmatprep.subr.mxu0 0.0
      %1931 = vmatpush1.msra.mxu0 0.0
      %1932 = vmatprep.mubr.f32.mxu0 0.0
      %v1933 = vand.u32 %v1702, 4294901760
      %v1934 = vsub.f32 %v1702, %v1933
      %1935 = vmatmul.mubr.f32.gmra.mrb[0].mxu0 %v1934
      %v1936 = vpop.f32.mrb[0].mxu0
      %v1937 = vadd.f32 %v1860, %v1936
      %v1938 = vpop.f32.mrb[0].mxu0
      %v1939 = vadd.f32 %v1862, %v1938
      %1940 = vdwg.mxu0
      %v1941 = vand.u32 %v1699, 4294901760
      %1942 = vmatprep.subr.mxu0 %v1941
      %v1943 = vand.u32 %v1698, 4294901760
      %1944 = vmatpush1.msra.mxu0 %v1943
      %1945 = vmatprep.subr.mxu0 0.0
      %1946 = vmatpush1.msra.mxu0 0.0
      %1947 = vmatprep.subr.mxu0 0.0
      %1948 = vmatpush1.msra.mxu0 0.0
      %1949 = vmatprep.subr.mxu0 0.0
      %1950 = vmatpush1.msra.mxu0 0.0
      %1951 = vmatprep.subr.mxu0 0.0
      %1952 = vmatpush1.msra.mxu0 0.0
      %1953 = vmatprep.subr.mxu0 0.0
      %1954 = vmatpush1.msra.mxu0 0.0
      %1955 = vmatprep.subr.mxu0 0.0
      %1956 = vmatpush1.msra.mxu0 0.0
      %1957 = vmatprep.subr.mxu0 0.0
      %1958 = vmatpush1.msra.mxu0 0.0
      %1959 = vmatprep.subr.mxu0 0.0
      %1960 = vmatpush1.msra.mxu0 0.0
      %1961 = vmatprep.subr.mxu0 0.0
      %1962 = vmatpush1.msra.mxu0 0.0
      %1963 = vmatprep.subr.mxu0 0.0
      %1964 = vmatpush1.msra.mxu0 0.0
      %1965 = vmatprep.subr.mxu0 0.0
      %1966 = vmatpush1.msra.mxu0 0.0
      %1967 = vmatprep.subr.mxu0 0.0
      %1968 = vmatpush1.msra.mxu0 0.0
      %1969 = vmatprep.subr.mxu0 0.0
      %1970 = vmatpush1.msra.mxu0 0.0
      %1971 = vmatprep.subr.mxu0 0.0
      %1972 = vmatpush1.msra.mxu0 0.0
      %1973 = vmatprep.subr.mxu0 0.0
      %1974 = vmatpush1.msra.mxu0 0.0
      %1975 = vmatprep.subr.mxu0 0.0
      %1976 = vmatpush1.msra.mxu0 0.0
      %1977 = vmatprep.subr.mxu0 0.0
      %1978 = vmatpush1.msra.mxu0 0.0
      %1979 = vmatprep.subr.mxu0 0.0
      %1980 = vmatpush1.msra.mxu0 0.0
      %1981 = vmatprep.subr.mxu0 0.0
      %1982 = vmatpush1.msra.mxu0 0.0
      %1983 = vmatprep.subr.mxu0 0.0
      %1984 = vmatpush1.msra.mxu0 0.0
      %1985 = vmatprep.subr.mxu0 0.0
      %1986 = vmatpush1.msra.mxu0 0.0
      %1987 = vmatprep.subr.mxu0 0.0
      %1988 = vmatpush1.msra.mxu0 0.0
      %1989 = vmatprep.subr.mxu0 0.0
      %1990 = vmatpush1.msra.mxu0 0.0
      %1991 = vmatprep.subr.mxu0 0.0
      %1992 = vmatpush1.msra.mxu0 0.0
      %1993 = vmatprep.subr.mxu0 0.0
      %1994 = vmatpush1.msra.mxu0 0.0
      %1995 = vmatprep.subr.mxu0 0.0
      %1996 = vmatpush1.msra.mxu0 0.0
      %1997 = vmatprep.subr.mxu0 0.0
      %1998 = vmatpush1.msra.mxu0 0.0
      %1999 = vmatprep.subr.mxu0 0.0
      %2000 = vmatpush1.msra.mxu0 0.0
      %2001 = vmatprep.subr.mxu0 0.0
      %2002 = vmatpush1.msra.mxu0 0.0
      %2003 = vmatprep.subr.mxu0 0.0
      %2004 = vmatpush1.msra.mxu0 0.0
      %2005 = vmatprep.subr.mxu0 0.0
      %2006 = vmatpush1.msra.mxu0 0.0
      %2007 = vmatprep.mubr.f32.mxu0 0.0
      %v2008 = vand.u32 %v1702, 4294901760
      %v2009 = vsub.f32 %v1702, %v2008
      %v2010 = vand.u32 %v2009, 4294901760
      %2011 = vmatmul.mubr.f32.gmra.mrb[0].mxu0 %v2010
      %v2012 = vpop.f32.mrb[0].mxu0
      %v2013 = vadd.f32 %v1937, %v2012
      %v2014 = vpop.f32.mrb[0].mxu0
      %v2015 = vadd.f32 %v1939, %v2014
      %2016 = vdwg.mxu0
      %v2017 = vand.u32 %v1699, 4294901760
      %v2018 = vsub.f32 %v1699, %v2017
      %v2019 = vand.u32 %v2018, 4294901760
      %2020 = vmatprep.subr.mxu0 %v2019
      %v2021 = vand.u32 %v1698, 4294901760
      %v2022 = vsub.f32 %v1698, %v2021
      %v2023 = vand.u32 %v2022, 4294901760
      %2024 = vmatpush1.msra.mxu0 %v2023
      %2025 = vmatprep.subr.mxu0 0.0
      %2026 = vmatpush1.msra.mxu0 0.0
      %2027 = vmatprep.subr.mxu0 0.0
      %2028 = vmatpush1.msra.mxu0 0.0
      %2029 = vmatprep.subr.mxu0 0.0
      %2030 = vmatpush1.msra.mxu0 0.0
      %2031 = vmatprep.subr.mxu0 0.0
      %2032 = vmatpush1.msra.mxu0 0.0
      %2033 = vmatprep.subr.mxu0 0.0
      %2034 = vmatpush1.msra.mxu0 0.0
      %2035 = vmatprep.subr.mxu0 0.0
      %2036 = vmatpush1.msra.mxu0 0.0
      %2037 = vmatprep.subr.mxu0 0.0
      %2038 = vmatpush1.msra.mxu0 0.0
      %2039 = vmatprep.subr.mxu0 0.0
      %2040 = vmatpush1.msra.mxu0 0.0
      %2041 = vmatprep.subr.mxu0 0.0
      %2042 = vmatpush1.msra.mxu0 0.0
      %2043 = vmatprep.subr.mxu0 0.0
      %2044 = vmatpush1.msra.mxu0 0.0
      %2045 = vmatprep.subr.mxu0 0.0
      %2046 = vmatpush1.msra.mxu0 0.0
      %2047 = vmatprep.subr.mxu0 0.0
      %2048 = vmatpush1.msra.mxu0 0.0
      %2049 = vmatprep.subr.mxu0 0.0
      %2050 = vmatpush1.msra.mxu0 0.0
      %2051 = vmatprep.subr.mxu0 0.0
      %2052 = vmatpush1.msra.mxu0 0.0
      %2053 = vmatprep.subr.mxu0 0.0
      %2054 = vmatpush1.msra.mxu0 0.0
      %2055 = vmatprep.subr.mxu0 0.0
      %2056 = vmatpush1.msra.mxu0 0.0
      %2057 = vmatprep.subr.mxu0 0.0
      %2058 = vmatpush1.msra.mxu0 0.0
      %2059 = vmatprep.subr.mxu0 0.0
      %2060 = vmatpush1.msra.mxu0 0.0
      %2061 = vmatprep.subr.mxu0 0.0
      %2062 = vmatpush1.msra.mxu0 0.0
      %2063 = vmatprep.subr.mxu0 0.0
      %2064 = vmatpush1.msra.mxu0 0.0
      %2065 = vmatprep.subr.mxu0 0.0
      %2066 = vmatpush1.msra.mxu0 0.0
      %2067 = vmatprep.subr.mxu0 0.0
      %2068 = vmatpush1.msra.mxu0 0.0
      %2069 = vmatprep.subr.mxu0 0.0
      %2070 = vmatpush1.msra.mxu0 0.0
      %2071 = vmatprep.subr.mxu0 0.0
      %2072 = vmatpush1.msra.mxu0 0.0
      %2073 = vmatprep.subr.mxu0 0.0
      %2074 = vmatpush1.msra.mxu0 0.0
      %2075 = vmatprep.subr.mxu0 0.0
      %2076 = vmatpush1.msra.mxu0 0.0
      %2077 = vmatprep.subr.mxu0 0.0
      %2078 = vmatpush1.msra.mxu0 0.0
      %2079 = vmatprep.subr.mxu0 0.0
      %2080 = vmatpush1.msra.mxu0 0.0
      %2081 = vmatprep.subr.mxu0 0.0
      %2082 = vmatpush1.msra.mxu0 0.0
      %2083 = vmatprep.subr.mxu0 0.0
      %2084 = vmatpush1.msra.mxu0 0.0
      %2085 = vmatprep.subr.mxu0 0.0
      %2086 = vmatpush1.msra.mxu0 0.0
      %2087 = vmatprep.mubr.f32.mxu0 0.0
      %v2088 = vand.u32 %v1702, 4294901760
      %2089 = vmatmul.mubr.f32.gmra.mrb[0].mxu0 %v2088
      %v2090 = vpop.f32.mrb[0].mxu0
      %v2091 = vadd.f32 %v2013, %v2090
      %v2092 = vpop.f32.mrb[0].mxu0
      %v2093 = vadd.f32 %v2015, %v2092
      %2094 = vdwg.mxu0
      %v2095 = vand.u32 %v1699, 4294901760
      %2096 = vmatprep.subr.mxu0 %v2095
      %v2097 = vand.u32 %v1698, 4294901760
      %2098 = vmatpush1.msra.mxu0 %v2097
      %2099 = vmatprep.subr.mxu0 0.0
      %2100 = vmatpush1.msra.mxu0 0.0
      %2101 = vmatprep.subr.mxu0 0.0
      %2102 = vmatpush1.msra.mxu0 0.0
      %2103 = vmatprep.subr.mxu0 0.0
      %2104 = vmatpush1.msra.mxu0 0.0
      %2105 = vmatprep.subr.mxu0 0.0
      %2106 = vmatpush1.msra.mxu0 0.0
      %2107 = vmatprep.subr.mxu0 0.0
      %2108 = vmatpush1.msra.mxu0 0.0
      %2109 = vmatprep.subr.mxu0 0.0
      %2110 = vmatpush1.msra.mxu0 0.0
      %2111 = vmatprep.subr.mxu0 0.0
      %2112 = vmatpush1.msra.mxu0 0.0
      %2113 = vmatprep.subr.mxu0 0.0
      %2114 = vmatpush1.msra.mxu0 0.0
      %2115 = vmatprep.subr.mxu0 0.0
      %2116 = vmatpush1.msra.mxu0 0.0
      %2117 = vmatprep.subr.mxu0 0.0
      %2118 = vmatpush1.msra.mxu0 0.0
      %2119 = vmatprep.subr.mxu0 0.0
      %2120 = vmatpush1.msra.mxu0 0.0
      %2121 = vmatprep.subr.mxu0 0.0
      %2122 = vmatpush1.msra.mxu0 0.0
      %2123 = vmatprep.subr.mxu0 0.0
      %2124 = vmatpush1.msra.mxu0 0.0
      %2125 = vmatprep.subr.mxu0 0.0
      %2126 = vmatpush1.msra.mxu0 0.0
      %2127 = vmatprep.subr.mxu0 0.0
      %2128 = vmatpush1.msra.mxu0 0.0
      %2129 = vmatprep.subr.mxu0 0.0
      %2130 = vmatpush1.msra.mxu0 0.0
      %2131 = vmatprep.subr.mxu0 0.0
      %2132 = vmatpush1.msra.mxu0 0.0
      %2133 = vmatprep.subr.mxu0 0.0
      %2134 = vmatpush1.msra.mxu0 0.0
      %2135 = vmatprep.subr.mxu0 0.0
      %2136 = vmatpush1.msra.mxu0 0.0
      %2137 = vmatprep.subr.mxu0 0.0
      %2138 = vmatpush1.msra.mxu0 0.0
      %2139 = vmatprep.subr.mxu0 0.0
      %2140 = vmatpush1.msra.mxu0 0.0
      %2141 = vmatprep.subr.mxu0 0.0
      %2142 = vmatpush1.msra.mxu0 0.0
      %2143 = vmatprep.subr.mxu0 0.0
      %2144 = vmatpush1.msra.mxu0 0.0
      %2145 = vmatprep.subr.mxu0 0.0
      %2146 = vmatpush1.msra.mxu0 0.0
      %2147 = vmatprep.subr.mxu0 0.0
      %2148 = vmatpush1.msra.mxu0 0.0
      %2149 = vmatprep.subr.mxu0 0.0
      %2150 = vmatpush1.msra.mxu0 0.0
      %2151 = vmatprep.subr.mxu0 0.0
      %2152 = vmatpush1.msra.mxu0 0.0
      %2153 = vmatprep.subr.mxu0 0.0
      %2154 = vmatpush1.msra.mxu0 0.0
      %2155 = vmatprep.subr.mxu0 0.0
      %2156 = vmatpush1.msra.mxu0 0.0
      %2157 = vmatprep.subr.mxu0 0.0
      %2158 = vmatpush1.msra.mxu0 0.0
      %2159 = vmatprep.subr.mxu0 0.0
      %2160 = vmatpush1.msra.mxu0 0.0
      %2161 = vmatprep.mubr.f32.mxu0 0.0
      %v2162 = vand.u32 %v1702, 4294901760
      %2163 = vmatmul.mubr.f32.gmra.mrb[0].mxu0 %v2162
      %v2164 = vpop.f32.mrb[0].mxu0
      %v2165 = vadd.f32 %v2091, %v2164
      %v2166 = vpop.f32.mrb[0].mxu0
      %v2167 = vadd.f32 %v2093, %v2166
      %2168 = vdwg.mxu0
      %2169 = vrot.lane.b32.xlu0 %v217, 104
      %v2170 = vpop.permute.xlu0 %2169
      %2174 = vrot.lane.b32.xlu0 %v1686, 112
      %v2175 = vpop.permute.xlu0 %2174
      %2176 = vrot.lane.b32.xlu0 %v1687, 112
      %v2177 = vpop.permute.xlu0 %2176
      %2178 = vrot.lane.b32.xlu0 %v1688, 112
      %v2179 = vpop.permute.xlu0 %2178
      %vm2180 = vcmask 916480
      %v2181 = vsel %vm2180, %v2175, %v2177
      %v2182 = vsel %vm2180, %v2177, %v2179
      %v2185 = vsel %vm236, %v2170, 0
      %v2187 = vand.u32 %v2182, 4294901760
      %2188 = vmatprep.subr.mxu0 %v2187
      %v2189 = vand.u32 %v2181, 4294901760
      %2190 = vmatpush1.msra.mxu0 %v2189
      %2191 = vmatprep.subr.mxu0 0.0
      %2192 = vmatpush1.msra.mxu0 0.0
      %2193 = vmatprep.subr.mxu0 0.0
      %2194 = vmatpush1.msra.mxu0 0.0
      %2195 = vmatprep.subr.mxu0 0.0
      %2196 = vmatpush1.msra.mxu0 0.0
      %2197 = vmatprep.subr.mxu0 0.0
      %2198 = vmatpush1.msra.mxu0 0.0
      %2199 = vmatprep.subr.mxu0 0.0
      %2200 = vmatpush1.msra.mxu0 0.0
      %2201 = vmatprep.subr.mxu0 0.0
      %2202 = vmatpush1.msra.mxu0 0.0
      %2203 = vmatprep.subr.mxu0 0.0
      %2204 = vmatpush1.msra.mxu0 0.0
      %2205 = vmatprep.subr.mxu0 0.0
      %2206 = vmatpush1.msra.mxu0 0.0
      %2207 = vmatprep.subr.mxu0 0.0
      %2208 = vmatpush1.msra.mxu0 0.0
      %2209 = vmatprep.subr.mxu0 0.0
      %2210 = vmatpush1.msra.mxu0 0.0
      %2211 = vmatprep.subr.mxu0 0.0
      %2212 = vmatpush1.msra.mxu0 0.0
      %2213 = vmatprep.subr.mxu0 0.0
      %2214 = vmatpush1.msra.mxu0 0.0
      %2215 = vmatprep.subr.mxu0 0.0
      %2216 = vmatpush1.msra.mxu0 0.0
      %2217 = vmatprep.subr.mxu0 0.0
      %2218 = vmatpush1.msra.mxu0 0.0
      %2219 = vmatprep.subr.mxu0 0.0
      %2220 = vmatpush1.msra.mxu0 0.0
      %2221 = vmatprep.subr.mxu0 0.0
      %2222 = vmatpush1.msra.mxu0 0.0
      %2223 = vmatprep.subr.mxu0 0.0
      %2224 = vmatpush1.msra.mxu0 0.0
      %2225 = vmatprep.subr.mxu0 0.0
      %2226 = vmatpush1.msra.mxu0 0.0
      %2227 = vmatprep.subr.mxu0 0.0
      %2228 = vmatpush1.msra.mxu0 0.0
      %2229 = vmatprep.subr.mxu0 0.0
      %2230 = vmatpush1.msra.mxu0 0.0
      %2231 = vmatprep.subr.mxu0 0.0
      %2232 = vmatpush1.msra.mxu0 0.0
      %2233 = vmatprep.subr.mxu0 0.0
      %2234 = vmatpush1.msra.mxu0 0.0
      %2235 = vmatprep.subr.mxu0 0.0
      %2236 = vmatpush1.msra.mxu0 0.0
      %2237 = vmatprep.subr.mxu0 0.0
      %2238 = vmatpush1.msra.mxu0 0.0
      %2239 = vmatprep.subr.mxu0 0.0
      %2240 = vmatpush1.msra.mxu0 0.0
      %2241 = vmatprep.subr.mxu0 0.0
      %2242 = vmatpush1.msra.mxu0 0.0
      %2243 = vmatprep.subr.mxu0 0.0
      %2244 = vmatpush1.msra.mxu0 0.0
      %2245 = vmatprep.subr.mxu0 0.0
      %2246 = vmatpush1.msra.mxu0 0.0
      %2247 = vmatprep.subr.mxu0 0.0
      %2248 = vmatpush1.msra.mxu0 0.0
      %2249 = vmatprep.subr.mxu0 0.0
      %2250 = vmatpush1.msra.mxu0 0.0
      %2251 = vmatprep.subr.mxu0 0.0
      %2252 = vmatpush1.msra.mxu0 0.0
      %2253 = vmatprep.mubr.f32.mxu0 0.0
      %v2254 = vand.u32 %v2185, 4294901760
      %v2255 = vsub.f32 %v2185, %v2254
      %v2256 = vand.u32 %v2255, 4294901760
      %v2257 = vsub.f32 %v2255, %v2256
      %v2258 = vand.u32 %v2257, 4294901760
      %2259 = vmatmul.mubr.f32.gmra.mrb[0].mxu0 %v2258
      %v2260 = vpop.f32.mrb[0].mxu0
      %v2261 = vadd.f32 %v2165, %v2260
      %v2262 = vpop.f32.mrb[0].mxu0
      %v2263 = vadd.f32 %v2167, %v2262
      %2264 = vdwg.mxu0
      %v2265 = vand.u32 %v2182, 4294901760
      %v2266 = vsub.f32 %v2182, %v2265
      %v2267 = vand.u32 %v2266, 4294901760
      %v2268 = vsub.f32 %v2266, %v2267
      %v2269 = vand.u32 %v2268, 4294901760
      %2270 = vmatprep.subr.mxu0 %v2269
      %v2271 = vand.u32 %v2181, 4294901760
      %v2272 = vsub.f32 %v2181, %v2271
      %v2273 = vand.u32 %v2272, 4294901760
      %v2274 = vsub.f32 %v2272, %v2273
      %v2275 = vand.u32 %v2274, 4294901760
      %2276 = vmatpush1.msra.mxu0 %v2275
      %2277 = vmatprep.subr.mxu0 0.0
      %2278 = vmatpush1.msra.mxu0 0.0
      %2279 = vmatprep.subr.mxu0 0.0
      %2280 = vmatpush1.msra.mxu0 0.0
      %2281 = vmatprep.subr.mxu0 0.0
      %2282 = vmatpush1.msra.mxu0 0.0
      %2283 = vmatprep.subr.mxu0 0.0
      %2284 = vmatpush1.msra.mxu0 0.0
      %2285 = vmatprep.subr.mxu0 0.0
      %2286 = vmatpush1.msra.mxu0 0.0
      %2287 = vmatprep.subr.mxu0 0.0
      %2288 = vmatpush1.msra.mxu0 0.0
      %2289 = vmatprep.subr.mxu0 0.0
      %2290 = vmatpush1.msra.mxu0 0.0
      %2291 = vmatprep.subr.mxu0 0.0
      %2292 = vmatpush1.msra.mxu0 0.0
      %2293 = vmatprep.subr.mxu0 0.0
      %2294 = vmatpush1.msra.mxu0 0.0
      %2295 = vmatprep.subr.mxu0 0.0
      %2296 = vmatpush1.msra.mxu0 0.0
      %2297 = vmatprep.subr.mxu0 0.0
      %2298 = vmatpush1.msra.mxu0 0.0
      %2299 = vmatprep.subr.mxu0 0.0
      %2300 = vmatpush1.msra.mxu0 0.0
      %2301 = vmatprep.subr.mxu0 0.0
      %2302 = vmatpush1.msra.mxu0 0.0
      %2303 = vmatprep.subr.mxu0 0.0
      %2304 = vmatpush1.msra.mxu0 0.0
      %2305 = vmatprep.subr.mxu0 0.0
      %2306 = vmatpush1.msra.mxu0 0.0
      %2307 = vmatprep.subr.mxu0 0.0
      %2308 = vmatpush1.msra.mxu0 0.0
      %2309 = vmatprep.subr.mxu0 0.0
      %2310 = vmatpush1.msra.mxu0 0.0
      %2311 = vmatprep.subr.mxu0 0.0
      %2312 = vmatpush1.msra.mxu0 0.0
      %2313 = vmatprep.subr.mxu0 0.0
      %2314 = vmatpush1.msra.mxu0 0.0
      %2315 = vmatprep.subr.mxu0 0.0
      %2316 = vmatpush1.msra.mxu0 0.0
      %2317 = vmatprep.subr.mxu0 0.0
      %2318 = vmatpush1.msra.mxu0 0.0
      %2319 = vmatprep.subr.mxu0 0.0
      %2320 = vmatpush1.msra.mxu0 0.0
      %2321 = vmatprep.subr.mxu0 0.0
      %2322 = vmatpush1.msra.mxu0 0.0
      %2323 = vmatprep.subr.mxu0 0.0
      %2324 = vmatpush1.msra.mxu0 0.0
      %2325 = vmatprep.subr.mxu0 0.0
      %2326 = vmatpush1.msra.mxu0 0.0
      %2327 = vmatprep.subr.mxu0 0.0
      %2328 = vmatpush1.msra.mxu0 0.0
      %2329 = vmatprep.subr.mxu0 0.0
      %2330 = vmatpush1.msra.mxu0 0.0
      %2331 = vmatprep.subr.mxu0 0.0
      %2332 = vmatpush1.msra.mxu0 0.0
      %2333 = vmatprep.subr.mxu0 0.0
      %2334 = vmatpush1.msra.mxu0 0.0
      %2335 = vmatprep.subr.mxu0 0.0
      %2336 = vmatpush1.msra.mxu0 0.0
      %2337 = vmatprep.subr.mxu0 0.0
      %2338 = vmatpush1.msra.mxu0 0.0
      %2339 = vmatprep.mubr.f32.mxu0 0.0
      %v2340 = vand.u32 %v2185, 4294901760
      %2341 = vmatmul.mubr.f32.gmra.mrb[0].mxu0 %v2340
      %v2342 = vpop.f32.mrb[0].mxu0
      %v2343 = vadd.f32 %v2261, %v2342
      %v2344 = vpop.f32.mrb[0].mxu0
      %v2345 = vadd.f32 %v2263, %v2344
      %2346 = vdwg.mxu0
      %v2347 = vand.u32 %v2182, 4294901760
      %v2348 = vsub.f32 %v2182, %v2347
      %2349 = vmatprep.subr.mxu0 %v2348
      %v2350 = vand.u32 %v2181, 4294901760
      %v2351 = vsub.f32 %v2181, %v2350
      %2352 = vmatpush1.msra.mxu0 %v2351
      %2353 = vmatprep.subr.mxu0 0.0
      %2354 = vmatpush1.msra.mxu0 0.0
      %2355 = vmatprep.subr.mxu0 0.0
      %2356 = vmatpush1.msra.mxu0 0.0
      %2357 = vmatprep.subr.mxu0 0.0
      %2358 = vmatpush1.msra.mxu0 0.0
      %2359 = vmatprep.subr.mxu0 0.0
      %2360 = vmatpush1.msra.mxu0 0.0
      %2361 = vmatprep.subr.mxu0 0.0
      %2362 = vmatpush1.msra.mxu0 0.0
      %2363 = vmatprep.subr.mxu0 0.0
      %2364 = vmatpush1.msra.mxu0 0.0
      %2365 = vmatprep.subr.mxu0 0.0
      %2366 = vmatpush1.msra.mxu0 0.0
      %2367 = vmatprep.subr.mxu0 0.0
      %2368 = vmatpush1.msra.mxu0 0.0
      %2369 = vmatprep.subr.mxu0 0.0
      %2370 = vmatpush1.msra.mxu0 0.0
      %2371 = vmatprep.subr.mxu0 0.0
      %2372 = vmatpush1.msra.mxu0 0.0
      %2373 = vmatprep.subr.mxu0 0.0
      %2374 = vmatpush1.msra.mxu0 0.0
      %2375 = vmatprep.subr.mxu0 0.0
      %2376 = vmatpush1.msra.mxu0 0.0
      %2377 = vmatprep.subr.mxu0 0.0
      %2378 = vmatpush1.msra.mxu0 0.0
      %2379 = vmatprep.subr.mxu0 0.0
      %2380 = vmatpush1.msra.mxu0 0.0
      %2381 = vmatprep.subr.mxu0 0.0
      %2382 = vmatpush1.msra.mxu0 0.0
      %2383 = vmatprep.subr.mxu0 0.0
      %2384 = vmatpush1.msra.mxu0 0.0
      %2385 = vmatprep.subr.mxu0 0.0
      %2386 = vmatpush1.msra.mxu0 0.0
      %2387 = vmatprep.subr.mxu0 0.0
      %2388 = vmatpush1.msra.mxu0 0.0
      %2389 = vmatprep.subr.mxu0 0.0
      %2390 = vmatpush1.msra.mxu0 0.0
      %2391 = vmatprep.subr.mxu0 0.0
      %2392 = vmatpush1.msra.mxu0 0.0
      %2393 = vmatprep.subr.mxu0 0.0
      %2394 = vmatpush1.msra.mxu0 0.0
      %2395 = vmatprep.subr.mxu0 0.0
      %2396 = vmatpush1.msra.mxu0 0.0
      %2397 = vmatprep.subr.mxu0 0.0
      %2398 = vmatpush1.msra.mxu0 0.0
      %2399 = vmatprep.subr.mxu0 0.0
      %2400 = vmatpush1.msra.mxu0 0.0
      %2401 = vmatprep.subr.mxu0 0.0
      %2402 = vmatpush1.msra.mxu0 0.0
      %2403 = vmatprep.subr.mxu0 0.0
      %2404 = vmatpush1.msra.mxu0 0.0
      %2405 = vmatprep.subr.mxu0 0.0
      %2406 = vmatpush1.msra.mxu0 0.0
      %2407 = vmatprep.subr.mxu0 0.0
      %2408 = vmatpush1.msra.mxu0 0.0
      %2409 = vmatprep.subr.mxu0 0.0
      %2410 = vmatpush1.msra.mxu0 0.0
      %2411 = vmatprep.subr.mxu0 0.0
      %2412 = vmatpush1.msra.mxu0 0.0
      %2413 = vmatprep.subr.mxu0 0.0
      %2414 = vmatpush1.msra.mxu0 0.0
      %2415 = vmatprep.mubr.f32.mxu0 0.0
      %v2416 = vand.u32 %v2185, 4294901760
      %v2417 = vsub.f32 %v2185, %v2416
      %2418 = vmatmul.mubr.f32.gmra.mrb[0].mxu0 %v2417
      %v2419 = vpop.f32.mrb[0].mxu0
      %v2420 = vadd.f32 %v2343, %v2419
      %v2421 = vpop.f32.mrb[0].mxu0
      %v2422 = vadd.f32 %v2345, %v2421
      %2423 = vdwg.mxu0
      %v2424 = vand.u32 %v2182, 4294901760
      %2425 = vmatprep.subr.mxu0 %v2424
      %v2426 = vand.u32 %v2181, 4294901760
      %2427 = vmatpush1.msra.mxu0 %v2426
      %2428 = vmatprep.subr.mxu0 0.0
      %2429 = vmatpush1.msra.mxu0 0.0
      %2430 = vmatprep.subr.mxu0 0.0
      %2431 = vmatpush1.msra.mxu0 0.0
      %2432 = vmatprep.subr.mxu0 0.0
      %2433 = vmatpush1.msra.mxu0 0.0
      %2434 = vmatprep.subr.mxu0 0.0
      %2435 = vmatpush1.msra.mxu0 0.0
      %2436 = vmatprep.subr.mxu0 0.0
      %2437 = vmatpush1.msra.mxu0 0.0
      %2438 = vmatprep.subr.mxu0 0.0
      %2439 = vmatpush1.msra.mxu0 0.0
      %2440 = vmatprep.subr.mxu0 0.0
      %2441 = vmatpush1.msra.mxu0 0.0
      %2442 = vmatprep.subr.mxu0 0.0
      %2443 = vmatpush1.msra.mxu0 0.0
      %2444 = vmatprep.subr.mxu0 0.0
      %2445 = vmatpush1.msra.mxu0 0.0
      %2446 = vmatprep.subr.mxu0 0.0
      %2447 = vmatpush1.msra.mxu0 0.0
      %2448 = vmatprep.subr.mxu0 0.0
      %2449 = vmatpush1.msra.mxu0 0.0
      %2450 = vmatprep.subr.mxu0 0.0
      %2451 = vmatpush1.msra.mxu0 0.0
      %2452 = vmatprep.subr.mxu0 0.0
      %2453 = vmatpush1.msra.mxu0 0.0
      %2454 = vmatprep.subr.mxu0 0.0
      %2455 = vmatpush1.msra.mxu0 0.0
      %2456 = vmatprep.subr.mxu0 0.0
      %2457 = vmatpush1.msra.mxu0 0.0
      %2458 = vmatprep.subr.mxu0 0.0
      %2459 = vmatpush1.msra.mxu0 0.0
      %2460 = vmatprep.subr.mxu0 0.0
      %2461 = vmatpush1.msra.mxu0 0.0
      %2462 = vmatprep.subr.mxu0 0.0
      %2463 = vmatpush1.msra.mxu0 0.0
      %2464 = vmatprep.subr.mxu0 0.0
      %2465 = vmatpush1.msra.mxu0 0.0
      %2466 = vmatprep.subr.mxu0 0.0
      %2467 = vmatpush1.msra.mxu0 0.0
      %2468 = vmatprep.subr.mxu0 0.0
      %2469 = vmatpush1.msra.mxu0 0.0
      %2470 = vmatprep.subr.mxu0 0.0
      %2471 = vmatpush1.msra.mxu0 0.0
      %2472 = vmatprep.subr.mxu0 0.0
      %2473 = vmatpush1.msra.mxu0 0.0
      %2474 = vmatprep.subr.mxu0 0.0
      %2475 = vmatpush1.msra.mxu0 0.0
      %2476 = vmatprep.subr.mxu0 0.0
      %2477 = vmatpush1.msra.mxu0 0.0
      %2478 = vmatprep.subr.mxu0 0.0
      %2479 = vmatpush1.msra.mxu0 0.0
      %2480 = vmatprep.subr.mxu0 0.0
      %2481 = vmatpush1.msra.mxu0 0.0
      %2482 = vmatprep.subr.mxu0 0.0
      %2483 = vmatpush1.msra.mxu0 0.0
      %2484 = vmatprep.subr.mxu0 0.0
      %2485 = vmatpush1.msra.mxu0 0.0
      %2486 = vmatprep.subr.mxu0 0.0
      %2487 = vmatpush1.msra.mxu0 0.0
      %2488 = vmatprep.subr.mxu0 0.0
      %2489 = vmatpush1.msra.mxu0 0.0
      %2490 = vmatprep.mubr.f32.mxu0 0.0
      %v2491 = vand.u32 %v2185, 4294901760
      %v2492 = vsub.f32 %v2185, %v2491
      %v2493 = vand.u32 %v2492, 4294901760
      %2494 = vmatmul.mubr.f32.gmra.mrb[0].mxu0 %v2493
      %v2495 = vpop.f32.mrb[0].mxu0
      %v2496 = vadd.f32 %v2420, %v2495
      %v2497 = vpop.f32.mrb[0].mxu0
      %v2498 = vadd.f32 %v2422, %v2497
      %2499 = vdwg.mxu0
      %v2500 = vand.u32 %v2182, 4294901760
      %v2501 = vsub.f32 %v2182, %v2500
      %v2502 = vand.u32 %v2501, 4294901760
      %2503 = vmatprep.subr.mxu0 %v2502
      %v2504 = vand.u32 %v2181, 4294901760
      %v2505 = vsub.f32 %v2181, %v2504
      %v2506 = vand.u32 %v2505, 4294901760
      %2507 = vmatpush1.msra.mxu0 %v2506
      %2508 = vmatprep.subr.mxu0 0.0
      %2509 = vmatpush1.msra.mxu0 0.0
      %2510 = vmatprep.subr.mxu0 0.0
      %2511 = vmatpush1.msra.mxu0 0.0
      %2512 = vmatprep.subr.mxu0 0.0
      %2513 = vmatpush1.msra.mxu0 0.0
      %2514 = vmatprep.subr.mxu0 0.0
      %2515 = vmatpush1.msra.mxu0 0.0
      %2516 = vmatprep.subr.mxu0 0.0
      %2517 = vmatpush1.msra.mxu0 0.0
      %2518 = vmatprep.subr.mxu0 0.0
      %2519 = vmatpush1.msra.mxu0 0.0
      %2520 = vmatprep.subr.mxu0 0.0
      %2521 = vmatpush1.msra.mxu0 0.0
      %2522 = vmatprep.subr.mxu0 0.0
      %2523 = vmatpush1.msra.mxu0 0.0
      %2524 = vmatprep.subr.mxu0 0.0
      %2525 = vmatpush1.msra.mxu0 0.0
      %2526 = vmatprep.subr.mxu0 0.0
      %2527 = vmatpush1.msra.mxu0 0.0
      %2528 = vmatprep.subr.mxu0 0.0
      %2529 = vmatpush1.msra.mxu0 0.0
      %2530 = vmatprep.subr.mxu0 0.0
      %2531 = vmatpush1.msra.mxu0 0.0
      %2532 = vmatprep.subr.mxu0 0.0
      %2533 = vmatpush1.msra.mxu0 0.0
      %2534 = vmatprep.subr.mxu0 0.0
      %2535 = vmatpush1.msra.mxu0 0.0
      %2536 = vmatprep.subr.mxu0 0.0
      %2537 = vmatpush1.msra.mxu0 0.0
      %2538 = vmatprep.subr.mxu0 0.0
      %2539 = vmatpush1.msra.mxu0 0.0
      %2540 = vmatprep.subr.mxu0 0.0
      %2541 = vmatpush1.msra.mxu0 0.0
      %2542 = vmatprep.subr.mxu0 0.0
      %2543 = vmatpush1.msra.mxu0 0.0
      %2544 = vmatprep.subr.mxu0 0.0
      %2545 = vmatpush1.msra.mxu0 0.0
      %2546 = vmatprep.subr.mxu0 0.0
      %2547 = vmatpush1.msra.mxu0 0.0
      %2548 = vmatprep.subr.mxu0 0.0
      %2549 = vmatpush1.msra.mxu0 0.0
      %2550 = vmatprep.subr.mxu0 0.0
      %2551 = vmatpush1.msra.mxu0 0.0
      %2552 = vmatprep.subr.mxu0 0.0
      %2553 = vmatpush1.msra.mxu0 0.0
      %2554 = vmatprep.subr.mxu0 0.0
      %2555 = vmatpush1.msra.mxu0 0.0
      %2556 = vmatprep.subr.mxu0 0.0
      %2557 = vmatpush1.msra.mxu0 0.0
      %2558 = vmatprep.subr.mxu0 0.0
      %2559 = vmatpush1.msra.mxu0 0.0
      %2560 = vmatprep.subr.mxu0 0.0
      %2561 = vmatpush1.msra.mxu0 0.0
      %2562 = vmatprep.subr.mxu0 0.0
      %2563 = vmatpush1.msra.mxu0 0.0
      %2564 = vmatprep.subr.mxu0 0.0
      %2565 = vmatpush1.msra.mxu0 0.0
      %2566 = vmatprep.subr.mxu0 0.0
      %2567 = vmatpush1.msra.mxu0 0.0
      %2568 = vmatprep.subr.mxu0 0.0
      %2569 = vmatpush1.msra.mxu0 0.0
      %2570 = vmatprep.mubr.f32.mxu0 0.0
      %v2571 = vand.u32 %v2185, 4294901760
      %2572 = vmatmul.mubr.f32.gmra.mrb[0].mxu0 %v2571
      %v2573 = vpop.f32.mrb[0].mxu0
      %v2574 = vadd.f32 %v2496, %v2573
      %v2575 = vpop.f32.mrb[0].mxu0
      %v2576 = vadd.f32 %v2498, %v2575
      %2577 = vdwg.mxu0
      %v2578 = vand.u32 %v2182, 4294901760
      %2579 = vmatprep.subr.mxu0 %v2578
      %v2580 = vand.u32 %v2181, 4294901760
      %2581 = vmatpush1.msra.mxu0 %v2580
      %2582 = vmatprep.subr.mxu0 0.0
      %2583 = vmatpush1.msra.mxu0 0.0
      %2584 = vmatprep.subr.mxu0 0.0
      %2585 = vmatpush1.msra.mxu0 0.0
      %2586 = vmatprep.subr.mxu0 0.0
      %2587 = vmatpush1.msra.mxu0 0.0
      %2588 = vmatprep.subr.mxu0 0.0
      %2589 = vmatpush1.msra.mxu0 0.0
      %2590 = vmatprep.subr.mxu0 0.0
      %2591 = vmatpush1.msra.mxu0 0.0
      %2592 = vmatprep.subr.mxu0 0.0
      %2593 = vmatpush1.msra.mxu0 0.0
      %2594 = vmatprep.subr.mxu0 0.0
      %2595 = vmatpush1.msra.mxu0 0.0
      %2596 = vmatprep.subr.mxu0 0.0
      %2597 = vmatpush1.msra.mxu0 0.0
      %2598 = vmatprep.subr.mxu0 0.0
      %2599 = vmatpush1.msra.mxu0 0.0
      %2600 = vmatprep.subr.mxu0 0.0
      %2601 = vmatpush1.msra.mxu0 0.0
      %2602 = vmatprep.subr.mxu0 0.0
      %2603 = vmatpush1.msra.mxu0 0.0
      %2604 = vmatprep.subr.mxu0 0.0
      %2605 = vmatpush1.msra.mxu0 0.0
      %2606 = vmatprep.subr.mxu0 0.0
      %2607 = vmatpush1.msra.mxu0 0.0
      %2608 = vmatprep.subr.mxu0 0.0
      %2609 = vmatpush1.msra.mxu0 0.0
      %2610 = vmatprep.subr.mxu0 0.0
      %2611 = vmatpush1.msra.mxu0 0.0
      %2612 = vmatprep.subr.mxu0 0.0
      %2613 = vmatpush1.msra.mxu0 0.0
      %2614 = vmatprep.subr.mxu0 0.0
      %2615 = vmatpush1.msra.mxu0 0.0
      %2616 = vmatprep.subr.mxu0 0.0
      %2617 = vmatpush1.msra.mxu0 0.0
      %2618 = vmatprep.subr.mxu0 0.0
      %2619 = vmatpush1.msra.mxu0 0.0
      %2620 = vmatprep.subr.mxu0 0.0
      %2621 = vmatpush1.msra.mxu0 0.0
      %2622 = vmatprep.subr.mxu0 0.0
      %2623 = vmatpush1.msra.mxu0 0.0
      %2624 = vmatprep.subr.mxu0 0.0
      %2625 = vmatpush1.msra.mxu0 0.0
      %2626 = vmatprep.subr.mxu0 0.0
      %2627 = vmatpush1.msra.mxu0 0.0
      %2628 = vmatprep.subr.mxu0 0.0
      %2629 = vmatpush1.msra.mxu0 0.0
      %2630 = vmatprep.subr.mxu0 0.0
      %2631 = vmatpush1.msra.mxu0 0.0
      %2632 = vmatprep.subr.mxu0 0.0
      %2633 = vmatpush1.msra.mxu0 0.0
      %2634 = vmatprep.subr.mxu0 0.0
      %2635 = vmatpush1.msra.mxu0 0.0
      %2636 = vmatprep.subr.mxu0 0.0
      %2637 = vmatpush1.msra.mxu0 0.0
      %2638 = vmatprep.subr.mxu0 0.0
      %2639 = vmatpush1.msra.mxu0 0.0
      %2640 = vmatprep.subr.mxu0 0.0
      %2641 = vmatpush1.msra.mxu0 0.0
      %2642 = vmatprep.subr.mxu0 0.0
      %2643 = vmatpush1.msra.mxu0 0.0
      %2644 = vmatprep.mubr.f32.mxu0 0.0
      %v2645 = vand.u32 %v2185, 4294901760
      %2646 = vmatmul.mubr.f32.gmra.mrb[0].mxu0 %v2645
      %v2647 = vpop.f32.mrb[0].mxu0
      %v2648 = vadd.f32 %v2574, %v2647
      %v2649 = vpop.f32.mrb[0].mxu0
      %v2650 = vadd.f32 %v2576, %v2649
      %2651 = vdwg.mxu0
      %2652 = vrot.lane.b32.xlu0 %v1175, 18
      %v2653 = vpop.permute.xlu0 %2652
      %2654 = vrot.lane.b32.xlu0 %v1179, 18
      %v2655 = vpop.permute.xlu0 %2654
      %vm2656 = vcmask 146432
      %v2657 = vsel %vm2656, %v2653, %v2655
      %v2661 = vmul.f32 %v202, %v2653
      %v2662 = vmul.f32 %v203, %v2657
      %v2663 = vmul.f32 %v218, %v2655
      %2664 = vrot.lane.b32.xlu0 %v217, 88
      %v2665 = vpop.permute.xlu0 %2664
      %2669 = vrot.lane.b32.xlu0 %v2661, 110
      %v2670 = vpop.permute.xlu0 %2669
      %2671 = vrot.lane.b32.xlu0 %v2662, 110
      %v2672 = vpop.permute.xlu0 %2671
      %2673 = vrot.lane.b32.xlu0 %v2663, 110
      %v2674 = vpop.permute.xlu0 %2673
      %vm2675 = vcmask 900096
      %v2676 = vsel %vm2675, %v2670, %v2672
      %v2677 = vsel %vm2675, %v2672, %v2674
      %v2680 = vsel %vm236, %v2665, 0
      %v2682 = vand.u32 %v2677, 4294901760
      %2683 = vmatprep.subr.mxu0 %v2682
      %v2684 = vand.u32 %v2676, 4294901760
      %2685 = vmatpush1.msra.mxu0 %v2684
      %2686 = vmatprep.subr.mxu0 0.0
      %2687 = vmatpush1.msra.mxu0 0.0
      %2688 = vmatprep.subr.mxu0 0.0
      %2689 = vmatpush1.msra.mxu0 0.0
      %2690 = vmatprep.subr.mxu0 0.0
      %2691 = vmatpush1.msra.mxu0 0.0
      %2692 = vmatprep.subr.mxu0 0.0
      %2693 = vmatpush1.msra.mxu0 0.0
      %2694 = vmatprep.subr.mxu0 0.0
      %2695 = vmatpush1.msra.mxu0 0.0
      %2696 = vmatprep.subr.mxu0 0.0
      %2697 = vmatpush1.msra.mxu0 0.0
      %2698 = vmatprep.subr.mxu0 0.0
      %2699 = vmatpush1.msra.mxu0 0.0
      %2700 = vmatprep.subr.mxu0 0.0
      %2701 = vmatpush1.msra.mxu0 0.0
      %2702 = vmatprep.subr.mxu0 0.0
      %2703 = vmatpush1.msra.mxu0 0.0
      %2704 = vmatprep.subr.mxu0 0.0
      %2705 = vmatpush1.msra.mxu0 0.0
      %2706 = vmatprep.subr.mxu0 0.0
      %2707 = vmatpush1.msra.mxu0 0.0
      %2708 = vmatprep.subr.mxu0 0.0
      %2709 = vmatpush1.msra.mxu0 0.0
      %2710 = vmatprep.subr.mxu0 0.0
      %2711 = vmatpush1.msra.mxu0 0.0
      %2712 = vmatprep.subr.mxu0 0.0
      %2713 = vmatpush1.msra.mxu0 0.0
      %2714 = vmatprep.subr.mxu0 0.0
      %2715 = vmatpush1.msra.mxu0 0.0
      %2716 = vmatprep.subr.mxu0 0.0
      %2717 = vmatpush1.msra.mxu0 0.0
      %2718 = vmatprep.subr.mxu0 0.0
      %2719 = vmatpush1.msra.mxu0 0.0
      %2720 = vmatprep.subr.mxu0 0.0
      %2721 = vmatpush1.msra.mxu0 0.0
      %2722 = vmatprep.subr.mxu0 0.0
      %2723 = vmatpush1.msra.mxu0 0.0
      %2724 = vmatprep.subr.mxu0 0.0
      %2725 = vmatpush1.msra.mxu0 0.0
      %2726 = vmatprep.subr.mxu0 0.0
      %2727 = vmatpush1.msra.mxu0 0.0
      %2728 = vmatprep.subr.mxu0 0.0
      %2729 = vmatpush1.msra.mxu0 0.0
      %2730 = vmatprep.subr.mxu0 0.0
      %2731 = vmatpush1.msra.mxu0 0.0
      %2732 = vmatprep.subr.mxu0 0.0
      %2733 = vmatpush1.msra.mxu0 0.0
      %2734 = vmatprep.subr.mxu0 0.0
      %2735 = vmatpush1.msra.mxu0 0.0
      %2736 = vmatprep.subr.mxu0 0.0
      %2737 = vmatpush1.msra.mxu0 0.0
      %2738 = vmatprep.subr.mxu0 0.0
      %2739 = vmatpush1.msra.mxu0 0.0
      %2740 = vmatprep.subr.mxu0 0.0
      %2741 = vmatpush1.msra.mxu0 0.0
      %2742 = vmatprep.subr.mxu0 0.0
      %2743 = vmatpush1.msra.mxu0 0.0
      %2744 = vmatprep.subr.mxu0 0.0
      %2745 = vmatpush1.msra.mxu0 0.0
      %2746 = vmatprep.subr.mxu0 0.0
      %2747 = vmatpush1.msra.mxu0 0.0
      %2748 = vmatprep.mubr.f32.mxu0 0.0
      %v2749 = vand.u32 %v2680, 4294901760
      %v2750 = vsub.f32 %v2680, %v2749
      %v2751 = vand.u32 %v2750, 4294901760
      %v2752 = vsub.f32 %v2750, %v2751
      %v2753 = vand.u32 %v2752, 4294901760
      %2754 = vmatmul.mubr.f32.gmra.mrb[0].mxu0 %v2753
      %v2755 = vpop.f32.mrb[0].mxu0
      %v2756 = vadd.f32 0.0, %v2755
      %v2757 = vpop.f32.mrb[0].mxu0
      %v2758 = vadd.f32 0.0, %v2757
      %2759 = vdwg.mxu0
      %v2760 = vand.u32 %v2677, 4294901760
      %v2761 = vsub.f32 %v2677, %v2760
      %v2762 = vand.u32 %v2761, 4294901760
      %v2763 = vsub.f32 %v2761, %v2762
      %v2764 = vand.u32 %v2763, 4294901760
      %2765 = vmatprep.subr.mxu0 %v2764
      %v2766 = vand.u32 %v2676, 4294901760
      %v2767 = vsub.f32 %v2676, %v2766
      %v2768 = vand.u32 %v2767, 4294901760
      %v2769 = vsub.f32 %v2767, %v2768
      %v2770 = vand.u32 %v2769, 4294901760
      %2771 = vmatpush1.msra.mxu0 %v2770
      %2772 = vmatprep.subr.mxu0 0.0
      %2773 = vmatpush1.msra.mxu0 0.0
      %2774 = vmatprep.subr.mxu0 0.0
      %2775 = vmatpush1.msra.mxu0 0.0
      %2776 = vmatprep.subr.mxu0 0.0
      %2777 = vmatpush1.msra.mxu0 0.0
      %2778 = vmatprep.subr.mxu0 0.0
      %2779 = vmatpush1.msra.mxu0 0.0
      %2780 = vmatprep.subr.mxu0 0.0
      %2781 = vmatpush1.msra.mxu0 0.0
      %2782 = vmatprep.subr.mxu0 0.0
      %2783 = vmatpush1.msra.mxu0 0.0
      %2784 = vmatprep.subr.mxu0 0.0
      %2785 = vmatpush1.msra.mxu0 0.0
      %2786 = vmatprep.subr.mxu0 0.0
      %2787 = vmatpush1.msra.mxu0 0.0
      %2788 = vmatprep.subr.mxu0 0.0
      %2789 = vmatpush1.msra.mxu0 0.0
      %2790 = vmatprep.subr.mxu0 0.0
      %2791 = vmatpush1.msra.mxu0 0.0
      %2792 = vmatprep.subr.mxu0 0.0
      %2793 = vmatpush1.msra.mxu0 0.0
      %2794 = vmatprep.subr.mxu0 0.0
      %2795 = vmatpush1.msra.mxu0 0.0
      %2796 = vmatprep.subr.mxu0 0.0
      %2797 = vmatpush1.msra.mxu0 0.0
      %2798 = vmatprep.subr.mxu0 0.0
      %2799 = vmatpush1.msra.mxu0 0.0
      %2800 = vmatprep.subr.mxu0 0.0
      %2801 = vmatpush1.msra.mxu0 0.0
      %2802 = vmatprep.subr.mxu0 0.0
      %2803 = vmatpush1.msra.mxu0 0.0
      %2804 = vmatprep.subr.mxu0 0.0
      %2805 = vmatpush1.msra.mxu0 0.0
      %2806 = vmatprep.subr.mxu0 0.0
      %2807 = vmatpush1.msra.mxu0 0.0
      %2808 = vmatprep.subr.mxu0 0.0
      %2809 = vmatpush1.msra.mxu0 0.0
      %2810 = vmatprep.subr.mxu0 0.0
      %2811 = vmatpush1.msra.mxu0 0.0
      %2812 = vmatprep.subr.mxu0 0.0
      %2813 = vmatpush1.msra.mxu0 0.0
      %2814 = vmatprep.subr.mxu0 0.0
      %2815 = vmatpush1.msra.mxu0 0.0
      %2816 = vmatprep.subr.mxu0 0.0
      %2817 = vmatpush1.msra.mxu0 0.0
      %2818 = vmatprep.subr.mxu0 0.0
      %2819 = vmatpush1.msra.mxu0 0.0
      %2820 = vmatprep.subr.mxu0 0.0
      %2821 = vmatpush1.msra.mxu0 0.0
      %2822 = vmatprep.subr.mxu0 0.0
      %2823 = vmatpush1.msra.mxu0 0.0
      %2824 = vmatprep.subr.mxu0 0.0
      %2825 = vmatpush1.msra.mxu0 0.0
      %2826 = vmatprep.subr.mxu0 0.0
      %2827 = vmatpush1.msra.mxu0 0.0
      %2828 = vmatprep.subr.mxu0 0.0
      %2829 = vmatpush1.msra.mxu0 0.0
      %2830 = vmatprep.subr.mxu0 0.0
      %2831 = vmatpush1.msra.mxu0 0.0
      %2832 = vmatprep.subr.mxu0 0.0
      %2833 = vmatpush1.msra.mxu0 0.0
      %2834 = vmatprep.mubr.f32.mxu0 0.0
      %v2835 = vand.u32 %v2680, 4294901760
      %2836 = vmatmul.mubr.f32.gmra.mrb[0].mxu0 %v2835
      %v2837 = vpop.f32.mrb[0].mxu0
      %v2838 = vadd.f32 %v2756, %v2837
      %v2839 = vpop.f32.mrb[0].mxu0
      %v2840 = vadd.f32 %v2758, %v2839
      %2841 = vdwg.mxu0
      %v2842 = vand.u32 %v2677, 4294901760
      %v2843 = vsub.f32 %v2677, %v2842
      %2844 = vmatprep.subr.mxu0 %v2843
      %v2845 = vand.u32 %v2676, 4294901760
      %v2846 = vsub.f32 %v2676, %v2845
      %2847 = vmatpush1.msra.mxu0 %v2846
      %2848 = vmatprep.subr.mxu0 0.0
      %2849 = vmatpush1.msra.mxu0 0.0
      %2850 = vmatprep.subr.mxu0 0.0
      %2851 = vmatpush1.msra.mxu0 0.0
      %2852 = vmatprep.subr.mxu0 0.0
      %2853 = vmatpush1.msra.mxu0 0.0
      %2854 = vmatprep.subr.mxu0 0.0
      %2855 = vmatpush1.msra.mxu0 0.0
      %2856 = vmatprep.subr.mxu0 0.0
      %2857 = vmatpush1.msra.mxu0 0.0
      %2858 = vmatprep.subr.mxu0 0.0
      %2859 = vmatpush1.msra.mxu0 0.0
      %2860 = vmatprep.subr.mxu0 0.0
      %2861 = vmatpush1.msra.mxu0 0.0
      %2862 = vmatprep.subr.mxu0 0.0
      %2863 = vmatpush1.msra.mxu0 0.0
      %2864 = vmatprep.subr.mxu0 0.0
      %2865 = vmatpush1.msra.mxu0 0.0
      %2866 = vmatprep.subr.mxu0 0.0
      %2867 = vmatpush1.msra.mxu0 0.0
      %2868 = vmatprep.subr.mxu0 0.0
      %2869 = vmatpush1.msra.mxu0 0.0
      %2870 = vmatprep.subr.mxu0 0.0
      %2871 = vmatpush1.msra.mxu0 0.0
      %2872 = vmatprep.subr.mxu0 0.0
      %2873 = vmatpush1.msra.mxu0 0.0
      %2874 = vmatprep.subr.mxu0 0.0
      %2875 = vmatpush1.msra.mxu0 0.0
      %2876 = vmatprep.subr.mxu0 0.0
      %2877 = vmatpush1.msra.mxu0 0.0
      %2878 = vmatprep.subr.mxu0 0.0
      %2879 = vmatpush1.msra.mxu0 0.0
      %2880 = vmatprep.subr.mxu0 0.0
      %2881 = vmatpush1.msra.mxu0 0.0
      %2882 = vmatprep.subr.mxu0 0.0
      %2883 = vmatpush1.msra.mxu0 0.0
      %2884 = vmatprep.subr.mxu0 0.0
      %2885 = vmatpush1.msra.mxu0 0.0
      %2886 = vmatprep.subr.mxu0 0.0
      %2887 = vmatpush1.msra.mxu0 0.0
      %2888 = vmatprep.subr.mxu0 0.0
      %2889 = vmatpush1.msra.mxu0 0.0
      %2890 = vmatprep.subr.mxu0 0.0
      %2891 = vmatpush1.msra.mxu0 0.0
      %2892 = vmatprep.subr.mxu0 0.0
      %2893 = vmatpush1.msra.mxu0 0.0
      %2894 = vmatprep.subr.mxu0 0.0
      %2895 = vmatpush1.msra.mxu0 0.0
      %2896 = vmatprep.subr.mxu0 0.0
      %2897 = vmatpush1.msra.mxu0 0.0
      %2898 = vmatprep.subr.mxu0 0.0
      %2899 = vmatpush1.msra.mxu0 0.0
      %2900 = vmatprep.subr.mxu0 0.0
      %2901 = vmatpush1.msra.mxu0 0.0
      %2902 = vmatprep.subr.mxu0 0.0
      %2903 = vmatpush1.msra.mxu0 0.0
      %2904 = vmatprep.subr.mxu0 0.0
      %2905 = vmatpush1.msra.mxu0 0.0
      %2906 = vmatprep.subr.mxu0 0.0
      %2907 = vmatpush1.msra.mxu0 0.0
      %2908 = vmatprep.subr.mxu0 0.0
      %2909 = vmatpush1.msra.mxu0 0.0
      %2910 = vmatprep.mubr.f32.mxu0 0.0
      %v2911 = vand.u32 %v2680, 4294901760
      %v2912 = vsub.f32 %v2680, %v2911
      %2913 = vmatmul.mubr.f32.gmra.mrb[0].mxu0 %v2912
      %v2914 = vpop.f32.mrb[0].mxu0
      %v2915 = vadd.f32 %v2838, %v2914
      %v2916 = vpop.f32.mrb[0].mxu0
      %v2917 = vadd.f32 %v2840, %v2916
      %2918 = vdwg.mxu0
      %v2919 = vand.u32 %v2677, 4294901760
      %2920 = vmatprep.subr.mxu0 %v2919
      %v2921 = vand.u32 %v2676, 4294901760
      %2922 = vmatpush1.msra.mxu0 %v2921
      %2923 = vmatprep.subr.mxu0 0.0
      %2924 = vmatpush1.msra.mxu0 0.0
      %2925 = vmatprep.subr.mxu0 0.0
      %2926 = vmatpush1.msra.mxu0 0.0
      %2927 = vmatprep.subr.mxu0 0.0
      %2928 = vmatpush1.msra.mxu0 0.0
      %2929 = vmatprep.subr.mxu0 0.0
      %2930 = vmatpush1.msra.mxu0 0.0
      %2931 = vmatprep.subr.mxu0 0.0
      %2932 = vmatpush1.msra.mxu0 0.0
      %2933 = vmatprep.subr.mxu0 0.0
      %2934 = vmatpush1.msra.mxu0 0.0
      %2935 = vmatprep.subr.mxu0 0.0
      %2936 = vmatpush1.msra.mxu0 0.0
      %2937 = vmatprep.subr.mxu0 0.0
      %2938 = vmatpush1.msra.mxu0 0.0
      %2939 = vmatprep.subr.mxu0 0.0
      %2940 = vmatpush1.msra.mxu0 0.0
      %2941 = vmatprep.subr.mxu0 0.0
      %2942 = vmatpush1.msra.mxu0 0.0
      %2943 = vmatprep.subr.mxu0 0.0
      %2944 = vmatpush1.msra.mxu0 0.0
      %2945 = vmatprep.subr.mxu0 0.0
      %2946 = vmatpush1.msra.mxu0 0.0
      %2947 = vmatprep.subr.mxu0 0.0
      %2948 = vmatpush1.msra.mxu0 0.0
      %2949 = vmatprep.subr.mxu0 0.0
      %2950 = vmatpush1.msra.mxu0 0.0
      %2951 = vmatprep.subr.mxu0 0.0
      %2952 = vmatpush1.msra.mxu0 0.0
      %2953 = vmatprep.subr.mxu0 0.0
      %2954 = vmatpush1.msra.mxu0 0.0
      %2955 = vmatprep.subr.mxu0 0.0
      %2956 = vmatpush1.msra.mxu0 0.0
      %2957 = vmatprep.subr.mxu0 0.0
      %2958 = vmatpush1.msra.mxu0 0.0
      %2959 = vmatprep.subr.mxu0 0.0
      %2960 = vmatpush1.msra.mxu0 0.0
      %2961 = vmatprep.subr.mxu0 0.0
      %2962 = vmatpush1.msra.mxu0 0.0
      %2963 = vmatprep.subr.mxu0 0.0
      %2964 = vmatpush1.msra.mxu0 0.0
      %2965 = vmatprep.subr.mxu0 0.0
      %2966 = vmatpush1.msra.mxu0 0.0
      %2967 = vmatprep.subr.mxu0 0.0
      %2968 = vmatpush1.msra.mxu0 0.0
      %2969 = vmatprep.subr.mxu0 0.0
      %2970 = vmatpush1.msra.mxu0 0.0
      %2971 = vmatprep.subr.mxu0 0.0
      %2972 = vmatpush1.msra.mxu0 0.0
      %2973 = vmatprep.subr.mxu0 0.0
      %2974 = vmatpush1.msra.mxu0 0.0
      %2975 = vmatprep.subr.mxu0 0.0
      %2976 = vmatpush1.msra.mxu0 0.0
      %2977 = vmatprep.subr.mxu0 0.0
      %2978 = vmatpush1.msra.mxu0 0.0
      %2979 = vmatprep.subr.mxu0 0.0
      %2980 = vmatpush1.msra.mxu0 0.0
      %2981 = vmatprep.subr.mxu0 0.0
      %2982 = vmatpush1.msra.mxu0 0.0
      %2983 = vmatprep.subr.mxu0 0.0
      %2984 = vmatpush1.msra.mxu0 0.0
      %2985 = vmatprep.mubr.f32.mxu0 0.0
      %v2986 = vand.u32 %v2680, 4294901760
      %v2987 = vsub.f32 %v2680, %v2986
      %v2988 = vand.u32 %v2987, 4294901760
      %2989 = vmatmul.mubr.f32.gmra.mrb[0].mxu0 %v2988
      %v2990 = vpop.f32.mrb[0].mxu0
      %v2991 = vadd.f32 %v2915, %v2990
      %v2992 = vpop.f32.mrb[0].mxu0
      %v2993 = vadd.f32 %v2917, %v2992
      %2994 = vdwg.mxu0
      %v2995 = vand.u32 %v2677, 4294901760
      %v2996 = vsub.f32 %v2677, %v2995
      %v2997 = vand.u32 %v2996, 4294901760
      %2998 = vmatprep.subr.mxu0 %v2997
      %v2999 = vand.u32 %v2676, 4294901760
      %v3000 = vsub.f32 %v2676, %v2999
      %v3001 = vand.u32 %v3000, 4294901760
      %3002 = vmatpush1.msra.mxu0 %v3001
      %3003 = vmatprep.subr.mxu0 0.0
      %3004 = vmatpush1.msra.mxu0 0.0
      %3005 = vmatprep.subr.mxu0 0.0
      %3006 = vmatpush1.msra.mxu0 0.0
      %3007 = vmatprep.subr.mxu0 0.0
      %3008 = vmatpush1.msra.mxu0 0.0
      %3009 = vmatprep.subr.mxu0 0.0
      %3010 = vmatpush1.msra.mxu0 0.0
      %3011 = vmatprep.subr.mxu0 0.0
      %3012 = vmatpush1.msra.mxu0 0.0
      %3013 = vmatprep.subr.mxu0 0.0
      %3014 = vmatpush1.msra.mxu0 0.0
      %3015 = vmatprep.subr.mxu0 0.0
      %3016 = vmatpush1.msra.mxu0 0.0
      %3017 = vmatprep.subr.mxu0 0.0
      %3018 = vmatpush1.msra.mxu0 0.0
      %3019 = vmatprep.subr.mxu0 0.0
      %3020 = vmatpush1.msra.mxu0 0.0
      %3021 = vmatprep.subr.mxu0 0.0
      %3022 = vmatpush1.msra.mxu0 0.0
      %3023 = vmatprep.subr.mxu0 0.0
      %3024 = vmatpush1.msra.mxu0 0.0
      %3025 = vmatprep.subr.mxu0 0.0
      %3026 = vmatpush1.msra.mxu0 0.0
      %3027 = vmatprep.subr.mxu0 0.0
      %3028 = vmatpush1.msra.mxu0 0.0
      %3029 = vmatprep.subr.mxu0 0.0
      %3030 = vmatpush1.msra.mxu0 0.0
      %3031 = vmatprep.subr.mxu0 0.0
      %3032 = vmatpush1.msra.mxu0 0.0
      %3033 = vmatprep.subr.mxu0 0.0
      %3034 = vmatpush1.msra.mxu0 0.0
      %3035 = vmatprep.subr.mxu0 0.0
      %3036 = vmatpush1.msra.mxu0 0.0
      %3037 = vmatprep.subr.mxu0 0.0
      %3038 = vmatpush1.msra.mxu0 0.0
      %3039 = vmatprep.subr.mxu0 0.0
      %3040 = vmatpush1.msra.mxu0 0.0
      %3041 = vmatprep.subr.mxu0 0.0
      %3042 = vmatpush1.msra.mxu0 0.0
      %3043 = vmatprep.subr.mxu0 0.0
      %3044 = vmatpush1.msra.mxu0 0.0
      %3045 = vmatprep.subr.mxu0 0.0
      %3046 = vmatpush1.msra.mxu0 0.0
      %3047 = vmatprep.subr.mxu0 0.0
      %3048 = vmatpush1.msra.mxu0 0.0
      %3049 = vmatprep.subr.mxu0 0.0
      %3050 = vmatpush1.msra.mxu0 0.0
      %3051 = vmatprep.subr.mxu0 0.0
      %3052 = vmatpush1.msra.mxu0 0.0
      %3053 = vmatprep.subr.mxu0 0.0
      %3054 = vmatpush1.msra.mxu0 0.0
      %3055 = vmatprep.subr.mxu0 0.0
      %3056 = vmatpush1.msra.mxu0 0.0
      %3057 = vmatprep.subr.mxu0 0.0
      %3058 = vmatpush1.msra.mxu0 0.0
      %3059 = vmatprep.subr.mxu0 0.0
      %3060 = vmatpush1.msra.mxu0 0.0
      %3061 = vmatprep.subr.mxu0 0.0
      %3062 = vmatpush1.msra.mxu0 0.0
      %3063 = vmatprep.subr.mxu0 0.0
      %3064 = vmatpush1.msra.mxu0 0.0
      %3065 = vmatprep.mubr.f32.mxu0 0.0
      %v3066 = vand.u32 %v2680, 4294901760
      %3067 = vmatmul.mubr.f32.gmra.mrb[0].mxu0 %v3066
      %v3068 = vpop.f32.mrb[0].mxu0
      %v3069 = vadd.f32 %v2991, %v3068
      %v3070 = vpop.f32.mrb[0].mxu0
      %v3071 = vadd.f32 %v2993, %v3070
      %3072 = vdwg.mxu0
      %v3073 = vand.u32 %v2677, 4294901760
      %3074 = vmatprep.subr.mxu0 %v3073
      %v3075 = vand.u32 %v2676, 4294901760
      %3076 = vmatpush1.msra.mxu0 %v3075
      %3077 = vmatprep.subr.mxu0 0.0
      %3078 = vmatpush1.msra.mxu0 0.0
      %3079 = vmatprep.subr.mxu0 0.0
      %3080 = vmatpush1.msra.mxu0 0.0
      %3081 = vmatprep.subr.mxu0 0.0
      %3082 = vmatpush1.msra.mxu0 0.0
      %3083 = vmatprep.subr.mxu0 0.0
      %3084 = vmatpush1.msra.mxu0 0.0
      %3085 = vmatprep.subr.mxu0 0.0
      %3086 = vmatpush1.msra.mxu0 0.0
      %3087 = vmatprep.subr.mxu0 0.0
      %3088 = vmatpush1.msra.mxu0 0.0
      %3089 = vmatprep.subr.mxu0 0.0
      %3090 = vmatpush1.msra.mxu0 0.0
      %3091 = vmatprep.subr.mxu0 0.0
      %3092 = vmatpush1.msra.mxu0 0.0
      %3093 = vmatprep.subr.mxu0 0.0
      %3094 = vmatpush1.msra.mxu0 0.0
      %3095 = vmatprep.subr.mxu0 0.0
      %3096 = vmatpush1.msra.mxu0 0.0
      %3097 = vmatprep.subr.mxu0 0.0
      %3098 = vmatpush1.msra.mxu0 0.0
      %3099 = vmatprep.subr.mxu0 0.0
      %3100 = vmatpush1.msra.mxu0 0.0
      %3101 = vmatprep.subr.mxu0 0.0
      %3102 = vmatpush1.msra.mxu0 0.0
      %3103 = vmatprep.subr.mxu0 0.0
      %3104 = vmatpush1.msra.mxu0 0.0
      %3105 = vmatprep.subr.mxu0 0.0
      %3106 = vmatpush1.msra.mxu0 0.0
      %3107 = vmatprep.subr.mxu0 0.0
      %3108 = vmatpush1.msra.mxu0 0.0
      %3109 = vmatprep.subr.mxu0 0.0
      %3110 = vmatpush1.msra.mxu0 0.0
      %3111 = vmatprep.subr.mxu0 0.0
      %3112 = vmatpush1.msra.mxu0 0.0
      %3113 = vmatprep.subr.mxu0 0.0
      %3114 = vmatpush1.msra.mxu0 0.0
      %3115 = vmatprep.subr.mxu0 0.0
      %3116 = vmatpush1.msra.mxu0 0.0
      %3117 = vmatprep.subr.mxu0 0.0
      %3118 = vmatpush1.msra.mxu0 0.0
      %3119 = vmatprep.subr.mxu0 0.0
      %3120 = vmatpush1.msra.mxu0 0.0
      %3121 = vmatprep.subr.mxu0 0.0
      %3122 = vmatpush1.msra.mxu0 0.0
      %3123 = vmatprep.subr.mxu0 0.0
      %3124 = vmatpush1.msra.mxu0 0.0
      %3125 = vmatprep.subr.mxu0 0.0
      %3126 = vmatpush1.msra.mxu0 0.0
      %3127 = vmatprep.subr.mxu0 0.0
      %3128 = vmatpush1.msra.mxu0 0.0
      %3129 = vmatprep.subr.mxu0 0.0
      %3130 = vmatpush1.msra.mxu0 0.0
      %3131 = vmatprep.subr.mxu0 0.0
      %3132 = vmatpush1.msra.mxu0 0.0
      %3133 = vmatprep.subr.mxu0 0.0
      %3134 = vmatpush1.msra.mxu0 0.0
      %3135 = vmatprep.subr.mxu0 0.0
      %3136 = vmatpush1.msra.mxu0 0.0
      %3137 = vmatprep.subr.mxu0 0.0
      %3138 = vmatpush1.msra.mxu0 0.0
      %3139 = vmatprep.mubr.f32.mxu0 0.0
      %v3140 = vand.u32 %v2680, 4294901760
      %3141 = vmatmul.mubr.f32.gmra.mrb[0].mxu0 %v3140
      %v3142 = vpop.f32.mrb[0].mxu0
      %v3143 = vadd.f32 %v3069, %v3142
      %v3144 = vpop.f32.mrb[0].mxu0
      %v3145 = vadd.f32 %v3071, %v3144
      %3146 = vdwg.mxu0
      %v3147 = vadd.f32 %v2648, %v3143
      %v3148 = vadd.f32 %v2650, %v3145
      %3149 = vrot.lane.b32.xlu0 %v208, 32
      %v3150 = vpop.permute.xlu0 %3149
      %3151 = vrot.lane.b32.xlu0 %v212, 32
      %v3152 = vpop.permute.xlu0 %3151
      %vm3153 = vcmask 261120
      %v3154 = vsel %vm3153, %v3150, %v3152
      %v3158 = vmul.f32 %v202, %v3150
      %v3159 = vmul.f32 %v203, %v3154
      %v3160 = vmul.f32 %v218, %v3152
      %3161 = vrot.lane.b32.xlu0 %v217, 72
      %v3162 = vpop.permute.xlu0 %3161
      %3163 = vrot.lane.b32.xlu0 %v202, 95
      %v3164 = vpop.permute.xlu0 %3163
      %3165 = vrot.lane.b32.xlu0 %v203, 95
      %v3166 = vpop.permute.xlu0 %3165
      %3167 = vrot.lane.b32.xlu0 %v218, 95
      %v3168 = vpop.permute.xlu0 %3167
      %vm3169 = vcmask 777216
      %v3170 = vsel %vm3169, %v3164, %v3166
      %v3171 = vsel %vm3169, %v3166, %v3168
      %v3174 = vsel %vm236, %v3162, 0
      %v3176 = vand.u32 %v3171, 4294901760
      %3177 = vmatprep.subr.mxu0 %v3176
      %v3178 = vand.u32 %v3170, 4294901760
      %3179 = vmatpush1.msra.mxu0 %v3178
      %3180 = vmatprep.subr.mxu0 0.0
      %3181 = vmatpush1.msra.mxu0 0.0
      %3182 = vmatprep.subr.mxu0 0.0
      %3183 = vmatpush1.msra.mxu0 0.0
      %3184 = vmatprep.subr.mxu0 0.0
      %3185 = vmatpush1.msra.mxu0 0.0
      %3186 = vmatprep.subr.mxu0 0.0
      %3187 = vmatpush1.msra.mxu0 0.0
      %3188 = vmatprep.subr.mxu0 0.0
      %3189 = vmatpush1.msra.mxu0 0.0
      %3190 = vmatprep.subr.mxu0 0.0
      %3191 = vmatpush1.msra.mxu0 0.0
      %3192 = vmatprep.subr.mxu0 0.0
      %3193 = vmatpush1.msra.mxu0 0.0
      %3194 = vmatprep.subr.mxu0 0.0
      %3195 = vmatpush1.msra.mxu0 0.0
      %3196 = vmatprep.subr.mxu0 0.0
      %3197 = vmatpush1.msra.mxu0 0.0
      %3198 = vmatprep.subr.mxu0 0.0
      %3199 = vmatpush1.msra.mxu0 0.0
      %3200 = vmatprep.subr.mxu0 0.0
      %3201 = vmatpush1.msra.mxu0 0.0
      %3202 = vmatprep.subr.mxu0 0.0
      %3203 = vmatpush1.msra.mxu0 0.0
      %3204 = vmatprep.subr.mxu0 0.0
      %3205 = vmatpush1.msra.mxu0 0.0
      %3206 = vmatprep.subr.mxu0 0.0
      %3207 = vmatpush1.msra.mxu0 0.0
      %3208 = vmatprep.subr.mxu0 0.0
      %3209 = vmatpush1.msra.mxu0 0.0
      %3210 = vmatprep.subr.mxu0 0.0
      %3211 = vmatpush1.msra.mxu0 0.0
      %3212 = vmatprep.subr.mxu0 0.0
      %3213 = vmatpush1.msra.mxu0 0.0
      %3214 = vmatprep.subr.mxu0 0.0
      %3215 = vmatpush1.msra.mxu0 0.0
      %3216 = vmatprep.subr.mxu0 0.0
      %3217 = vmatpush1.msra.mxu0 0.0
      %3218 = vmatprep.subr.mxu0 0.0
      %3219 = vmatpush1.msra.mxu0 0.0
      %3220 = vmatprep.subr.mxu0 0.0
      %3221 = vmatpush1.msra.mxu0 0.0
      %3222 = vmatprep.subr.mxu0 0.0
      %3223 = vmatpush1.msra.mxu0 0.0
      %3224 = vmatprep.subr.mxu0 0.0
      %3225 = vmatpush1.msra.mxu0 0.0
      %3226 = vmatprep.subr.mxu0 0.0
      %3227 = vmatpush1.msra.mxu0 0.0
      %3228 = vmatprep.subr.mxu0 0.0
      %3229 = vmatpush1.msra.mxu0 0.0
      %3230 = vmatprep.subr.mxu0 0.0
      %3231 = vmatpush1.msra.mxu0 0.0
      %3232 = vmatprep.subr.mxu0 0.0
      %3233 = vmatpush1.msra.mxu0 0.0
      %3234 = vmatprep.subr.mxu0 0.0
      %3235 = vmatpush1.msra.mxu0 0.0
      %3236 = vmatprep.subr.mxu0 0.0
      %3237 = vmatpush1.msra.mxu0 0.0
      %3238 = vmatprep.subr.mxu0 0.0
      %3239 = vmatpush1.msra.mxu0 0.0
      %3240 = vmatprep.subr.mxu0 0.0
      %3241 = vmatpush1.msra.mxu0 0.0
      %3242 = vmatprep.mubr.f32.mxu0 0.0
      %v3243 = vand.u32 %v3174, 4294901760
      %v3244 = vsub.f32 %v3174, %v3243
      %v3245 = vand.u32 %v3244, 4294901760
      %v3246 = vsub.f32 %v3244, %v3245
      %v3247 = vand.u32 %v3246, 4294901760
      %3248 = vmatmul.mubr.f32.gmra.mrb[0].mxu0 %v3247
      %v3249 = vpop.f32.mrb[0].mxu0
      %v3250 = vadd.f32 0.0, %v3249
      %v3251 = vpop.f32.mrb[0].mxu0
      %v3252 = vadd.f32 0.0, %v3251
      %3253 = vdwg.mxu0
      %v3254 = vand.u32 %v3171, 4294901760
      %v3255 = vsub.f32 %v3171, %v3254
      %v3256 = vand.u32 %v3255, 4294901760
      %v3257 = vsub.f32 %v3255, %v3256
      %v3258 = vand.u32 %v3257, 4294901760
      %3259 = vmatprep.subr.mxu0 %v3258
      %v3260 = vand.u32 %v3170, 4294901760
      %v3261 = vsub.f32 %v3170, %v3260
      %v3262 = vand.u32 %v3261, 4294901760
      %v3263 = vsub.f32 %v3261, %v3262
      %v3264 = vand.u32 %v3263, 4294901760
      %3265 = vmatpush1.msra.mxu0 %v3264
      %3266 = vmatprep.subr.mxu0 0.0
      %3267 = vmatpush1.msra.mxu0 0.0
      %3268 = vmatprep.subr.mxu0 0.0
      %3269 = vmatpush1.msra.mxu0 0.0
      %3270 = vmatprep.subr.mxu0 0.0
      %3271 = vmatpush1.msra.mxu0 0.0
      %3272 = vmatprep.subr.mxu0 0.0
      %3273 = vmatpush1.msra.mxu0 0.0
      %3274 = vmatprep.subr.mxu0 0.0
      %3275 = vmatpush1.msra.mxu0 0.0
      %3276 = vmatprep.subr.mxu0 0.0
      %3277 = vmatpush1.msra.mxu0 0.0
      %3278 = vmatprep.subr.mxu0 0.0
      %3279 = vmatpush1.msra.mxu0 0.0
      %3280 = vmatprep.subr.mxu0 0.0
      %3281 = vmatpush1.msra.mxu0 0.0
      %3282 = vmatprep.subr.mxu0 0.0
      %3283 = vmatpush1.msra.mxu0 0.0
      %3284 = vmatprep.subr.mxu0 0.0
      %3285 = vmatpush1.msra.mxu0 0.0
      %3286 = vmatprep.subr.mxu0 0.0
      %3287 = vmatpush1.msra.mxu0 0.0
      %3288 = vmatprep.subr.mxu0 0.0
      %3289 = vmatpush1.msra.mxu0 0.0
      %3290 = vmatprep.subr.mxu0 0.0
      %3291 = vmatpush1.msra.mxu0 0.0
      %3292 = vmatprep.subr.mxu0 0.0
      %3293 = vmatpush1.msra.mxu0 0.0
      %3294 = vmatprep.subr.mxu0 0.0
      %3295 = vmatpush1.msra.mxu0 0.0
      %3296 = vmatprep.subr.mxu0 0.0
      %3297 = vmatpush1.msra.mxu0 0.0
      %3298 = vmatprep.subr.mxu0 0.0
      %3299 = vmatpush1.msra.mxu0 0.0
      %3300 = vmatprep.subr.mxu0 0.0
      %3301 = vmatpush1.msra.mxu0 0.0
      %3302 = vmatprep.subr.mxu0 0.0
      %3303 = vmatpush1.msra.mxu0 0.0
      %3304 = vmatprep.subr.mxu0 0.0
      %3305 = vmatpush1.msra.mxu0 0.0
      %3306 = vmatprep.subr.mxu0 0.0
      %3307 = vmatpush1.msra.mxu0 0.0
      %3308 = vmatprep.subr.mxu0 0.0
      %3309 = vmatpush1.msra.mxu0 0.0
      %3310 = vmatprep.subr.mxu0 0.0
      %3311 = vmatpush1.msra.mxu0 0.0
      %3312 = vmatprep.subr.mxu0 0.0
      %3313 = vmatpush1.msra.mxu0 0.0
      %3314 = vmatprep.subr.mxu0 0.0
      %3315 = vmatpush1.msra.mxu0 0.0
      %3316 = vmatprep.subr.mxu0 0.0
      %3317 = vmatpush1.msra.mxu0 0.0
      %3318 = vmatprep.subr.mxu0 0.0
      %3319 = vmatpush1.msra.mxu0 0.0
      %3320 = vmatprep.subr.mxu0 0.0
      %3321 = vmatpush1.msra.mxu0 0.0
      %3322 = vmatprep.subr.mxu0 0.0
      %3323 = vmatpush1.msra.mxu0 0.0
      %3324 = vmatprep.subr.mxu0 0.0
      %3325 = vmatpush1.msra.mxu0 0.0
      %3326 = vmatprep.subr.mxu0 0.0
      %3327 = vmatpush1.msra.mxu0 0.0
      %3328 = vmatprep.mubr.f32.mxu0 0.0
      %v3329 = vand.u32 %v3174, 4294901760
      %3330 = vmatmul.mubr.f32.gmra.mrb[0].mxu0 %v3329
      %v3331 = vpop.f32.mrb[0].mxu0
      %v3332 = vadd.f32 %v3250, %v3331
      %v3333 = vpop.f32.mrb[0].mxu0
      %v3334 = vadd.f32 %v3252, %v3333
      %3335 = vdwg.mxu0
      %v3336 = vand.u32 %v3171, 4294901760
      %v3337 = vsub.f32 %v3171, %v3336
      %3338 = vmatprep.subr.mxu0 %v3337
      %v3339 = vand.u32 %v3170, 4294901760
      %v3340 = vsub.f32 %v3170, %v3339
      %3341 = vmatpush1.msra.mxu0 %v3340
      %3342 = vmatprep.subr.mxu0 0.0
      %3343 = vmatpush1.msra.mxu0 0.0
      %3344 = vmatprep.subr.mxu0 0.0
      %3345 = vmatpush1.msra.mxu0 0.0
      %3346 = vmatprep.subr.mxu0 0.0
      %3347 = vmatpush1.msra.mxu0 0.0
      %3348 = vmatprep.subr.mxu0 0.0
      %3349 = vmatpush1.msra.mxu0 0.0
      %3350 = vmatprep.subr.mxu0 0.0
      %3351 = vmatpush1.msra.mxu0 0.0
      %3352 = vmatprep.subr.mxu0 0.0
      %3353 = vmatpush1.msra.mxu0 0.0
      %3354 = vmatprep.subr.mxu0 0.0
      %3355 = vmatpush1.msra.mxu0 0.0
      %3356 = vmatprep.subr.mxu0 0.0
      %3357 = vmatpush1.msra.mxu0 0.0
      %3358 = vmatprep.subr.mxu0 0.0
      %3359 = vmatpush1.msra.mxu0 0.0
      %3360 = vmatprep.subr.mxu0 0.0
      %3361 = vmatpush1.msra.mxu0 0.0
      %3362 = vmatprep.subr.mxu0 0.0
      %3363 = vmatpush1.msra.mxu0 0.0
      %3364 = vmatprep.subr.mxu0 0.0
      %3365 = vmatpush1.msra.mxu0 0.0
      %3366 = vmatprep.subr.mxu0 0.0
      %3367 = vmatpush1.msra.mxu0 0.0
      %3368 = vmatprep.subr.mxu0 0.0
      %3369 = vmatpush1.msra.mxu0 0.0
      %3370 = vmatprep.subr.mxu0 0.0
      %3371 = vmatpush1.msra.mxu0 0.0
      %3372 = vmatprep.subr.mxu0 0.0
      %3373 = vmatpush1.msra.mxu0 0.0
      %3374 = vmatprep.subr.mxu0 0.0
      %3375 = vmatpush1.msra.mxu0 0.0
      %3376 = vmatprep.subr.mxu0 0.0
      %3377 = vmatpush1.msra.mxu0 0.0
      %3378 = vmatprep.subr.mxu0 0.0
      %3379 = vmatpush1.msra.mxu0 0.0
      %3380 = vmatprep.subr.mxu0 0.0
      %3381 = vmatpush1.msra.mxu0 0.0
      %3382 = vmatprep.subr.mxu0 0.0
      %3383 = vmatpush1.msra.mxu0 0.0
      %3384 = vmatprep.subr.mxu0 0.0
      %3385 = vmatpush1.msra.mxu0 0.0
      %3386 = vmatprep.subr.mxu0 0.0
      %3387 = vmatpush1.msra.mxu0 0.0
      %3388 = vmatprep.subr.mxu0 0.0
      %3389 = vmatpush1.msra.mxu0 0.0
      %3390 = vmatprep.subr.mxu0 0.0
      %3391 = vmatpush1.msra.mxu0 0.0
      %3392 = vmatprep.subr.mxu0 0.0
      %3393 = vmatpush1.msra.mxu0 0.0
      %3394 = vmatprep.subr.mxu0 0.0
      %3395 = vmatpush1.msra.mxu0 0.0
      %3396 = vmatprep.subr.mxu0 0.0
      %3397 = vmatpush1.msra.mxu0 0.0
      %3398 = vmatprep.subr.mxu0 0.0
      %3399 = vmatpush1.msra.mxu0 0.0
      %3400 = vmatprep.subr.mxu0 0.0
      %3401 = vmatpush1.msra.mxu0 0.0
      %3402 = vmatprep.subr.mxu0 0.0
      %3403 = vmatpush1.msra.mxu0 0.0
      %3404 = vmatprep.mubr.f32.mxu0 0.0
      %v3405 = vand.u32 %v3174, 4294901760
      %v3406 = vsub.f32 %v3174, %v3405
      %3407 = vmatmul.mubr.f32.gmra.mrb[0].mxu0 %v3406
      %v3408 = vpop.f32.mrb[0].mxu0
      %v3409 = vadd.f32 %v3332, %v3408
      %v3410 = vpop.f32.mrb[0].mxu0
      %v3411 = vadd.f32 %v3334, %v3410
      %3412 = vdwg.mxu0
      %v3413 = vand.u32 %v3171, 4294901760
      %3414 = vmatprep.subr.mxu0 %v3413
      %v3415 = vand.u32 %v3170, 4294901760
      %3416 = vmatpush1.msra.mxu0 %v3415
      %3417 = vmatprep.subr.mxu0 0.0
      %3418 = vmatpush1.msra.mxu0 0.0
      %3419 = vmatprep.subr.mxu0 0.0
      %3420 = vmatpush1.msra.mxu0 0.0
      %3421 = vmatprep.subr.mxu0 0.0
      %3422 = vmatpush1.msra.mxu0 0.0
      %3423 = vmatprep.subr.mxu0 0.0
      %3424 = vmatpush1.msra.mxu0 0.0
      %3425 = vmatprep.subr.mxu0 0.0
      %3426 = vmatpush1.msra.mxu0 0.0
      %3427 = vmatprep.subr.mxu0 0.0
      %3428 = vmatpush1.msra.mxu0 0.0
      %3429 = vmatprep.subr.mxu0 0.0
      %3430 = vmatpush1.msra.mxu0 0.0
      %3431 = vmatprep.subr.mxu0 0.0
      %3432 = vmatpush1.msra.mxu0 0.0
      %3433 = vmatprep.subr.mxu0 0.0
      %3434 = vmatpush1.msra.mxu0 0.0
      %3435 = vmatprep.subr.mxu0 0.0
      %3436 = vmatpush1.msra.mxu0 0.0
      %3437 = vmatprep.subr.mxu0 0.0
      %3438 = vmatpush1.msra.mxu0 0.0
      %3439 = vmatprep.subr.mxu0 0.0
      %3440 = vmatpush1.msra.mxu0 0.0
      %3441 = vmatprep.subr.mxu0 0.0
      %3442 = vmatpush1.msra.mxu0 0.0
      %3443 = vmatprep.subr.mxu0 0.0
      %3444 = vmatpush1.msra.mxu0 0.0
      %3445 = vmatprep.subr.mxu0 0.0
      %3446 = vmatpush1.msra.mxu0 0.0
      %3447 = vmatprep.subr.mxu0 0.0
      %3448 = vmatpush1.msra.mxu0 0.0
      %3449 = vmatprep.subr.mxu0 0.0
      %3450 = vmatpush1.msra.mxu0 0.0
      %3451 = vmatprep.subr.mxu0 0.0
      %3452 = vmatpush1.msra.mxu0 0.0
      %3453 = vmatprep.subr.mxu0 0.0
      %3454 = vmatpush1.msra.mxu0 0.0
      %3455 = vmatprep.subr.mxu0 0.0
      %3456 = vmatpush1.msra.mxu0 0.0
      %3457 = vmatprep.subr.mxu0 0.0
      %3458 = vmatpush1.msra.mxu0 0.0
      %3459 = vmatprep.subr.mxu0 0.0
      %3460 = vmatpush1.msra.mxu0 0.0
      %3461 = vmatprep.subr.mxu0 0.0
      %3462 = vmatpush1.msra.mxu0 0.0
      %3463 = vmatprep.subr.mxu0 0.0
      %3464 = vmatpush1.msra.mxu0 0.0
      %3465 = vmatprep.subr.mxu0 0.0
      %3466 = vmatpush1.msra.mxu0 0.0
      %3467 = vmatprep.subr.mxu0 0.0
      %3468 = vmatpush1.msra.mxu0 0.0
      %3469 = vmatprep.subr.mxu0 0.0
      %3470 = vmatpush1.msra.mxu0 0.0
      %3471 = vmatprep.subr.mxu0 0.0
      %3472 = vmatpush1.msra.mxu0 0.0
      %3473 = vmatprep.subr.mxu0 0.0
      %3474 = vmatpush1.msra.mxu0 0.0
      %3475 = vmatprep.subr.mxu0 0.0
      %3476 = vmatpush1.msra.mxu0 0.0
      %3477 = vmatprep.subr.mxu0 0.0
      %3478 = vmatpush1.msra.mxu0 0.0
      %3479 = vmatprep.mubr.f32.mxu0 0.0
      %v3480 = vand.u32 %v3174, 4294901760
      %v3481 = vsub.f32 %v3174, %v3480
      %v3482 = vand.u32 %v3481, 4294901760
      %3483 = vmatmul.mubr.f32.gmra.mrb[0].mxu0 %v3482
      %v3484 = vpop.f32.mrb[0].mxu0
      %v3485 = vadd.f32 %v3409, %v3484
      %v3486 = vpop.f32.mrb[0].mxu0
      %v3487 = vadd.f32 %v3411, %v3486
      %3488 = vdwg.mxu0
      %v3489 = vand.u32 %v3171, 4294901760
      %v3490 = vsub.f32 %v3171, %v3489
      %v3491 = vand.u32 %v3490, 4294901760
      %3492 = vmatprep.subr.mxu0 %v3491
      %v3493 = vand.u32 %v3170, 4294901760
      %v3494 = vsub.f32 %v3170, %v3493
      %v3495 = vand.u32 %v3494, 4294901760
      %3496 = vmatpush1.msra.mxu0 %v3495
      %3497 = vmatprep.subr.mxu0 0.0
      %3498 = vmatpush1.msra.mxu0 0.0
      %3499 = vmatprep.subr.mxu0 0.0
      %3500 = vmatpush1.msra.mxu0 0.0
      %3501 = vmatprep.subr.mxu0 0.0
      %3502 = vmatpush1.msra.mxu0 0.0
      %3503 = vmatprep.subr.mxu0 0.0
      %3504 = vmatpush1.msra.mxu0 0.0
      %3505 = vmatprep.subr.mxu0 0.0
      %3506 = vmatpush1.msra.mxu0 0.0
      %3507 = vmatprep.subr.mxu0 0.0
      %3508 = vmatpush1.msra.mxu0 0.0
      %3509 = vmatprep.subr.mxu0 0.0
      %3510 = vmatpush1.msra.mxu0 0.0
      %3511 = vmatprep.subr.mxu0 0.0
      %3512 = vmatpush1.msra.mxu0 0.0
      %3513 = vmatprep.subr.mxu0 0.0
      %3514 = vmatpush1.msra.mxu0 0.0
      %3515 = vmatprep.subr.mxu0 0.0
      %3516 = vmatpush1.msra.mxu0 0.0
      %3517 = vmatprep.subr.mxu0 0.0
      %3518 = vmatpush1.msra.mxu0 0.0
      %3519 = vmatprep.subr.mxu0 0.0
      %3520 = vmatpush1.msra.mxu0 0.0
      %3521 = vmatprep.subr.mxu0 0.0
      %3522 = vmatpush1.msra.mxu0 0.0
      %3523 = vmatprep.subr.mxu0 0.0
      %3524 = vmatpush1.msra.mxu0 0.0
      %3525 = vmatprep.subr.mxu0 0.0
      %3526 = vmatpush1.msra.mxu0 0.0
      %3527 = vmatprep.subr.mxu0 0.0
      %3528 = vmatpush1.msra.mxu0 0.0
      %3529 = vmatprep.subr.mxu0 0.0
      %3530 = vmatpush1.msra.mxu0 0.0
      %3531 = vmatprep.subr.mxu0 0.0
      %3532 = vmatpush1.msra.mxu0 0.0
      %3533 = vmatprep.subr.mxu0 0.0
      %3534 = vmatpush1.msra.mxu0 0.0
      %3535 = vmatprep.subr.mxu0 0.0
      %3536 = vmatpush1.msra.mxu0 0.0
      %3537 = vmatprep.subr.mxu0 0.0
      %3538 = vmatpush1.msra.mxu0 0.0
      %3539 = vmatprep.subr.mxu0 0.0
      %3540 = vmatpush1.msra.mxu0 0.0
      %3541 = vmatprep.subr.mxu0 0.0
      %3542 = vmatpush1.msra.mxu0 0.0
      %3543 = vmatprep.subr.mxu0 0.0
      %3544 = vmatpush1.msra.mxu0 0.0
      %3545 = vmatprep.subr.mxu0 0.0
      %3546 = vmatpush1.msra.mxu0 0.0
      %3547 = vmatprep.subr.mxu0 0.0
      %3548 = vmatpush1.msra.mxu0 0.0
      %3549 = vmatprep.subr.mxu0 0.0
      %3550 = vmatpush1.msra.mxu0 0.0
      %3551 = vmatprep.subr.mxu0 0.0
      %3552 = vmatpush1.msra.mxu0 0.0
      %3553 = vmatprep.subr.mxu0 0.0
      %3554 = vmatpush1.msra.mxu0 0.0
      %3555 = vmatprep.subr.mxu0 0.0
      %3556 = vmatpush1.msra.mxu0 0.0
      %3557 = vmatprep.subr.mxu0 0.0
      %3558 = vmatpush1.msra.mxu0 0.0
      %3559 = vmatprep.mubr.f32.mxu0 0.0
      %v3560 = vand.u32 %v3174, 4294901760
      %3561 = vmatmul.mubr.f32.gmra.mrb[0].mxu0 %v3560
      %v3562 = vpop.f32.mrb[0].mxu0
      %v3563 = vadd.f32 %v3485, %v3562
      %v3564 = vpop.f32.mrb[0].mxu0
      %v3565 = vadd.f32 %v3487, %v3564
      %3566 = vdwg.mxu0
      %v3567 = vand.u32 %v3171, 4294901760
      %3568 = vmatprep.subr.mxu0 %v3567
      %v3569 = vand.u32 %v3170, 4294901760
      %3570 = vmatpush1.msra.mxu0 %v3569
      %3571 = vmatprep.subr.mxu0 0.0
      %3572 = vmatpush1.msra.mxu0 0.0
      %3573 = vmatprep.subr.mxu0 0.0
      %3574 = vmatpush1.msra.mxu0 0.0
      %3575 = vmatprep.subr.mxu0 0.0
      %3576 = vmatpush1.msra.mxu0 0.0
      %3577 = vmatprep.subr.mxu0 0.0
      %3578 = vmatpush1.msra.mxu0 0.0
      %3579 = vmatprep.subr.mxu0 0.0
      %3580 = vmatpush1.msra.mxu0 0.0
      %3581 = vmatprep.subr.mxu0 0.0
      %3582 = vmatpush1.msra.mxu0 0.0
      %3583 = vmatprep.subr.mxu0 0.0
      %3584 = vmatpush1.msra.mxu0 0.0
      %3585 = vmatprep.subr.mxu0 0.0
      %3586 = vmatpush1.msra.mxu0 0.0
      %3587 = vmatprep.subr.mxu0 0.0
      %3588 = vmatpush1.msra.mxu0 0.0
      %3589 = vmatprep.subr.mxu0 0.0
      %3590 = vmatpush1.msra.mxu0 0.0
      %3591 = vmatprep.subr.mxu0 0.0
      %3592 = vmatpush1.msra.mxu0 0.0
      %3593 = vmatprep.subr.mxu0 0.0
      %3594 = vmatpush1.msra.mxu0 0.0
      %3595 = vmatprep.subr.mxu0 0.0
      %3596 = vmatpush1.msra.mxu0 0.0
      %3597 = vmatprep.subr.mxu0 0.0
      %3598 = vmatpush1.msra.mxu0 0.0
      %3599 = vmatprep.subr.mxu0 0.0
      %3600 = vmatpush1.msra.mxu0 0.0
      %3601 = vmatprep.subr.mxu0 0.0
      %3602 = vmatpush1.msra.mxu0 0.0
      %3603 = vmatprep.subr.mxu0 0.0
      %3604 = vmatpush1.msra.mxu0 0.0
      %3605 = vmatprep.subr.mxu0 0.0
      %3606 = vmatpush1.msra.mxu0 0.0
      %3607 = vmatprep.subr.mxu0 0.0
      %3608 = vmatpush1.msra.mxu0 0.0
      %3609 = vmatprep.subr.mxu0 0.0
      %3610 = vmatpush1.msra.mxu0 0.0
      %3611 = vmatprep.subr.mxu0 0.0
      %3612 = vmatpush1.msra.mxu0 0.0
      %3613 = vmatprep.subr.mxu0 0.0
      %3614 = vmatpush1.msra.mxu0 0.0
      %3615 = vmatprep.subr.mxu0 0.0
      %3616 = vmatpush1.msra.mxu0 0.0
      %3617 = vmatprep.subr.mxu0 0.0
      %3618 = vmatpush1.msra.mxu0 0.0
      %3619 = vmatprep.subr.mxu0 0.0
      %3620 = vmatpush1.msra.mxu0 0.0
      %3621 = vmatprep.subr.mxu0 0.0
      %3622 = vmatpush1.msra.mxu0 0.0
      %3623 = vmatprep.subr.mxu0 0.0
      %3624 = vmatpush1.msra.mxu0 0.0
      %3625 = vmatprep.subr.mxu0 0.0
      %3626 = vmatpush1.msra.mxu0 0.0
      %3627 = vmatprep.subr.mxu0 0.0
      %3628 = vmatpush1.msra.mxu0 0.0
      %3629 = vmatprep.subr.mxu0 0.0
      %3630 = vmatpush1.msra.mxu0 0.0
      %3631 = vmatprep.subr.mxu0 0.0
      %3632 = vmatpush1.msra.mxu0 0.0
      %3633 = vmatprep.mubr.f32.mxu0 0.0
      %v3634 = vand.u32 %v3174, 4294901760
      %3635 = vmatmul.mubr.f32.gmra.mrb[0].mxu0 %v3634
      %v3636 = vpop.f32.mrb[0].mxu0
      %v3637 = vadd.f32 %v3563, %v3636
      %v3638 = vpop.f32.mrb[0].mxu0
      %v3639 = vadd.f32 %v3565, %v3638
      %3640 = vdwg.mxu0
      %3641 = vrot.lane.b32.xlu0 %v217, 80
      %v3642 = vpop.permute.xlu0 %3641
      %3646 = vrot.lane.b32.xlu0 %v3158, 96
      %v3647 = vpop.permute.xlu0 %3646
      %3648 = vrot.lane.b32.xlu0 %v3159, 96
      %v3649 = vpop.permute.xlu0 %3648
      %3650 = vrot.lane.b32.xlu0 %v3160, 96
      %v3651 = vpop.permute.xlu0 %3650
      %vm3652 = vcmask 785408
      %v3653 = vsel %vm3652, %v3647, %v3649
      %v3654 = vsel %vm3652, %v3649, %v3651
      %v3657 = vsel %vm236, %v3642, 0
      %v3659 = vand.u32 %v3654, 4294901760
      %3660 = vmatprep.subr.mxu0 %v3659
      %v3661 = vand.u32 %v3653, 4294901760
      %3662 = vmatpush1.msra.mxu0 %v3661
      %3663 = vmatprep.subr.mxu0 0.0
      %3664 = vmatpush1.msra.mxu0 0.0
      %3665 = vmatprep.subr.mxu0 0.0
      %3666 = vmatpush1.msra.mxu0 0.0
      %3667 = vmatprep.subr.mxu0 0.0
      %3668 = vmatpush1.msra.mxu0 0.0
      %3669 = vmatprep.subr.mxu0 0.0
      %3670 = vmatpush1.msra.mxu0 0.0
      %3671 = vmatprep.subr.mxu0 0.0
      %3672 = vmatpush1.msra.mxu0 0.0
      %3673 = vmatprep.subr.mxu0 0.0
      %3674 = vmatpush1.msra.mxu0 0.0
      %3675 = vmatprep.subr.mxu0 0.0
      %3676 = vmatpush1.msra.mxu0 0.0
      %3677 = vmatprep.subr.mxu0 0.0
      %3678 = vmatpush1.msra.mxu0 0.0
      %3679 = vmatprep.subr.mxu0 0.0
      %3680 = vmatpush1.msra.mxu0 0.0
      %3681 = vmatprep.subr.mxu0 0.0
      %3682 = vmatpush1.msra.mxu0 0.0
      %3683 = vmatprep.subr.mxu0 0.0
      %3684 = vmatpush1.msra.mxu0 0.0
      %3685 = vmatprep.subr.mxu0 0.0
      %3686 = vmatpush1.msra.mxu0 0.0
      %3687 = vmatprep.subr.mxu0 0.0
      %3688 = vmatpush1.msra.mxu0 0.0
      %3689 = vmatprep.subr.mxu0 0.0
      %3690 = vmatpush1.msra.mxu0 0.0
      %3691 = vmatprep.subr.mxu0 0.0
      %3692 = vmatpush1.msra.mxu0 0.0
      %3693 = vmatprep.subr.mxu0 0.0
      %3694 = vmatpush1.msra.mxu0 0.0
      %3695 = vmatprep.subr.mxu0 0.0
      %3696 = vmatpush1.msra.mxu0 0.0
      %3697 = vmatprep.subr.mxu0 0.0
      %3698 = vmatpush1.msra.mxu0 0.0
      %3699 = vmatprep.subr.mxu0 0.0
      %3700 = vmatpush1.msra.mxu0 0.0
      %3701 = vmatprep.subr.mxu0 0.0
      %3702 = vmatpush1.msra.mxu0 0.0
      %3703 = vmatprep.subr.mxu0 0.0
      %3704 = vmatpush1.msra.mxu0 0.0
      %3705 = vmatprep.subr.mxu0 0.0
      %3706 = vmatpush1.msra.mxu0 0.0
      %3707 = vmatprep.subr.mxu0 0.0
      %3708 = vmatpush1.msra.mxu0 0.0
      %3709 = vmatprep.subr.mxu0 0.0
      %3710 = vmatpush1.msra.mxu0 0.0
      %3711 = vmatprep.subr.mxu0 0.0
      %3712 = vmatpush1.msra.mxu0 0.0
      %3713 = vmatprep.subr.mxu0 0.0
      %3714 = vmatpush1.msra.mxu0 0.0
      %3715 = vmatprep.subr.mxu0 0.0
      %3716 = vmatpush1.msra.mxu0 0.0
      %3717 = vmatprep.subr.mxu0 0.0
      %3718 = vmatpush1.msra.mxu0 0.0
      %3719 = vmatprep.subr.mxu0 0.0
      %3720 = vmatpush1.msra.mxu0 0.0
      %3721 = vmatprep.subr.mxu0 0.0
      %3722 = vmatpush1.msra.mxu0 0.0
      %3723 = vmatprep.subr.mxu0 0.0
      %3724 = vmatpush1.msra.mxu0 0.0
      %3725 = vmatprep.mubr.f32.mxu0 0.0
      %v3726 = vand.u32 %v3657, 4294901760
      %v3727 = vsub.f32 %v3657, %v3726
      %v3728 = vand.u32 %v3727, 4294901760
      %v3729 = vsub.f32 %v3727, %v3728
      %v3730 = vand.u32 %v3729, 4294901760
      %3731 = vmatmul.mubr.f32.gmra.mrb[0].mxu0 %v3730
      %v3732 = vpop.f32.mrb[0].mxu0
      %v3733 = vadd.f32 %v3637, %v3732
      %v3734 = vpop.f32.mrb[0].mxu0
      %v3735 = vadd.f32 %v3639, %v3734
      %3736 = vdwg.mxu0
      %v3737 = vand.u32 %v3654, 4294901760
      %v3738 = vsub.f32 %v3654, %v3737
      %v3739 = vand.u32 %v3738, 4294901760
      %v3740 = vsub.f32 %v3738, %v3739
      %v3741 = vand.u32 %v3740, 4294901760
      %3742 = vmatprep.subr.mxu0 %v3741
      %v3743 = vand.u32 %v3653, 4294901760
      %v3744 = vsub.f32 %v3653, %v3743
      %v3745 = vand.u32 %v3744, 4294901760
      %v3746 = vsub.f32 %v3744, %v3745
      %v3747 = vand.u32 %v3746, 4294901760
      %3748 = vmatpush1.msra.mxu0 %v3747
      %3749 = vmatprep.subr.mxu0 0.0
      %3750 = vmatpush1.msra.mxu0 0.0
      %3751 = vmatprep.subr.mxu0 0.0
      %3752 = vmatpush1.msra.mxu0 0.0
      %3753 = vmatprep.subr.mxu0 0.0
      %3754 = vmatpush1.msra.mxu0 0.0
      %3755 = vmatprep.subr.mxu0 0.0
      %3756 = vmatpush1.msra.mxu0 0.0
      %3757 = vmatprep.subr.mxu0 0.0
      %3758 = vmatpush1.msra.mxu0 0.0
      %3759 = vmatprep.subr.mxu0 0.0
      %3760 = vmatpush1.msra.mxu0 0.0
      %3761 = vmatprep.subr.mxu0 0.0
      %3762 = vmatpush1.msra.mxu0 0.0
      %3763 = vmatprep.subr.mxu0 0.0
      %3764 = vmatpush1.msra.mxu0 0.0
      %3765 = vmatprep.subr.mxu0 0.0
      %3766 = vmatpush1.msra.mxu0 0.0
      %3767 = vmatprep.subr.mxu0 0.0
      %3768 = vmatpush1.msra.mxu0 0.0
      %3769 = vmatprep.subr.mxu0 0.0
      %3770 = vmatpush1.msra.mxu0 0.0
      %3771 = vmatprep.subr.mxu0 0.0
      %3772 = vmatpush1.msra.mxu0 0.0
      %3773 = vmatprep.subr.mxu0 0.0
      %3774 = vmatpush1.msra.mxu0 0.0
      %3775 = vmatprep.subr.mxu0 0.0
      %3776 = vmatpush1.msra.mxu0 0.0
      %3777 = vmatprep.subr.mxu0 0.0
      %3778 = vmatpush1.msra.mxu0 0.0
      %3779 = vmatprep.subr.mxu0 0.0
      %3780 = vmatpush1.msra.mxu0 0.0
      %3781 = vmatprep.subr.mxu0 0.0
      %3782 = vmatpush1.msra.mxu0 0.0
      %3783 = vmatprep.subr.mxu0 0.0
      %3784 = vmatpush1.msra.mxu0 0.0
      %3785 = vmatprep.subr.mxu0 0.0
      %3786 = vmatpush1.msra.mxu0 0.0
      %3787 = vmatprep.subr.mxu0 0.0
      %3788 = vmatpush1.msra.mxu0 0.0
      %3789 = vmatprep.subr.mxu0 0.0
      %3790 = vmatpush1.msra.mxu0 0.0
      %3791 = vmatprep.subr.mxu0 0.0
      %3792 = vmatpush1.msra.mxu0 0.0
      %3793 = vmatprep.subr.mxu0 0.0
      %3794 = vmatpush1.msra.mxu0 0.0
      %3795 = vmatprep.subr.mxu0 0.0
      %3796 = vmatpush1.msra.mxu0 0.0
      %3797 = vmatprep.subr.mxu0 0.0
      %3798 = vmatpush1.msra.mxu0 0.0
      %3799 = vmatprep.subr.mxu0 0.0
      %3800 = vmatpush1.msra.mxu0 0.0
      %3801 = vmatprep.subr.mxu0 0.0
      %3802 = vmatpush1.msra.mxu0 0.0
      %3803 = vmatprep.subr.mxu0 0.0
      %3804 = vmatpush1.msra.mxu0 0.0
      %3805 = vmatprep.subr.mxu0 0.0
      %3806 = vmatpush1.msra.mxu0 0.0
      %3807 = vmatprep.subr.mxu0 0.0
      %3808 = vmatpush1.msra.mxu0 0.0
      %3809 = vmatprep.subr.mxu0 0.0
      %3810 = vmatpush1.msra.mxu0 0.0
      %3811 = vmatprep.mubr.f32.mxu0 0.0
      %v3812 = vand.u32 %v3657, 4294901760
      %3813 = vmatmul.mubr.f32.gmra.mrb[0].mxu0 %v3812
      %v3814 = vpop.f32.mrb[0].mxu0
      %v3815 = vadd.f32 %v3733, %v3814
      %v3816 = vpop.f32.mrb[0].mxu0
      %v3817 = vadd.f32 %v3735, %v3816
      %3818 = vdwg.mxu0
      %v3819 = vand.u32 %v3654, 4294901760
      %v3820 = vsub.f32 %v3654, %v3819
      %3821 = vmatprep.subr.mxu0 %v3820
      %v3822 = vand.u32 %v3653, 4294901760
      %v3823 = vsub.f32 %v3653, %v3822
      %3824 = vmatpush1.msra.mxu0 %v3823
      %3825 = vmatprep.subr.mxu0 0.0
      %3826 = vmatpush1.msra.mxu0 0.0
      %3827 = vmatprep.subr.mxu0 0.0
      %3828 = vmatpush1.msra.mxu0 0.0
      %3829 = vmatprep.subr.mxu0 0.0
      %3830 = vmatpush1.msra.mxu0 0.0
      %3831 = vmatprep.subr.mxu0 0.0
      %3832 = vmatpush1.msra.mxu0 0.0
      %3833 = vmatprep.subr.mxu0 0.0
      %3834 = vmatpush1.msra.mxu0 0.0
      %3835 = vmatprep.subr.mxu0 0.0
      %3836 = vmatpush1.msra.mxu0 0.0
      %3837 = vmatprep.subr.mxu0 0.0
      %3838 = vmatpush1.msra.mxu0 0.0
      %3839 = vmatprep.subr.mxu0 0.0
      %3840 = vmatpush1.msra.mxu0 0.0
      %3841 = vmatprep.subr.mxu0 0.0
      %3842 = vmatpush1.msra.mxu0 0.0
      %3843 = vmatprep.subr.mxu0 0.0
      %3844 = vmatpush1.msra.mxu0 0.0
      %3845 = vmatprep.subr.mxu0 0.0
      %3846 = vmatpush1.msra.mxu0 0.0
      %3847 = vmatprep.subr.mxu0 0.0
      %3848 = vmatpush1.msra.mxu0 0.0
      %3849 = vmatprep.subr.mxu0 0.0
      %3850 = vmatpush1.msra.mxu0 0.0
      %3851 = vmatprep.subr.mxu0 0.0
      %3852 = vmatpush1.msra.mxu0 0.0
      %3853 = vmatprep.subr.mxu0 0.0
      %3854 = vmatpush1.msra.mxu0 0.0
      %3855 = vmatprep.subr.mxu0 0.0
      %3856 = vmatpush1.msra.mxu0 0.0
      %3857 = vmatprep.subr.mxu0 0.0
      %3858 = vmatpush1.msra.mxu0 0.0
      %3859 = vmatprep.subr.mxu0 0.0
      %3860 = vmatpush1.msra.mxu0 0.0
      %3861 = vmatprep.subr.mxu0 0.0
      %3862 = vmatpush1.msra.mxu0 0.0
      %3863 = vmatprep.subr.mxu0 0.0
      %3864 = vmatpush1.msra.mxu0 0.0
      %3865 = vmatprep.subr.mxu0 0.0
      %3866 = vmatpush1.msra.mxu0 0.0
      %3867 = vmatprep.subr.mxu0 0.0
      %3868 = vmatpush1.msra.mxu0 0.0
      %3869 = vmatprep.subr.mxu0 0.0
      %3870 = vmatpush1.msra.mxu0 0.0
      %3871 = vmatprep.subr.mxu0 0.0
      %3872 = vmatpush1.msra.mxu0 0.0
      %3873 = vmatprep.subr.mxu0 0.0
      %3874 = vmatpush1.msra.mxu0 0.0
      %3875 = vmatprep.subr.mxu0 0.0
      %3876 = vmatpush1.msra.mxu0 0.0
      %3877 = vmatprep.subr.mxu0 0.0
      %3878 = vmatpush1.msra.mxu0 0.0
      %3879 = vmatprep.subr.mxu0 0.0
      %3880 = vmatpush1.msra.mxu0 0.0
      %3881 = vmatprep.subr.mxu0 0.0
      %3882 = vmatpush1.msra.mxu0 0.0
      %3883 = vmatprep.subr.mxu0 0.0
      %3884 = vmatpush1.msra.mxu0 0.0
      %3885 = vmatprep.subr.mxu0 0.0
      %3886 = vmatpush1.msra.mxu0 0.0
      %3887 = vmatprep.mubr.f32.mxu0 0.0
      %v3888 = vand.u32 %v3657, 4294901760
      %v3889 = vsub.f32 %v3657, %v3888
      %3890 = vmatmul.mubr.f32.gmra.mrb[0].mxu0 %v3889
      %v3891 = vpop.f32.mrb[0].mxu0
      %v3892 = vadd.f32 %v3815, %v3891
      %v3893 = vpop.f32.mrb[0].mxu0
      %v3894 = vadd.f32 %v3817, %v3893
      %3895 = vdwg.mxu0
      %v3896 = vand.u32 %v3654, 4294901760
      %3897 = vmatprep.subr.mxu0 %v3896
      %v3898 = vand.u32 %v3653, 4294901760
      %3899 = vmatpush1.msra.mxu0 %v3898
      %3900 = vmatprep.subr.mxu0 0.0
      %3901 = vmatpush1.msra.mxu0 0.0
      %3902 = vmatprep.subr.mxu0 0.0
      %3903 = vmatpush1.msra.mxu0 0.0
      %3904 = vmatprep.subr.mxu0 0.0
      %3905 = vmatpush1.msra.mxu0 0.0
      %3906 = vmatprep.subr.mxu0 0.0
      %3907 = vmatpush1.msra.mxu0 0.0
      %3908 = vmatprep.subr.mxu0 0.0
      %3909 = vmatpush1.msra.mxu0 0.0
      %3910 = vmatprep.subr.mxu0 0.0
      %3911 = vmatpush1.msra.mxu0 0.0
      %3912 = vmatprep.subr.mxu0 0.0
      %3913 = vmatpush1.msra.mxu0 0.0
      %3914 = vmatprep.subr.mxu0 0.0
      %3915 = vmatpush1.msra.mxu0 0.0
      %3916 = vmatprep.subr.mxu0 0.0
      %3917 = vmatpush1.msra.mxu0 0.0
      %3918 = vmatprep.subr.mxu0 0.0
      %3919 = vmatpush1.msra.mxu0 0.0
      %3920 = vmatprep.subr.mxu0 0.0
      %3921 = vmatpush1.msra.mxu0 0.0
      %3922 = vmatprep.subr.mxu0 0.0
      %3923 = vmatpush1.msra.mxu0 0.0
      %3924 = vmatprep.subr.mxu0 0.0
      %3925 = vmatpush1.msra.mxu0 0.0
      %3926 = vmatprep.subr.mxu0 0.0
      %3927 = vmatpush1.msra.mxu0 0.0
      %3928 = vmatprep.subr.mxu0 0.0
      %3929 = vmatpush1.msra.mxu0 0.0
      %3930 = vmatprep.subr.mxu0 0.0
      %3931 = vmatpush1.msra.mxu0 0.0
      %3932 = vmatprep.subr.mxu0 0.0
      %3933 = vmatpush1.msra.mxu0 0.0
      %3934 = vmatprep.subr.mxu0 0.0
      %3935 = vmatpush1.msra.mxu0 0.0
      %3936 = vmatprep.subr.mxu0 0.0
      %3937 = vmatpush1.msra.mxu0 0.0
      %3938 = vmatprep.subr.mxu0 0.0
      %3939 = vmatpush1.msra.mxu0 0.0
      %3940 = vmatprep.subr.mxu0 0.0
      %3941 = vmatpush1.msra.mxu0 0.0
      %3942 = vmatprep.subr.mxu0 0.0
      %3943 = vmatpush1.msra.mxu0 0.0
      %3944 = vmatprep.subr.mxu0 0.0
      %3945 = vmatpush1.msra.mxu0 0.0
      %3946 = vmatprep.subr.mxu0 0.0
      %3947 = vmatpush1.msra.mxu0 0.0
      %3948 = vmatprep.subr.mxu0 0.0
      %3949 = vmatpush1.msra.mxu0 0.0
      %3950 = vmatprep.subr.mxu0 0.0
      %3951 = vmatpush1.msra.mxu0 0.0
      %3952 = vmatprep.subr.mxu0 0.0
      %3953 = vmatpush1.msra.mxu0 0.0
      %3954 = vmatprep.subr.mxu0 0.0
      %3955 = vmatpush1.msra.mxu0 0.0
      %3956 = vmatprep.subr.mxu0 0.0
      %3957 = vmatpush1.msra.mxu0 0.0
      %3958 = vmatprep.subr.mxu0 0.0
      %3959 = vmatpush1.msra.mxu0 0.0
      %3960 = vmatprep.subr.mxu0 0.0
      %3961 = vmatpush1.msra.mxu0 0.0
      %3962 = vmatprep.mubr.f32.mxu0 0.0
      %v3963 = vand.u32 %v3657, 4294901760
      %v3964 = vsub.f32 %v3657, %v3963
      %v3965 = vand.u32 %v3964, 4294901760
      %3966 = vmatmul.mubr.f32.gmra.mrb[0].mxu0 %v3965
      %v3967 = vpop.f32.mrb[0].mxu0
      %v3968 = vadd.f32 %v3892, %v3967
      %v3969 = vpop.f32.mrb[0].mxu0
      %v3970 = vadd.f32 %v3894, %v3969
      %3971 = vdwg.mxu0
      %v3972 = vand.u32 %v3654, 4294901760
      %v3973 = vsub.f32 %v3654, %v3972
      %v3974 = vand.u32 %v3973, 4294901760
      %3975 = vmatprep.subr.mxu0 %v3974
      %v3976 = vand.u32 %v3653, 4294901760
      %v3977 = vsub.f32 %v3653, %v3976
      %v3978 = vand.u32 %v3977, 4294901760
      %3979 = vmatpush1.msra.mxu0 %v3978
      %3980 = vmatprep.subr.mxu0 0.0
      %3981 = vmatpush1.msra.mxu0 0.0
      %3982 = vmatprep.subr.mxu0 0.0
      %3983 = vmatpush1.msra.mxu0 0.0
      %3984 = vmatprep.subr.mxu0 0.0
      %3985 = vmatpush1.msra.mxu0 0.0
      %3986 = vmatprep.subr.mxu0 0.0
      %3987 = vmatpush1.msra.mxu0 0.0
      %3988 = vmatprep.subr.mxu0 0.0
      %3989 = vmatpush1.msra.mxu0 0.0
      %3990 = vmatprep.subr.mxu0 0.0
      %3991 = vmatpush1.msra.mxu0 0.0
      %3992 = vmatprep.subr.mxu0 0.0
      %3993 = vmatpush1.msra.mxu0 0.0
      %3994 = vmatprep.subr.mxu0 0.0
      %3995 = vmatpush1.msra.mxu0 0.0
      %3996 = vmatprep.subr.mxu0 0.0
      %3997 = vmatpush1.msra.mxu0 0.0
      %3998 = vmatprep.subr.mxu0 0.0
      %3999 = vmatpush1.msra.mxu0 0.0
      %4000 = vmatprep.subr.mxu0 0.0
      %4001 = vmatpush1.msra.mxu0 0.0
      %4002 = vmatprep.subr.mxu0 0.0
      %4003 = vmatpush1.msra.mxu0 0.0
      %4004 = vmatprep.subr.mxu0 0.0
      %4005 = vmatpush1.msra.mxu0 0.0
      %4006 = vmatprep.subr.mxu0 0.0
      %4007 = vmatpush1.msra.mxu0 0.0
      %4008 = vmatprep.subr.mxu0 0.0
      %4009 = vmatpush1.msra.mxu0 0.0
      %4010 = vmatprep.subr.mxu0 0.0
      %4011 = vmatpush1.msra.mxu0 0.0
      %4012 = vmatprep.subr.mxu0 0.0
      %4013 = vmatpush1.msra.mxu0 0.0
      %4014 = vmatprep.subr.mxu0 0.0
      %4015 = vmatpush1.msra.mxu0 0.0
      %4016 = vmatprep.subr.mxu0 0.0
      %4017 = vmatpush1.msra.mxu0 0.0
      %4018 = vmatprep.subr.mxu0 0.0
      %4019 = vmatpush1.msra.mxu0 0.0
      %4020 = vmatprep.subr.mxu0 0.0
      %4021 = vmatpush1.msra.mxu0 0.0
      %4022 = vmatprep.subr.mxu0 0.0
      %4023 = vmatpush1.msra.mxu0 0.0
      %4024 = vmatprep.subr.mxu0 0.0
      %4025 = vmatpush1.msra.mxu0 0.0
      %4026 = vmatprep.subr.mxu0 0.0
      %4027 = vmatpush1.msra.mxu0 0.0
      %4028 = vmatprep.subr.mxu0 0.0
      %4029 = vmatpush1.msra.mxu0 0.0
      %4030 = vmatprep.subr.mxu0 0.0
      %4031 = vmatpush1.msra.mxu0 0.0
      %4032 = vmatprep.subr.mxu0 0.0
      %4033 = vmatpush1.msra.mxu0 0.0
      %4034 = vmatprep.subr.mxu0 0.0
      %4035 = vmatpush1.msra.mxu0 0.0
      %4036 = vmatprep.subr.mxu0 0.0
      %4037 = vmatpush1.msra.mxu0 0.0
      %4038 = vmatprep.subr.mxu0 0.0
      %4039 = vmatpush1.msra.mxu0 0.0
      %4040 = vmatprep.subr.mxu0 0.0
      %4041 = vmatpush1.msra.mxu0 0.0
      %4042 = vmatprep.mubr.f32.mxu0 0.0
      %v4043 = vand.u32 %v3657, 4294901760
      %4044 = vmatmul.mubr.f32.gmra.mrb[0].mxu0 %v4043
      %v4045 = vpop.f32.mrb[0].mxu0
      %v4046 = vadd.f32 %v3968, %v4045
      %v4047 = vpop.f32.mrb[0].mxu0
      %v4048 = vadd.f32 %v3970, %v4047
      %4049 = vdwg.mxu0
      %v4050 = vand.u32 %v3654, 4294901760
      %4051 = vmatprep.subr.mxu0 %v4050
      %v4052 = vand.u32 %v3653, 4294901760
      %4053 = vmatpush1.msra.mxu0 %v4052
      %4054 = vmatprep.subr.mxu0 0.0
      %4055 = vmatpush1.msra.mxu0 0.0
      %4056 = vmatprep.subr.mxu0 0.0
      %4057 = vmatpush1.msra.mxu0 0.0
      %4058 = vmatprep.subr.mxu0 0.0
      %4059 = vmatpush1.msra.mxu0 0.0
      %4060 = vmatprep.subr.mxu0 0.0
      %4061 = vmatpush1.msra.mxu0 0.0
      %4062 = vmatprep.subr.mxu0 0.0
      %4063 = vmatpush1.msra.mxu0 0.0
      %4064 = vmatprep.subr.mxu0 0.0
      %4065 = vmatpush1.msra.mxu0 0.0
      %4066 = vmatprep.subr.mxu0 0.0
      %4067 = vmatpush1.msra.mxu0 0.0
      %4068 = vmatprep.subr.mxu0 0.0
      %4069 = vmatpush1.msra.mxu0 0.0
      %4070 = vmatprep.subr.mxu0 0.0
      %4071 = vmatpush1.msra.mxu0 0.0
      %4072 = vmatprep.subr.mxu0 0.0
      %4073 = vmatpush1.msra.mxu0 0.0
      %4074 = vmatprep.subr.mxu0 0.0
      %4075 = vmatpush1.msra.mxu0 0.0
      %4076 = vmatprep.subr.mxu0 0.0
      %4077 = vmatpush1.msra.mxu0 0.0
      %4078 = vmatprep.subr.mxu0 0.0
      %4079 = vmatpush1.msra.mxu0 0.0
      %4080 = vmatprep.subr.mxu0 0.0
      %4081 = vmatpush1.msra.mxu0 0.0
      %4082 = vmatprep.subr.mxu0 0.0
      %4083 = vmatpush1.msra.mxu0 0.0
      %4084 = vmatprep.subr.mxu0 0.0
      %4085 = vmatpush1.msra.mxu0 0.0
      %4086 = vmatprep.subr.mxu0 0.0
      %4087 = vmatpush1.msra.mxu0 0.0
      %4088 = vmatprep.subr.mxu0 0.0
      %4089 = vmatpush1.msra.mxu0 0.0
      %4090 = vmatprep.subr.mxu0 0.0
      %4091 = vmatpush1.msra.mxu0 0.0
      %4092 = vmatprep.subr.mxu0 0.0
      %4093 = vmatpush1.msra.mxu0 0.0
      %4094 = vmatprep.subr.mxu0 0.0
      %4095 = vmatpush1.msra.mxu0 0.0
      %4096 = vmatprep.subr.mxu0 0.0
      %4097 = vmatpush1.msra.mxu0 0.0
      %4098 = vmatprep.subr.mxu0 0.0
      %4099 = vmatpush1.msra.mxu0 0.0
      %4100 = vmatprep.subr.mxu0 0.0
      %4101 = vmatpush1.msra.mxu0 0.0
      %4102 = vmatprep.subr.mxu0 0.0
      %4103 = vmatpush1.msra.mxu0 0.0
      %4104 = vmatprep.subr.mxu0 0.0
      %4105 = vmatpush1.msra.mxu0 0.0
      %4106 = vmatprep.subr.mxu0 0.0
      %4107 = vmatpush1.msra.mxu0 0.0
      %4108 = vmatprep.subr.mxu0 0.0
      %4109 = vmatpush1.msra.mxu0 0.0
      %4110 = vmatprep.subr.mxu0 0.0
      %4111 = vmatpush1.msra.mxu0 0.0
      %4112 = vmatprep.subr.mxu0 0.0
      %4113 = vmatpush1.msra.mxu0 0.0
      %4114 = vmatprep.subr.mxu0 0.0
      %4115 = vmatpush1.msra.mxu0 0.0
      %4116 = vmatprep.mubr.f32.mxu0 0.0
      %v4117 = vand.u32 %v3657, 4294901760
      %4118 = vmatmul.mubr.f32.gmra.mrb[0].mxu0 %v4117
      %v4119 = vpop.f32.mrb[0].mxu0
      %v4120 = vadd.f32 %v4046, %v4119
      %v4121 = vpop.f32.mrb[0].mxu0
      %v4122 = vadd.f32 %v4048, %v4121
      %4123 = vdwg.mxu0
      %4124 = vrot.lane.b32.xlu0 %v1175, 34
      %v4125 = vpop.permute.xlu0 %4124
      %4126 = vrot.lane.b32.xlu0 %v1179, 34
      %v4127 = vpop.permute.xlu0 %4126
      %vm4128 = vcmask 277504
      %v4129 = vsel %vm4128, %v4125, %v4127
      %v4133 = vmul.f32 %v202, %v4125
      %v4134 = vmul.f32 %v203, %v4129
      %v4135 = vmul.f32 %v218, %v4127
      %4136 = vrot.lane.b32.xlu0 %v217, 64
      %v4137 = vpop.permute.xlu0 %4136
      %4141 = vrot.lane.b32.xlu0 %v4133, 94
      %v4142 = vpop.permute.xlu0 %4141
      %4143 = vrot.lane.b32.xlu0 %v4134, 94
      %v4144 = vpop.permute.xlu0 %4143
      %4145 = vrot.lane.b32.xlu0 %v4135, 94
      %v4146 = vpop.permute.xlu0 %4145
      %vm4147 = vcmask 769024
      %v4148 = vsel %vm4147, %v4142, %v4144
      %v4149 = vsel %vm4147, %v4144, %v4146
      %v4152 = vsel %vm236, %v4137, 0
      %v4154 = vand.u32 %v4149, 4294901760
      %4155 = vmatprep.subr.mxu0 %v4154
      %v4156 = vand.u32 %v4148, 4294901760
      %4157 = vmatpush1.msra.mxu0 %v4156
      %4158 = vmatprep.subr.mxu0 0.0
      %4159 = vmatpush1.msra.mxu0 0.0
      %4160 = vmatprep.subr.mxu0 0.0
      %4161 = vmatpush1.msra.mxu0 0.0
      %4162 = vmatprep.subr.mxu0 0.0
      %4163 = vmatpush1.msra.mxu0 0.0
      %4164 = vmatprep.subr.mxu0 0.0
      %4165 = vmatpush1.msra.mxu0 0.0
      %4166 = vmatprep.subr.mxu0 0.0
      %4167 = vmatpush1.msra.mxu0 0.0
      %4168 = vmatprep.subr.mxu0 0.0
      %4169 = vmatpush1.msra.mxu0 0.0
      %4170 = vmatprep.subr.mxu0 0.0
      %4171 = vmatpush1.msra.mxu0 0.0
      %4172 = vmatprep.subr.mxu0 0.0
      %4173 = vmatpush1.msra.mxu0 0.0
      %4174 = vmatprep.subr.mxu0 0.0
      %4175 = vmatpush1.msra.mxu0 0.0
      %4176 = vmatprep.subr.mxu0 0.0
      %4177 = vmatpush1.msra.mxu0 0.0
      %4178 = vmatprep.subr.mxu0 0.0
      %4179 = vmatpush1.msra.mxu0 0.0
      %4180 = vmatprep.subr.mxu0 0.0
      %4181 = vmatpush1.msra.mxu0 0.0
      %4182 = vmatprep.subr.mxu0 0.0
      %4183 = vmatpush1.msra.mxu0 0.0
      %4184 = vmatprep.subr.mxu0 0.0
      %4185 = vmatpush1.msra.mxu0 0.0
      %4186 = vmatprep.subr.mxu0 0.0
      %4187 = vmatpush1.msra.mxu0 0.0
      %4188 = vmatprep.subr.mxu0 0.0
      %4189 = vmatpush1.msra.mxu0 0.0
      %4190 = vmatprep.subr.mxu0 0.0
      %4191 = vmatpush1.msra.mxu0 0.0
      %4192 = vmatprep.subr.mxu0 0.0
      %4193 = vmatpush1.msra.mxu0 0.0
      %4194 = vmatprep.subr.mxu0 0.0
      %4195 = vmatpush1.msra.mxu0 0.0
      %4196 = vmatprep.subr.mxu0 0.0
      %4197 = vmatpush1.msra.mxu0 0.0
      %4198 = vmatprep.subr.mxu0 0.0
      %4199 = vmatpush1.msra.mxu0 0.0
      %4200 = vmatprep.subr.mxu0 0.0
      %4201 = vmatpush1.msra.mxu0 0.0
      %4202 = vmatprep.subr.mxu0 0.0
      %4203 = vmatpush1.msra.mxu0 0.0
      %4204 = vmatprep.subr.mxu0 0.0
      %4205 = vmatpush1.msra.mxu0 0.0
      %4206 = vmatprep.subr.mxu0 0.0
      %4207 = vmatpush1.msra.mxu0 0.0
      %4208 = vmatprep.subr.mxu0 0.0
      %4209 = vmatpush1.msra.mxu0 0.0
      %4210 = vmatprep.subr.mxu0 0.0
      %4211 = vmatpush1.msra.mxu0 0.0
      %4212 = vmatprep.subr.mxu0 0.0
      %4213 = vmatpush1.msra.mxu0 0.0
      %4214 = vmatprep.subr.mxu0 0.0
      %4215 = vmatpush1.msra.mxu0 0.0
      %4216 = vmatprep.subr.mxu0 0.0
      %4217 = vmatpush1.msra.mxu0 0.0
      %4218 = vmatprep.subr.mxu0 0.0
      %4219 = vmatpush1.msra.mxu0 0.0
      %4220 = vmatprep.mubr.f32.mxu0 0.0
      %v4221 = vand.u32 %v4152, 4294901760
      %v4222 = vsub.f32 %v4152, %v4221
      %v4223 = vand.u32 %v4222, 4294901760
      %v4224 = vsub.f32 %v4222, %v4223
      %v4225 = vand.u32 %v4224, 4294901760
      %4226 = vmatmul.mubr.f32.gmra.mrb[0].mxu0 %v4225
      %v4227 = vpop.f32.mrb[0].mxu0
      %v4228 = vadd.f32 0.0, %v4227
      %v4229 = vpop.f32.mrb[0].mxu0
      %v4230 = vadd.f32 0.0, %v4229
      %4231 = vdwg.mxu0
      %v4232 = vand.u32 %v4149, 4294901760
      %v4233 = vsub.f32 %v4149, %v4232
      %v4234 = vand.u32 %v4233, 4294901760
      %v4235 = vsub.f32 %v4233, %v4234
      %v4236 = vand.u32 %v4235, 4294901760
      %4237 = vmatprep.subr.mxu0 %v4236
      %v4238 = vand.u32 %v4148, 4294901760
      %v4239 = vsub.f32 %v4148, %v4238
      %v4240 = vand.u32 %v4239, 4294901760
      %v4241 = vsub.f32 %v4239, %v4240
      %v4242 = vand.u32 %v4241, 4294901760
      %4243 = vmatpush1.msra.mxu0 %v4242
      %4244 = vmatprep.subr.mxu0 0.0
      %4245 = vmatpush1.msra.mxu0 0.0
      %4246 = vmatprep.subr.mxu0 0.0
      %4247 = vmatpush1.msra.mxu0 0.0
      %4248 = vmatprep.subr.mxu0 0.0
      %4249 = vmatpush1.msra.mxu0 0.0
      %4250 = vmatprep.subr.mxu0 0.0
      %4251 = vmatpush1.msra.mxu0 0.0
      %4252 = vmatprep.subr.mxu0 0.0
      %4253 = vmatpush1.msra.mxu0 0.0
      %4254 = vmatprep.subr.mxu0 0.0
      %4255 = vmatpush1.msra.mxu0 0.0
      %4256 = vmatprep.subr.mxu0 0.0
      %4257 = vmatpush1.msra.mxu0 0.0
      %4258 = vmatprep.subr.mxu0 0.0
      %4259 = vmatpush1.msra.mxu0 0.0
      %4260 = vmatprep.subr.mxu0 0.0
      %4261 = vmatpush1.msra.mxu0 0.0
      %4262 = vmatprep.subr.mxu0 0.0
      %4263 = vmatpush1.msra.mxu0 0.0
      %4264 = vmatprep.subr.mxu0 0.0
      %4265 = vmatpush1.msra.mxu0 0.0
      %4266 = vmatprep.subr.mxu0 0.0
      %4267 = vmatpush1.msra.mxu0 0.0
      %4268 = vmatprep.subr.mxu0 0.0
      %4269 = vmatpush1.msra.mxu0 0.0
      %4270 = vmatprep.subr.mxu0 0.0
      %4271 = vmatpush1.msra.mxu0 0.0
      %4272 = vmatprep.subr.mxu0 0.0
      %4273 = vmatpush1.msra.mxu0 0.0
      %4274 = vmatprep.subr.mxu0 0.0
      %4275 = vmatpush1.msra.mxu0 0.0
      %4276 = vmatprep.subr.mxu0 0.0
      %4277 = vmatpush1.msra.mxu0 0.0
      %4278 = vmatprep.subr.mxu0 0.0
      %4279 = vmatpush1.msra.mxu0 0.0
      %4280 = vmatprep.subr.mxu0 0.0
      %4281 = vmatpush1.msra.mxu0 0.0
      %4282 = vmatprep.subr.mxu0 0.0
      %4283 = vmatpush1.msra.mxu0 0.0
      %4284 = vmatprep.subr.mxu0 0.0
      %4285 = vmatpush1.msra.mxu0 0.0
      %4286 = vmatprep.subr.mxu0 0.0
      %4287 = vmatpush1.msra.mxu0 0.0
      %4288 = vmatprep.subr.mxu0 0.0
      %4289 = vmatpush1.msra.mxu0 0.0
      %4290 = vmatprep.subr.mxu0 0.0
      %4291 = vmatpush1.msra.mxu0 0.0
      %4292 = vmatprep.subr.mxu0 0.0
      %4293 = vmatpush1.msra.mxu0 0.0
      %4294 = vmatprep.subr.mxu0 0.0
      %4295 = vmatpush1.msra.mxu0 0.0
      %4296 = vmatprep.subr.mxu0 0.0
      %4297 = vmatpush1.msra.mxu0 0.0
      %4298 = vmatprep.subr.mxu0 0.0
      %4299 = vmatpush1.msra.mxu0 0.0
      %4300 = vmatprep.subr.mxu0 0.0
      %4301 = vmatpush1.msra.mxu0 0.0
      %4302 = vmatprep.subr.mxu0 0.0
      %4303 = vmatpush1.msra.mxu0 0.0
      %4304 = vmatprep.subr.mxu0 0.0
      %4305 = vmatpush1.msra.mxu0 0.0
      %4306 = vmatprep.mubr.f32.mxu0 0.0
      %v4307 = vand.u32 %v4152, 4294901760
      %4308 = vmatmul.mubr.f32.gmra.mrb[0].mxu0 %v4307
      %v4309 = vpop.f32.mrb[0].mxu0
      %v4310 = vadd.f32 %v4228, %v4309
      %v4311 = vpop.f32.mrb[0].mxu0
      %v4312 = vadd.f32 %v4230, %v4311
      %4313 = vdwg.mxu0
      %v4314 = vand.u32 %v4149, 4294901760
      %v4315 = vsub.f32 %v4149, %v4314
      %4316 = vmatprep.subr.mxu0 %v4315
      %v4317 = vand.u32 %v4148, 4294901760
      %v4318 = vsub.f32 %v4148, %v4317
      %4319 = vmatpush1.msra.mxu0 %v4318
      %4320 = vmatprep.subr.mxu0 0.0
      %4321 = vmatpush1.msra.mxu0 0.0
      %4322 = vmatprep.subr.mxu0 0.0
      %4323 = vmatpush1.msra.mxu0 0.0
      %4324 = vmatprep.subr.mxu0 0.0
      %4325 = vmatpush1.msra.mxu0 0.0
      %4326 = vmatprep.subr.mxu0 0.0
      %4327 = vmatpush1.msra.mxu0 0.0
      %4328 = vmatprep.subr.mxu0 0.0
      %4329 = vmatpush1.msra.mxu0 0.0
      %4330 = vmatprep.subr.mxu0 0.0
      %4331 = vmatpush1.msra.mxu0 0.0
      %4332 = vmatprep.subr.mxu0 0.0
      %4333 = vmatpush1.msra.mxu0 0.0
      %4334 = vmatprep.subr.mxu0 0.0
      %4335 = vmatpush1.msra.mxu0 0.0
      %4336 = vmatprep.subr.mxu0 0.0
      %4337 = vmatpush1.msra.mxu0 0.0
      %4338 = vmatprep.subr.mxu0 0.0
      %4339 = vmatpush1.msra.mxu0 0.0
      %4340 = vmatprep.subr.mxu0 0.0
      %4341 = vmatpush1.msra.mxu0 0.0
      %4342 = vmatprep.subr.mxu0 0.0
      %4343 = vmatpush1.msra.mxu0 0.0
      %4344 = vmatprep.subr.mxu0 0.0
      %4345 = vmatpush1.msra.mxu0 0.0
      %4346 = vmatprep.subr.mxu0 0.0
      %4347 = vmatpush1.msra.mxu0 0.0
      %4348 = vmatprep.subr.mxu0 0.0
      %4349 = vmatpush1.msra.mxu0 0.0
      %4350 = vmatprep.subr.mxu0 0.0
      %4351 = vmatpush1.msra.mxu0 0.0
      %4352 = vmatprep.subr.mxu0 0.0
      %4353 = vmatpush1.msra.mxu0 0.0
      %4354 = vmatprep.subr.mxu0 0.0
      %4355 = vmatpush1.msra.mxu0 0.0
      %4356 = vmatprep.subr.mxu0 0.0
      %4357 = vmatpush1.msra.mxu0 0.0
      %4358 = vmatprep.subr.mxu0 0.0
      %4359 = vmatpush1.msra.mxu0 0.0
      %4360 = vmatprep.subr.mxu0 0.0
      %4361 = vmatpush1.msra.mxu0 0.0
      %4362 = vmatprep.subr.mxu0 0.0
      %4363 = vmatpush1.msra.mxu0 0.0
      %4364 = vmatprep.subr.mxu0 0.0
      %4365 = vmatpush1.msra.mxu0 0.0
      %4366 = vmatprep.subr.mxu0 0.0
      %4367 = vmatpush1.msra.mxu0 0.0
      %4368 = vmatprep.subr.mxu0 0.0
      %4369 = vmatpush1.msra.mxu0 0.0
      %4370 = vmatprep.subr.mxu0 0.0
      %4371 = vmatpush1.msra.mxu0 0.0
      %4372 = vmatprep.subr.mxu0 0.0
      %4373 = vmatpush1.msra.mxu0 0.0
      %4374 = vmatprep.subr.mxu0 0.0
      %4375 = vmatpush1.msra.mxu0 0.0
      %4376 = vmatprep.subr.mxu0 0.0
      %4377 = vmatpush1.msra.mxu0 0.0
      %4378 = vmatprep.subr.mxu0 0.0
      %4379 = vmatpush1.msra.mxu0 0.0
      %4380 = vmatprep.subr.mxu0 0.0
      %4381 = vmatpush1.msra.mxu0 0.0
      %4382 = vmatprep.mubr.f32.mxu0 0.0
      %v4383 = vand.u32 %v4152, 4294901760
      %v4384 = vsub.f32 %v4152, %v4383
      %4385 = vmatmul.mubr.f32.gmra.mrb[0].mxu0 %v4384
      %v4386 = vpop.f32.mrb[0].mxu0
      %v4387 = vadd.f32 %v4310, %v4386
      %v4388 = vpop.f32.mrb[0].mxu0
      %v4389 = vadd.f32 %v4312, %v4388
      %4390 = vdwg.mxu0
      %v4391 = vand.u32 %v4149, 4294901760
      %4392 = vmatprep.subr.mxu0 %v4391
      %v4393 = vand.u32 %v4148, 4294901760
      %4394 = vmatpush1.msra.mxu0 %v4393
      %4395 = vmatprep.subr.mxu0 0.0
      %4396 = vmatpush1.msra.mxu0 0.0
      %4397 = vmatprep.subr.mxu0 0.0
      %4398 = vmatpush1.msra.mxu0 0.0
      %4399 = vmatprep.subr.mxu0 0.0
      %4400 = vmatpush1.msra.mxu0 0.0
      %4401 = vmatprep.subr.mxu0 0.0
      %4402 = vmatpush1.msra.mxu0 0.0
      %4403 = vmatprep.subr.mxu0 0.0
      %4404 = vmatpush1.msra.mxu0 0.0
      %4405 = vmatprep.subr.mxu0 0.0
      %4406 = vmatpush1.msra.mxu0 0.0
      %4407 = vmatprep.subr.mxu0 0.0
      %4408 = vmatpush1.msra.mxu0 0.0
      %4409 = vmatprep.subr.mxu0 0.0
      %4410 = vmatpush1.msra.mxu0 0.0
      %4411 = vmatprep.subr.mxu0 0.0
      %4412 = vmatpush1.msra.mxu0 0.0
      %4413 = vmatprep.subr.mxu0 0.0
      %4414 = vmatpush1.msra.mxu0 0.0
      %4415 = vmatprep.subr.mxu0 0.0
      %4416 = vmatpush1.msra.mxu0 0.0
      %4417 = vmatprep.subr.mxu0 0.0
      %4418 = vmatpush1.msra.mxu0 0.0
      %4419 = vmatprep.subr.mxu0 0.0
      %4420 = vmatpush1.msra.mxu0 0.0
      %4421 = vmatprep.subr.mxu0 0.0
      %4422 = vmatpush1.msra.mxu0 0.0
      %4423 = vmatprep.subr.mxu0 0.0
      %4424 = vmatpush1.msra.mxu0 0.0
      %4425 = vmatprep.subr.mxu0 0.0
      %4426 = vmatpush1.msra.mxu0 0.0
      %4427 = vmatprep.subr.mxu0 0.0
      %4428 = vmatpush1.msra.mxu0 0.0
      %4429 = vmatprep.subr.mxu0 0.0
      %4430 = vmatpush1.msra.mxu0 0.0
      %4431 = vmatprep.subr.mxu0 0.0
      %4432 = vmatpush1.msra.mxu0 0.0
      %4433 = vmatprep.subr.mxu0 0.0
      %4434 = vmatpush1.msra.mxu0 0.0
      %4435 = vmatprep.subr.mxu0 0.0
      %4436 = vmatpush1.msra.mxu0 0.0
      %4437 = vmatprep.subr.mxu0 0.0
      %4438 = vmatpush1.msra.mxu0 0.0
      %4439 = vmatprep.subr.mxu0 0.0
      %4440 = vmatpush1.msra.mxu0 0.0
      %4441 = vmatprep.subr.mxu0 0.0
      %4442 = vmatpush1.msra.mxu0 0.0
      %4443 = vmatprep.subr.mxu0 0.0
      %4444 = vmatpush1.msra.mxu0 0.0
      %4445 = vmatprep.subr.mxu0 0.0
      %4446 = vmatpush1.msra.mxu0 0.0
      %4447 = vmatprep.subr.mxu0 0.0
      %4448 = vmatpush1.msra.mxu0 0.0
      %4449 = vmatprep.subr.mxu0 0.0
      %4450 = vmatpush1.msra.mxu0 0.0
      %4451 = vmatprep.subr.mxu0 0.0
      %4452 = vmatpush1.msra.mxu0 0.0
      %4453 = vmatprep.subr.mxu0 0.0
      %4454 = vmatpush1.msra.mxu0 0.0
      %4455 = vmatprep.subr.mxu0 0.0
      %4456 = vmatpush1.msra.mxu0 0.0
      %4457 = vmatprep.mubr.f32.mxu0 0.0
      %v4458 = vand.u32 %v4152, 4294901760
      %v4459 = vsub.f32 %v4152, %v4458
      %v4460 = vand.u32 %v4459, 4294901760
      %4461 = vmatmul.mubr.f32.gmra.mrb[0].mxu0 %v4460
      %v4462 = vpop.f32.mrb[0].mxu0
      %v4463 = vadd.f32 %v4387, %v4462
      %v4464 = vpop.f32.mrb[0].mxu0
      %v4465 = vadd.f32 %v4389, %v4464
      %4466 = vdwg.mxu0
      %v4467 = vand.u32 %v4149, 4294901760
      %v4468 = vsub.f32 %v4149, %v4467
      %v4469 = vand.u32 %v4468, 4294901760
      %4470 = vmatprep.subr.mxu0 %v4469
      %v4471 = vand.u32 %v4148, 4294901760
      %v4472 = vsub.f32 %v4148, %v4471
      %v4473 = vand.u32 %v4472, 4294901760
      %4474 = vmatpush1.msra.mxu0 %v4473
      %4475 = vmatprep.subr.mxu0 0.0
      %4476 = vmatpush1.msra.mxu0 0.0
      %4477 = vmatprep.subr.mxu0 0.0
      %4478 = vmatpush1.msra.mxu0 0.0
      %4479 = vmatprep.subr.mxu0 0.0
      %4480 = vmatpush1.msra.mxu0 0.0
      %4481 = vmatprep.subr.mxu0 0.0
      %4482 = vmatpush1.msra.mxu0 0.0
      %4483 = vmatprep.subr.mxu0 0.0
      %4484 = vmatpush1.msra.mxu0 0.0
      %4485 = vmatprep.subr.mxu0 0.0
      %4486 = vmatpush1.msra.mxu0 0.0
      %4487 = vmatprep.subr.mxu0 0.0
      %4488 = vmatpush1.msra.mxu0 0.0
      %4489 = vmatprep.subr.mxu0 0.0
      %4490 = vmatpush1.msra.mxu0 0.0
      %4491 = vmatprep.subr.mxu0 0.0
      %4492 = vmatpush1.msra.mxu0 0.0
      %4493 = vmatprep.subr.mxu0 0.0
      %4494 = vmatpush1.msra.mxu0 0.0
      %4495 = vmatprep.subr.mxu0 0.0
      %4496 = vmatpush1.msra.mxu0 0.0
      %4497 = vmatprep.subr.mxu0 0.0
      %4498 = vmatpush1.msra.mxu0 0.0
      %4499 = vmatprep.subr.mxu0 0.0
      %4500 = vmatpush1.msra.mxu0 0.0
      %4501 = vmatprep.subr.mxu0 0.0
      %4502 = vmatpush1.msra.mxu0 0.0
      %4503 = vmatprep.subr.mxu0 0.0
      %4504 = vmatpush1.msra.mxu0 0.0
      %4505 = vmatprep.subr.mxu0 0.0
      %4506 = vmatpush1.msra.mxu0 0.0
      %4507 = vmatprep.subr.mxu0 0.0
      %4508 = vmatpush1.msra.mxu0 0.0
      %4509 = vmatprep.subr.mxu0 0.0
      %4510 = vmatpush1.msra.mxu0 0.0
      %4511 = vmatprep.subr.mxu0 0.0
      %4512 = vmatpush1.msra.mxu0 0.0
      %4513 = vmatprep.subr.mxu0 0.0
      %4514 = vmatpush1.msra.mxu0 0.0
      %4515 = vmatprep.subr.mxu0 0.0
      %4516 = vmatpush1.msra.mxu0 0.0
      %4517 = vmatprep.subr.mxu0 0.0
      %4518 = vmatpush1.msra.mxu0 0.0
      %4519 = vmatprep.subr.mxu0 0.0
      %4520 = vmatpush1.msra.mxu0 0.0
      %4521 = vmatprep.subr.mxu0 0.0
      %4522 = vmatpush1.msra.mxu0 0.0
      %4523 = vmatprep.subr.mxu0 0.0
      %4524 = vmatpush1.msra.mxu0 0.0
      %4525 = vmatprep.subr.mxu0 0.0
      %4526 = vmatpush1.msra.mxu0 0.0
      %4527 = vmatprep.subr.mxu0 0.0
      %4528 = vmatpush1.msra.mxu0 0.0
      %4529 = vmatprep.subr.mxu0 0.0
      %4530 = vmatpush1.msra.mxu0 0.0
      %4531 = vmatprep.subr.mxu0 0.0
      %4532 = vmatpush1.msra.mxu0 0.0
      %4533 = vmatprep.subr.mxu0 0.0
      %4534 = vmatpush1.msra.mxu0 0.0
      %4535 = vmatprep.subr.mxu0 0.0
      %4536 = vmatpush1.msra.mxu0 0.0
      %4537 = vmatprep.mubr.f32.mxu0 0.0
      %v4538 = vand.u32 %v4152, 4294901760
      %4539 = vmatmul.mubr.f32.gmra.mrb[0].mxu0 %v4538
      %v4540 = vpop.f32.mrb[0].mxu0
      %v4541 = vadd.f32 %v4463, %v4540
      %v4542 = vpop.f32.mrb[0].mxu0
      %v4543 = vadd.f32 %v4465, %v4542
      %4544 = vdwg.mxu0
      %v4545 = vand.u32 %v4149, 4294901760
      %4546 = vmatprep.subr.mxu0 %v4545
      %v4547 = vand.u32 %v4148, 4294901760
      %4548 = vmatpush1.msra.mxu0 %v4547
      %4549 = vmatprep.subr.mxu0 0.0
      %4550 = vmatpush1.msra.mxu0 0.0
      %4551 = vmatprep.subr.mxu0 0.0
      %4552 = vmatpush1.msra.mxu0 0.0
      %4553 = vmatprep.subr.mxu0 0.0
      %4554 = vmatpush1.msra.mxu0 0.0
      %4555 = vmatprep.subr.mxu0 0.0
      %4556 = vmatpush1.msra.mxu0 0.0
      %4557 = vmatprep.subr.mxu0 0.0
      %4558 = vmatpush1.msra.mxu0 0.0
      %4559 = vmatprep.subr.mxu0 0.0
      %4560 = vmatpush1.msra.mxu0 0.0
      %4561 = vmatprep.subr.mxu0 0.0
      %4562 = vmatpush1.msra.mxu0 0.0
      %4563 = vmatprep.subr.mxu0 0.0
      %4564 = vmatpush1.msra.mxu0 0.0
      %4565 = vmatprep.subr.mxu0 0.0
      %4566 = vmatpush1.msra.mxu0 0.0
      %4567 = vmatprep.subr.mxu0 0.0
      %4568 = vmatpush1.msra.mxu0 0.0
      %4569 = vmatprep.subr.mxu0 0.0
      %4570 = vmatpush1.msra.mxu0 0.0
      %4571 = vmatprep.subr.mxu0 0.0
      %4572 = vmatpush1.msra.mxu0 0.0
      %4573 = vmatprep.subr.mxu0 0.0
      %4574 = vmatpush1.msra.mxu0 0.0
      %4575 = vmatprep.subr.mxu0 0.0
      %4576 = vmatpush1.msra.mxu0 0.0
      %4577 = vmatprep.subr.mxu0 0.0
      %4578 = vmatpush1.msra.mxu0 0.0
      %4579 = vmatprep.subr.mxu0 0.0
      %4580 = vmatpush1.msra.mxu0 0.0
      %4581 = vmatprep.subr.mxu0 0.0
      %4582 = vmatpush1.msra.mxu0 0.0
      %4583 = vmatprep.subr.mxu0 0.0
      %4584 = vmatpush1.msra.mxu0 0.0
      %4585 = vmatprep.subr.mxu0 0.0
      %4586 = vmatpush1.msra.mxu0 0.0
      %4587 = vmatprep.subr.mxu0 0.0
      %4588 = vmatpush1.msra.mxu0 0.0
      %4589 = vmatprep.subr.mxu0 0.0
      %4590 = vmatpush1.msra.mxu0 0.0
      %4591 = vmatprep.subr.mxu0 0.0
      %4592 = vmatpush1.msra.mxu0 0.0
      %4593 = vmatprep.subr.mxu0 0.0
      %4594 = vmatpush1.msra.mxu0 0.0
      %4595 = vmatprep.subr.mxu0 0.0
      %4596 = vmatpush1.msra.mxu0 0.0
      %4597 = vmatprep.subr.mxu0 0.0
      %4598 = vmatpush1.msra.mxu0 0.0
      %4599 = vmatprep.subr.mxu0 0.0
      %4600 = vmatpush1.msra.mxu0 0.0
      %4601 = vmatprep.subr.mxu0 0.0
      %4602 = vmatpush1.msra.mxu0 0.0
      %4603 = vmatprep.subr.mxu0 0.0
      %4604 = vmatpush1.msra.mxu0 0.0
      %4605 = vmatprep.subr.mxu0 0.0
      %4606 = vmatpush1.msra.mxu0 0.0
      %4607 = vmatprep.subr.mxu0 0.0
      %4608 = vmatpush1.msra.mxu0 0.0
      %4609 = vmatprep.subr.mxu0 0.0
      %4610 = vmatpush1.msra.mxu0 0.0
      %4611 = vmatprep.mubr.f32.mxu0 0.0
      %v4612 = vand.u32 %v4152, 4294901760
      %4613 = vmatmul.mubr.f32.gmra.mrb[0].mxu0 %v4612
      %v4614 = vpop.f32.mrb[0].mxu0
      %v4615 = vadd.f32 %v4541, %v4614
      %v4616 = vpop.f32.mrb[0].mxu0
      %v4617 = vadd.f32 %v4543, %v4616
      %4618 = vdwg.mxu0
      %v4619 = vadd.f32 %v4120, %v4615
      %v4620 = vadd.f32 %v4122, %v4617
      %v4621 = vadd.f32 %v1675, %v3147
      %v4622 = vadd.f32 %v1676, %v3148
      %v4623 = vadd.f32 %v4621, %v4619
      %v4624 = vadd.f32 %v4622, %v4620
      %4626 = vset.pattern.permute.xlu0 0
      %4627 = vperm.xlu0 %4626, %v201
      %v4628 = vpop.permute.xlu0 %4627
      %v4630 = vadd.f32 %v4623, %v4628
      %v4631 = vadd.f32 %v4624, %v4628
      %v4632 = vmax.f32 %v4630, 0.0
      %v4633 = vmax.f32 %v4631, 0.0
      %4634 = vst [vmem:[%s197] sm:$0xff] %v4632
      %4635 = vst [vmem:[%s197 + $0x8] sm:$0xff] %v4633
      %p4636 = scmp.lt.s32.totalorder %s15, 1
      %s4637 = scalar_select %p4636, %s15, 1
      %s4638 = smul.addr %s4637, 2
      %s4639 = smul.addr %s4638, 8
      %s4640 = scalar_lea.vmem %s4, %s4639
      // Predicated region
      $region37: #{conv2d_re.1} parent=35 // pred_check
        %p4641 = pneg %p122
      $region38: #{conv2d_re.1} parent=35 // pred_check_branch
        %4643 = sbr.rel (%p4641) target = $region40
      $region39: #{conv2d_re.1} parent=35 // pred_region
        _
      $region40: #{conv2d_re.1} parent=35 // pred_fallthru
        _
    $region36: #{conv2d_re.1} parent=5 // pred_fallthru
      _
    %p4644 = scmp.le.s32.totalorder 2, %s10
    // Predicated region
    $region41: #{conv2d_re.1} parent=5 // pred_check
      %p4645 = pneg %p4644
    $region42: #{conv2d_re.1} parent=5 // pred_check_branch
      %4647 = sbr.rel (%p4645) target = $region44
    $region43: #{conv2d_re.1} parent=5 // pred_region
      %s4648 = ssub.s32 %s10, 2
      // Predicated region
      $region45: #{conv2d_re.1} parent=43 // pred_check
        %p4649 = pneg %p128
      $region46: #{conv2d_re.1} parent=43 // pred_check_branch
        %4651 = sbr.rel (%p4649) target = $region48
      $region47: #{conv2d_re.1} parent=43 // pred_region
        %p4652 = scmp.lt.s32.totalorder %s16, 1
        %s4653 = scalar_select %p4652, %s16, 1
        %s4654 = smul.addr %s4653, 2
        %s4655 = smul.addr %s4654, 8
        %s4656 = scalar_lea.vmem %s4, %s4655
      $region48: #{conv2d_re.1} parent=43 // pred_fallthru
        _
    $region44: #{conv2d_re.1} parent=5 // pred_fallthru
      _
  $region6: #{conv2d_re.1} parent=0 // loop_footer
    %s14 = sadd.s32 1, %s10
  $region7: #{conv2d_re.1} parent=0 // loop_footer_branch
    %9 = sbr.rel target = $region3
  $region8: #{conv2d_re.1} parent=0 // loop_exit
    _

</llo_original>
